<compile_context>
chip_gen: v6e
topology: v6e:2x2x1
jax: 0.10.0
libtpu: 0.0.40
codegen_flags: <defaults>
</compile_context>

<pallas_src>
import functools

import jax
import jax.numpy as jnp
import numpy as np
from jax import lax
from jax.experimental import pallas as pl
from jax.experimental.pallas import tpu as pltpu


def _round_up(x, m):
    return ((x + m - 1) // m) * m


def _fused_kernel(xcol_ref, w1_ref, b1_ref, w2_ref, b2_ref, o_ref, h5_ref,
                  *, W, HW, TM, TAIL5):
    """One (batch, row-tile) step of the fused feature-extraction layer.

    xcol_ref: (1, HW, K1p)      bf16  replication-padded 5x5 im2col patches
    w1_ref:   (K1p, 128)        bf16  conv1 weights (tap-major, zero-padded K)
    b1_ref:   (1, 128)          f32
    w2_ref:   (5, 640, 64)      bf16  conv2 weights, [dy, dx*128 + k, c]
    b2_ref:   (1, 64)           f32
    o_ref:    (1, TM, 64)       bf16  full-width conv2+ReLU rows of this tile
    h5_ref:   (HW+TAIL5, 640)   bf16  scratch, h5[r, 128*dx + k] = h_flat[r+dx, k]
    """
    rt = pl.program_id(1)

    # ---- conv1 + ReLU (+ first replication pad, folded into xcol): build the
    # ---- dx-unrolled bf16 intermediate once per batch element. --------------
    @pl.when(rt == 0)
    def _():
        h1 = jnp.dot(xcol_ref[0], w1_ref[...],
                     preferred_element_type=jnp.float32)
        h1 = jnp.maximum(h1 + b1_ref[...], 0.0).astype(jnp.bfloat16)  # (HW,128)
        # Rows >= HW-4 are only read by garbage output columns/rows that the
        # wrapper drops; keep them finite (zero).
        h5_ref[pl.ds(HW - 4, TAIL5 + 4), :] = jnp.zeros(
            (TAIL5 + 4, 5 * 128), jnp.bfloat16)
        for dx in range(5):
            h5_ref[pl.ds(0, HW - 4), pl.ds(128 * dx, 128)] = (
                h1[dx:dx + HW - 4, :])

    # ---- conv2 on TM full-width output rows: 5 contiguous K=640 matmuls,
    # ---- accumulated in registers; b2 bias + ReLU folded into the epilogue. -
    base = pl.multiple_of(rt * TM, TM)
    acc = None
    for dy in range(5):
        lhs = h5_ref[pl.ds(base + dy * W, TM), :]           # (TM, 640) bf16
        part = jnp.dot(lhs, w2_ref[dy], preferred_element_type=jnp.float32)
        acc = part if acc is None else acc + part
    o_ref[0] = jnp.maximum(acc + b2_ref[...], 0.0).astype(o_ref.dtype)


def _im2col_padded_bf16(x_nhwc, k_pad):
    """Replication-padded 5x5 'valid' im2col: (N,H,W,Cin) -> (N, H*W, k_pad) bf16.

    Row (y*W + x) holds the 5x5xCin patch that produces conv1's output at the
    replication-padded position (y, x), i.e. the first ReplicationPad2d is
    folded into the patch construction.
    """
    N, H, W, Cin = x_nhwc.shape
    Ho, Wo = H - 4, W - 4
    taps = [x_nhwc[:, dy:dy + Ho, dx:dx + Wo, :]
            for dy in range(5) for dx in range(5)]
    p = jnp.concatenate(taps, axis=-1)                       # (N, Ho, Wo, 25*Cin)
    p = jnp.pad(p, ((0, 0), (2, 2), (2, 2), (0, 0)), mode="edge")
    p = p.reshape(N, H * W, 25 * Cin)
    if k_pad > 25 * Cin:                                     # lane-align K to 128
        p = jnp.pad(p, ((0, 0), (0, 0), (0, k_pad - 25 * Cin)))
    return p.astype(jnp.bfloat16)


def resnet_feature_extraction_layer(x_nchw, params):
    """Full forward pass. Accepts NCHW (PyTorch convention), returns NCHW f32."""
    w1, b1, w2, b2 = params          # (5,5,Cin,128), (128,), (5,5,128,64), (64,)
    N, Cin, H, W = x_nchw.shape
    assert H >= 5 and W >= 5, "SoccerMap feature extraction requires H, W >= 5"
    HW = H * W
    M2 = (H - 4) * W                                         # full-width conv2 rows
    K1 = 25 * Cin
    K1p = _round_up(K1, 128)

    # Row tiling of the conv2 output (second grid axis).
    TM = 256 if M2 > 512 else _round_up(M2, 8)
    M2_pad = _round_up(M2, TM)
    n_rt = M2_pad // TM
    TAIL5 = _round_up(max(8, M2_pad - M2), 8)                # >= overshoot, >= 8

    x_nhwc = jnp.transpose(x_nchw, (0, 2, 3, 1))             # NCHW -> NHWC
    # TODO(synk): if profiling shows the xcol HBM round-trip dominates at
    # realistic N*H*W, build the im2col patches inside the kernel from the raw
    # NHWC input instead of materializing this (N, HW, K1p) slab in XLA.
    xcol = _im2col_padded_bf16(x_nhwc, K1p)                  # (N, HW, K1p) bf16

    w1col = w1.reshape(K1, 128)
    if K1p > K1:
        w1col = jnp.pad(w1col, ((0, K1p - K1), (0, 0)))
    w1col = w1col.astype(jnp.bfloat16)
    w2r = w2.reshape(5, 5 * 128, 64).astype(jnp.bfloat16)    # [dy, dx*128+k, c]
    b1r = b1.reshape(1, 128).astype(jnp.float32)
    b2r = b2.reshape(1, 64).astype(jnp.float32)

    kernel = functools.partial(_fused_kernel, W=W, HW=HW, TM=TM, TAIL5=TAIL5)

    out_full = pl.pallas_call(
        kernel,
        out_shape=jax.ShapeDtypeStruct((N, M2_pad, 64), jnp.bfloat16),
        grid=(N, n_rt),
        in_specs=[
            pl.BlockSpec((1, HW, K1p), lambda n, rt: (n, 0, 0)),
            pl.BlockSpec((K1p, 128), lambda n, rt: (0, 0)),
            pl.BlockSpec((1, 128), lambda n, rt: (0, 0)),
            pl.BlockSpec((5, 5 * 128, 64), lambda n, rt: (0, 0, 0)),
            pl.BlockSpec((1, 64), lambda n, rt: (0, 0)),
        ],
        out_specs=pl.BlockSpec((1, TM, 64), lambda n, rt: (n, rt, 0)),
        scratch_shapes=[
            pltpu.VMEM((HW + TAIL5, 5 * 128), jnp.bfloat16),  # dx-unrolled interm.
        ],
        compiler_params=pltpu.CompilerParams(
            # TODO(synk): for v7x with N == 1, make the row-tile axis parallel
            # (recompute conv1 per tile with a 4-row halo) so both TensorCores
            # stay busy; here it is "arbitrary" because tiles share the scratch.
            dimension_semantics=("parallel", "arbitrary"),
            vmem_limit_bytes=32 * 1024 * 1024,               # fits v5e/v6e/v7x
        ),
    )(xcol, w1col, b1r, w2r, b2r)

    # Layout glue (XLA, small 64-ch tensor): drop padded rows and the 4 garbage
    # columns of the full-width result, apply the final replication pad, and go
    # back to NCHW in f32.
    out = out_full[:, :M2, :].reshape(N, H - 4, W, 64)[:, :, :W - 4, :]
    out = out.astype(jnp.float32)
    out = jnp.pad(out, ((0, 0), (2, 2), (2, 2), (0, 0)), mode="edge")
    return jnp.transpose(out, (0, 3, 1, 2))                  # NHWC -> NCHW


def init_params(key, in_channels):
    """Deterministic PyTorch-Conv2d-style (kaiming-uniform-ish) init."""
    k1, k2, k3, k4 = jax.random.split(key, 4)

    def conv_init(kw, kb, cin, cout):
        fan_in = cin * 5 * 5
        bound = 1.0 / np.sqrt(fan_in)
        w = jax.random.uniform(kw, (5, 5, cin, cout), jnp.float32, -bound, bound)
        b = jax.random.uniform(kb, (cout,), jnp.float32, -bound, bound)
        return w, b

    w1, b1 = conv_init(k1, k2, in_channels, 128)
    w2, b2 = conv_init(k3, k4, 128, 64)
    return w1, b1, w2, b2


def _reference_forward(x_nchw, params):
    """Pure-JAX f32 reference (lax conv) for correctness checking."""
    w1, b1, w2, b2 = params
    dn = ("NHWC", "HWIO", "NHWC")
    h = jnp.transpose(x_nchw, (0, 2, 3, 1))
    h = lax.conv_general_dilated(h, w1, (1, 1), "VALID", dimension_numbers=dn)
    h = jax.nn.relu(h + b1[None, None, None, :])
    h = jnp.pad(h, ((0, 0), (2, 2), (2, 2), (0, 0)), mode="edge")
    h = lax.conv_general_dilated(h, w2, (1, 1), "VALID", dimension_numbers=dn)
    h = jax.nn.relu(h + b2[None, None, None, :])
    h = jnp.pad(h, ((0, 0), (2, 2), (2, 2), (0, 0)), mode="edge")
    return jnp.transpose(h, (0, 3, 1, 2))


if __name__ == "__main__":
    key = jax.random.PRNGKey(0)
    kx, kp = jax.random.split(key)

    N, C, H, W = 2, 4, 16, 16
    x = jax.random.normal(kx, (N, C, H, W), jnp.float32)
    params = init_params(kp, C)

    fwd = jax.jit(resnet_feature_extraction_layer)
    out = jax.block_until_ready(fwd(x, params))
    assert out.shape == (N, 64, H, W), out.shape

    ref = jax.block_until_ready(_reference_forward(x, params))
    # bf16 matmuls / bf16 output with f32 accumulation: well within 2e-2.
    np.testing.assert_allclose(np.asarray(out), np.asarray(ref), rtol=2e-2, atol=2e-2)

    print("KERNEL_OK")
</pallas_src>

<mosaic_0001>
module attributes {stable_mosaic.version = 11 : i64} {
  func.func @_fused_kernel(%arg0: i32, %arg1: i32, %arg2: memref<1x256x128xbf16, #tpu.memory_space<vmem>>, %arg3: memref<128x128xbf16, #tpu.memory_space<vmem>>, %arg4: memref<1x128xf32, #tpu.memory_space<vmem>>, %arg5: memref<5x640x64xbf16, #tpu.memory_space<vmem>>, %arg6: memref<1x64xf32, #tpu.memory_space<vmem>>, %arg7: memref<1x192x64xbf16, #tpu.memory_space<vmem>>, %arg8: memref<264x640xbf16, #tpu.memory_space<vmem>>) attributes {dimension_semantics = [#tpu.dimension_semantics<parallel>, #tpu.dimension_semantics<arbitrary>], iteration_bounds = array<i64: 2, 1>, scalar_prefetch = 0 : i64, scratch_operands = 1 : i64, tpu.core_type = #tpu.core_type<tc>, window_params = [{transform_indices = @transform_0, window_bounds = array<i64: 1, 256, 128>}, {pipeline_mode = #tpu.pipeline_mode<synchronous>, transform_indices = @transform_1, window_bounds = array<i64: 128, 128>}, {pipeline_mode = #tpu.pipeline_mode<synchronous>, transform_indices = @transform_2, window_bounds = array<i64: 1, 128>}, {pipeline_mode = #tpu.pipeline_mode<synchronous>, transform_indices = @transform_3, window_bounds = array<i64: 5, 640, 64>}, {pipeline_mode = #tpu.pipeline_mode<synchronous>, transform_indices = @transform_4, window_bounds = array<i64: 1, 64>}, {transform_indices = @transform_5, window_bounds = array<i64: 1, 192, 64>}]} {
    %c0_i32 = arith.constant 0 : i32
    %0 = arith.cmpi eq, %arg1, %c0_i32 : i32
    %1 = arith.extui %0 : i1 to i32
    %c0_i32_0 = arith.constant 0 : i32
    %2 = arith.cmpi ne, %1, %c0_i32_0 : i32
    scf.if %2 {
      %c0_27 = arith.constant 0 : index
      %c0_28 = arith.constant 0 : index
      %c0_29 = arith.constant 0 : index
      %48 = vector.load %arg2[%c0_27, %c0_28, %c0_29] : memref<1x256x128xbf16, #tpu.memory_space<vmem>>, vector<1x256x128xbf16>
      %49 = vector.shape_cast %48 : vector<1x256x128xbf16> to vector<256x128xbf16>
      %c0_30 = arith.constant 0 : index
      %c0_31 = arith.constant 0 : index
      %50 = vector.load %arg3[%c0_30, %c0_31] : memref<128x128xbf16, #tpu.memory_space<vmem>>, vector<128x128xbf16>
      %cst_32 = arith.constant dense<0.000000e+00> : vector<256x128xf32>
      %51 = tpu.matmul %49, %50, %cst_32 {dimension_numbers = #tpu.dot_dimension_numbers<[1], [0], [0], [1], [0, 0, 1, 1], [], []>} : vector<256x128xbf16>, vector<128x128xbf16>, vector<256x128xf32> -> vector<256x128xf32>
      %c0_33 = arith.constant 0 : index
      %c0_34 = arith.constant 0 : index
      %52 = vector.load %arg4[%c0_33, %c0_34] : memref<1x128xf32, #tpu.memory_space<vmem>>, vector<1x128xf32>
      %53 = vector.broadcast %52 : vector<1x128xf32> to vector<256x128xf32>
      %54 = arith.addf %51, %53 : vector<256x128xf32>
      %cst_35 = arith.constant 0.000000e+00 : f32
      %55 = vector.broadcast %cst_35 : f32 to vector<256x128xf32>
      %56 = arith.maximumf %54, %55 : vector<256x128xf32>
      %57 = arith.truncf %56 : vector<256x128xf32> to vector<256x128xbf16>
      %cst_36 = arith.constant 0.000000e+00 : bf16
      %58 = vector.broadcast %cst_36 : bf16 to vector<12x640xbf16>
      %c252 = arith.constant 252 : index
      %c0_37 = arith.constant 0 : index
      %59 = vector.load %arg8[%c252, %c0_37] : memref<264x640xbf16, #tpu.memory_space<vmem>>, vector<12x640xbf16>
      tpu.vector_store %arg8[%c252, %c0_37], %58 {strides = array<i32>} : memref<264x640xbf16, #tpu.memory_space<vmem>>, vector<12x640xbf16>,
      %60 = vector.extract_strided_slice %57 {offsets = [0, 0], sizes = [252, 128], strides = [1, 1]} : vector<256x128xbf16> to vector<252x128xbf16>
      %c0_38 = arith.constant 0 : index
      %c0_39 = arith.constant 0 : index
      %61 = vector.load %arg8[%c0_38, %c0_39] : memref<264x640xbf16, #tpu.memory_space<vmem>>, vector<252x128xbf16>
      tpu.vector_store %arg8[%c0_38, %c0_39], %60 {strides = array<i32>} : memref<264x640xbf16, #tpu.memory_space<vmem>>, vector<252x128xbf16>,
      %62 = vector.extract_strided_slice %57 {offsets = [1, 0], sizes = [252, 128], strides = [1, 1]} : vector<256x128xbf16> to vector<252x128xbf16>
      %c0_40 = arith.constant 0 : index
      %c128 = arith.constant 128 : index
      %63 = vector.load %arg8[%c0_40, %c128] : memref<264x640xbf16, #tpu.memory_space<vmem>>, vector<252x128xbf16>
      tpu.vector_store %arg8[%c0_40, %c128], %62 {strides = array<i32>} : memref<264x640xbf16, #tpu.memory_space<vmem>>, vector<252x128xbf16>,
      %64 = vector.extract_strided_slice %57 {offsets = [2, 0], sizes = [252, 128], strides = [1, 1]} : vector<256x128xbf16> to vector<252x128xbf16>
      %c0_41 = arith.constant 0 : index
      %c256 = arith.constant 256 : index
      %65 = vector.load %arg8[%c0_41, %c256] : memref<264x640xbf16, #tpu.memory_space<vmem>>, vector<252x128xbf16>
      tpu.vector_store %arg8[%c0_41, %c256], %64 {strides = array<i32>} : memref<264x640xbf16, #tpu.memory_space<vmem>>, vector<252x128xbf16>,
      %66 = vector.extract_strided_slice %57 {offsets = [3, 0], sizes = [252, 128], strides = [1, 1]} : vector<256x128xbf16> to vector<252x128xbf16>
      %c0_42 = arith.constant 0 : index
      %c384 = arith.constant 384 : index
      %67 = vector.load %arg8[%c0_42, %c384] : memref<264x640xbf16, #tpu.memory_space<vmem>>, vector<252x128xbf16>
      tpu.vector_store %arg8[%c0_42, %c384], %66 {strides = array<i32>} : memref<264x640xbf16, #tpu.memory_space<vmem>>, vector<252x128xbf16>,
      %68 = vector.extract_strided_slice %57 {offsets = [4, 0], sizes = [252, 128], strides = [1, 1]} : vector<256x128xbf16> to vector<252x128xbf16>
      %c0_43 = arith.constant 0 : index
      %c512 = arith.constant 512 : index
      %69 = vector.load %arg8[%c0_43, %c512] : memref<264x640xbf16, #tpu.memory_space<vmem>>, vector<252x128xbf16>
      tpu.vector_store %arg8[%c0_43, %c512], %68 {strides = array<i32>} : memref<264x640xbf16, #tpu.memory_space<vmem>>, vector<252x128xbf16>,
    } else {
    }
    %c192_i32 = arith.constant 192 : i32
    %3 = arith.muli %arg1, %c192_i32 : i32
    %4 = tpu.assume_multiple %3, 192 : i32
    %c0_i32_1 = arith.constant 0 : i32
    %5 = arith.addi %4, %c0_i32_1 : i32
    %6 = arith.index_cast %5 : i32 to index
    %c0 = arith.constant 0 : index
    %7 = vector.load %arg8[%6, %c0] : memref<264x640xbf16, #tpu.memory_space<vmem>>, vector<192x640xbf16>
    %c0_2 = arith.constant 0 : index
    %c0_3 = arith.constant 0 : index
    %c0_4 = arith.constant 0 : index
    %8 = vector.load %arg5[%c0_2, %c0_3, %c0_4] : memref<5x640x64xbf16, #tpu.memory_space<vmem>>, vector<1x640x64xbf16>
    %9 = vector.shape_cast %8 : vector<1x640x64xbf16> to vector<640x64xbf16>
    %cst = arith.constant dense<0.000000e+00> : vector<192x64xf32>
    %10 = tpu.matmul %7, %9, %cst {dimension_numbers = #tpu.dot_dimension_numbers<[1], [0], [0], [1], [0, 0, 1, 1], [], []>} : vector<192x640xbf16>, vector<640x64xbf16>, vector<192x64xf32> -> vector<192x64xf32>
    %c16_i32 = arith.constant 16 : i32
    %11 = arith.addi %4, %c16_i32 : i32
    %12 = arith.index_cast %11 : i32 to index
    %c0_5 = arith.constant 0 : index
    %13 = vector.load %arg8[%12, %c0_5] : memref<264x640xbf16, #tpu.memory_space<vmem>>, vector<192x640xbf16>
    %c1 = arith.constant 1 : index
    %c0_6 = arith.constant 0 : index
    %c0_7 = arith.constant 0 : index
    %14 = vector.load %arg5[%c1, %c0_6, %c0_7] : memref<5x640x64xbf16, #tpu.memory_space<vmem>>, vector<1x640x64xbf16>
    %15 = vector.shape_cast %14 : vector<1x640x64xbf16> to vector<640x64xbf16>
    %cst_8 = arith.constant dense<0.000000e+00> : vector<192x64xf32>
    %16 = tpu.matmul %13, %15, %cst_8 {dimension_numbers = #tpu.dot_dimension_numbers<[1], [0], [0], [1], [0, 0, 1, 1], [], []>} : vector<192x640xbf16>, vector<640x64xbf16>, vector<192x64xf32> -> vector<192x64xf32>
    %17 = arith.addf %10, %16 : vector<192x64xf32>
    %c32_i32 = arith.constant 32 : i32
    %18 = arith.addi %4, %c32_i32 : i32
    %19 = arith.index_cast %18 : i32 to index
    %c0_9 = arith.constant 0 : index
    %20 = vector.load %arg8[%19, %c0_9] : memref<264x640xbf16, #tpu.memory_space<vmem>>, vector<192x640xbf16>
    %c2 = arith.constant 2 : index
    %c0_10 = arith.constant 0 : index
    %c0_11 = arith.constant 0 : index
    %21 = vector.load %arg5[%c2, %c0_10, %c0_11] : memref<5x640x64xbf16, #tpu.memory_space<vmem>>, vector<1x640x64xbf16>
    %22 = vector.shape_cast %21 : vector<1x640x64xbf16> to vector<640x64xbf16>
    %cst_12 = arith.constant dense<0.000000e+00> : vector<192x64xf32>
    %23 = tpu.matmul %20, %22, %cst_12 {dimension_numbers = #tpu.dot_dimension_numbers<[1], [0], [0], [1], [0, 0, 1, 1], [], []>} : vector<192x640xbf16>, vector<640x64xbf16>, vector<192x64xf32> -> vector<192x64xf32>
    %24 = arith.addf %17, %23 : vector<192x64xf32>
    %c48_i32 = arith.constant 48 : i32
    %25 = arith.addi %4, %c48_i32 : i32
    %26 = arith.index_cast %25 : i32 to index
    %c0_13 = arith.constant 0 : index
    %27 = vector.load %arg8[%26, %c0_13] : memref<264x640xbf16, #tpu.memory_space<vmem>>, vector<192x640xbf16>
    %c3 = arith.constant 3 : index
    %c0_14 = arith.constant 0 : index
    %c0_15 = arith.constant 0 : index
    %28 = vector.load %arg5[%c3, %c0_14, %c0_15] : memref<5x640x64xbf16, #tpu.memory_space<vmem>>, vector<1x640x64xbf16>
    %29 = vector.shape_cast %28 : vector<1x640x64xbf16> to vector<640x64xbf16>
    %cst_16 = arith.constant dense<0.000000e+00> : vector<192x64xf32>
    %30 = tpu.matmul %27, %29, %cst_16 {dimension_numbers = #tpu.dot_dimension_numbers<[1], [0], [0], [1], [0, 0, 1, 1], [], []>} : vector<192x640xbf16>, vector<640x64xbf16>, vector<192x64xf32> -> vector<192x64xf32>
    %31 = arith.addf %24, %30 : vector<192x64xf32>
    %c64_i32 = arith.constant 64 : i32
    %32 = arith.addi %4, %c64_i32 : i32
    %33 = arith.index_cast %32 : i32 to index
    %c0_17 = arith.constant 0 : index
    %34 = vector.load %arg8[%33, %c0_17] : memref<264x640xbf16, #tpu.memory_space<vmem>>, vector<192x640xbf16>
    %c4 = arith.constant 4 : index
    %c0_18 = arith.constant 0 : index
    %c0_19 = arith.constant 0 : index
    %35 = vector.load %arg5[%c4, %c0_18, %c0_19] : memref<5x640x64xbf16, #tpu.memory_space<vmem>>, vector<1x640x64xbf16>
    %36 = vector.shape_cast %35 : vector<1x640x64xbf16> to vector<640x64xbf16>
    %cst_20 = arith.constant dense<0.000000e+00> : vector<192x64xf32>
    %37 = tpu.matmul %34, %36, %cst_20 {dimension_numbers = #tpu.dot_dimension_numbers<[1], [0], [0], [1], [0, 0, 1, 1], [], []>} : vector<192x640xbf16>, vector<640x64xbf16>, vector<192x64xf32> -> vector<192x64xf32>
    %38 = arith.addf %31, %37 : vector<192x64xf32>
    %c0_21 = arith.constant 0 : index
    %c0_22 = arith.constant 0 : index
    %39 = vector.load %arg6[%c0_21, %c0_22] : memref<1x64xf32, #tpu.memory_space<vmem>>, vector<1x64xf32>
    %40 = vector.broadcast %39 : vector<1x64xf32> to vector<192x64xf32>
    %41 = arith.addf %38, %40 : vector<192x64xf32>
    %cst_23 = arith.constant 0.000000e+00 : f32
    %42 = vector.broadcast %cst_23 : f32 to vector<192x64xf32>
    %43 = arith.maximumf %41, %42 : vector<192x64xf32>
    %44 = arith.truncf %43 : vector<192x64xf32> to vector<192x64xbf16>
    %c0_24 = arith.constant 0 : index
    %c0_25 = arith.constant 0 : index
    %c0_26 = arith.constant 0 : index
    %45 = vector.load %arg7[%c0_24, %c0_25, %c0_26] : memref<1x192x64xbf16, #tpu.memory_space<vmem>>, vector<1x192x64xbf16>
    %46 = vector.shape_cast %45 : vector<1x192x64xbf16> to vector<192x64xbf16>
    %47 = vector.shape_cast %44 : vector<192x64xbf16> to vector<1x192x64xbf16>
    tpu.vector_store %arg7[%c0_24, %c0_25, %c0_26], %47 {strides = array<i32>} : memref<1x192x64xbf16, #tpu.memory_space<vmem>>, vector<1x192x64xbf16>,
    return
  }
  func.func @transform_0(%arg0: i32, %arg1: i32) -> (i32, i32, i32) {
    %c0_i32 = arith.constant 0 : i32
    %c0_i32_0 = arith.constant 0 : i32
    %c0_i32_1 = arith.constant 0 : i32
    return %arg0, %c0_i32, %c0_i32_0 : i32, i32, i32
  }
  func.func @transform_1(%arg0: i32, %arg1: i32) -> (i32, i32) {
    %c0_i32 = arith.constant 0 : i32
    %c0_i32_0 = arith.constant 0 : i32
    %c0_i32_1 = arith.constant 0 : i32
    return %c0_i32, %c0_i32_0 : i32, i32
  }
  func.func @transform_2(%arg0: i32, %arg1: i32) -> (i32, i32) {
    %c0_i32 = arith.constant 0 : i32
    %c0_i32_0 = arith.constant 0 : i32
    %c0_i32_1 = arith.constant 0 : i32
    return %c0_i32, %c0_i32_0 : i32, i32
  }
  func.func @transform_3(%arg0: i32, %arg1: i32) -> (i32, i32, i32) {
    %c0_i32 = arith.constant 0 : i32
    %c0_i32_0 = arith.constant 0 : i32
    %c0_i32_1 = arith.constant 0 : i32
    %c0_i32_2 = arith.constant 0 : i32
    return %c0_i32, %c0_i32_0, %c0_i32_1 : i32, i32, i32
  }
  func.func @transform_4(%arg0: i32, %arg1: i32) -> (i32, i32) {
    %c0_i32 = arith.constant 0 : i32
    %c0_i32_0 = arith.constant 0 : i32
    %c0_i32_1 = arith.constant 0 : i32
    return %c0_i32, %c0_i32_0 : i32, i32
  }
  func.func @transform_5(%arg0: i32, %arg1: i32) -> (i32, i32, i32) {
    %c0_i32 = arith.constant 0 : i32
    %c0_i32_0 = arith.constant 0 : i32
    return %arg0, %arg1, %c0_i32 : i32, i32, i32
  }
}

</mosaic_0001>

<llo_original>
// kernel: resnet_feature_extraction_layer.1
$region0: #{resnet_feature_extraction_layer.1}
  #allocation0 [shape = 'u32[]', space=smem, size = 0x4, offset = 0x4, fixed_abs, tag = 'smem constant byte address 0x4 - core index']
  #allocation1 [shape = 'u32[144,128]{1,0:T(1,128)}', space=vmem, size = 0x12000, scoped, tag = 'internal scratch']
  #allocation2 [shape = 'bf16[264,640]{1,0:T(8,128)(2,1)}', space=vmem, size = 0x52800, scoped, tag = 'scratch operand']
  %s0 = inlined_call_operand.vmem [shape: bf16[2,256,128], index: 0, kind: input, shape index: {}]
  %s1 = inlined_call_operand.vmem [shape: bf16[128,128], index: 1, kind: input, shape index: {}]
  %s2 = inlined_call_operand.vmem [shape: f32[1,128], index: 2, kind: input, shape index: {}]
  %s3 = inlined_call_operand.vmem [shape: bf16[5,640,64], index: 3, kind: input, shape index: {}]
  %s4 = inlined_call_operand.vmem [shape: f32[1,64], index: 4, kind: input, shape index: {}]
  %s5 = inlined_call_operand.vmem [shape: bf16[2,192,64], index: 5, kind: output, shape index: {}]
  %s6 = sld [smem:[#allocation0]]
  $region57: #{resnet_feature_extraction_layer.1} parent=0
    _
  %s8 = ssub.s32 1, %s6
  %s9 = scalar_select 0, %s8, %s6
  loop: start=0, step=1, limit=4
  $region2: #{resnet_feature_extraction_layer.1} parent=0 // loop_pre_header
    _
  $region3: #{resnet_feature_extraction_layer.1} parent=0 // loop_header
    %s11 = sphi 0, %s15
    %p12 = scmp.ge.s32.totalorder %s11, 4
    %s18 = sphi 0, %s30
    %s19 = sphi 0, %s26
    %s20 = sphi 0, %s18
    %s21 = sphi 0, %s19
    %s22 = sphi 0, %s20
    %s23 = sphi 0, %s21
    %s33 = sphi 0, %s35
    %s36 = sphi 0, %s33
    %s37 = sphi 0, %s36
    %s53 = sphi 0, %s37
    %s57 = sphi 0, %s57
    %s59 = sphi 0, %s57
    %s60 = sphi 0, %s59
    %s74 = sphi 0, %s60
    %s78 = sphi 0, %s78
    %s80 = sphi 0, %s78
    %s81 = sphi 0, %s80
    %s95 = sphi 0, %s81
    %s99 = sphi 0, %s99
    %s101 = sphi 0, %s99
    %s102 = sphi 0, %s101
    %s116 = sphi 0, %s102
    %s120 = sphi 0, %s120
    %s122 = sphi 0, %s120
    %s123 = sphi 0, %s122
    %s137 = sphi 0, %s123
    %s145 = sphi 0, %s147
    %s148 = sphi 0, %s145
    %s149 = sphi 0, %s148
    %s165 = sphi 0, %s149
  $region4: #{resnet_feature_extraction_layer.1} parent=0 // loop_header_branch
    %14 = sbr.rel (%p12) target = $region8
  $region5: #{resnet_feature_extraction_layer.1} parent=0 // loop_body
    %s16 = ssub.s32 %s11, 1
    %s17 = ssub.s32 %s11, 2
    %s24 = sadd.s32 1, %s19
    %p25 = scmp.ge.s32.totalorder %s24, 1
    %s26 = scalar_select %p25, 0, %s24
    %s27 = sadd.s32 1, %s18
    %s28 = scalar_select %p25, %s27, %s18
    %p29 = scmp.ge.s32.totalorder %s28, 2
    %s30 = scalar_select %p29, 0, %s28
    %s31 = ssub.s32 %s18, %s30
    %p32 = scmp.eq.s32.totalorder %s31, 0
    %s34 = sadd.s32 %s33, 1
    %s35 = scalar_select %p32, %s33, %s34
    %p38 = pneg %p32
    %p39 = scmp.eq.s32.totalorder %s11, 1
    %p40 = por %p38, %p39
    %p41 = scmp.ne.s32.totalorder %s33, %s36
    %p42 = scmp.eq.s32.totalorder %s11, 0
    %p43 = por %p41, %p42
    %p44 = scmp.ne.s32.totalorder %s33, %s36
    %p45 = scmp.eq.s32.totalorder %s16, 1
    %p46 = por %p44, %p45
    %p47 = scmp.ne.s32.totalorder %s36, %s37
    %p48 = scmp.eq.s32.totalorder %s16, 0
    %p49 = por %p47, %p48
    %p50 = scmp.ne.s32.totalorder %s36, %s37
    %p51 = scmp.eq.s32.totalorder %s17, 1
    %p52 = por %p50, %p51
    %p54 = scmp.ne.s32.totalorder %s37, %s53
    %p55 = scmp.eq.s32.totalorder %s17, 0
    %p56 = por %p54, %p55
    %s58 = sadd.s32 %s57, 1
    %p61 = scmp.eq.s32.totalorder %s11, 1
    %p62 = scmp.ne.s32.totalorder %s57, %s59
    %p63 = scmp.eq.s32.totalorder %s11, 0
    %p64 = por %p62, %p63
    %p65 = scmp.ne.s32.totalorder %s57, %s59
    %p66 = scmp.eq.s32.totalorder %s16, 1
    %p67 = por %p65, %p66
    %p68 = scmp.ne.s32.totalorder %s59, %s60
    %p69 = scmp.eq.s32.totalorder %s16, 0
    %p70 = por %p68, %p69
    %p71 = scmp.ne.s32.totalorder %s59, %s60
    %p72 = scmp.eq.s32.totalorder %s17, 1
    %p73 = por %p71, %p72
    %p75 = scmp.ne.s32.totalorder %s60, %s74
    %p76 = scmp.eq.s32.totalorder %s17, 0
    %p77 = por %p75, %p76
    %s79 = sadd.s32 %s78, 1
    %p82 = scmp.eq.s32.totalorder %s11, 1
    %p83 = scmp.ne.s32.totalorder %s78, %s80
    %p84 = scmp.eq.s32.totalorder %s11, 0
    %p85 = por %p83, %p84
    %p86 = scmp.ne.s32.totalorder %s78, %s80
    %p87 = scmp.eq.s32.totalorder %s16, 1
    %p88 = por %p86, %p87
    %p89 = scmp.ne.s32.totalorder %s80, %s81
    %p90 = scmp.eq.s32.totalorder %s16, 0
    %p91 = por %p89, %p90
    %p92 = scmp.ne.s32.totalorder %s80, %s81
    %p93 = scmp.eq.s32.totalorder %s17, 1
    %p94 = por %p92, %p93
    %p96 = scmp.ne.s32.totalorder %s81, %s95
    %p97 = scmp.eq.s32.totalorder %s17, 0
    %p98 = por %p96, %p97
    %s100 = sadd.s32 %s99, 1
    %p103 = scmp.eq.s32.totalorder %s11, 1
    %p104 = scmp.ne.s32.totalorder %s99, %s101
    %p105 = scmp.eq.s32.totalorder %s11, 0
    %p106 = por %p104, %p105
    %p107 = scmp.ne.s32.totalorder %s99, %s101
    %p108 = scmp.eq.s32.totalorder %s16, 1
    %p109 = por %p107, %p108
    %p110 = scmp.ne.s32.totalorder %s101, %s102
    %p111 = scmp.eq.s32.totalorder %s16, 0
    %p112 = por %p110, %p111
    %p113 = scmp.ne.s32.totalorder %s101, %s102
    %p114 = scmp.eq.s32.totalorder %s17, 1
    %p115 = por %p113, %p114
    %p117 = scmp.ne.s32.totalorder %s102, %s116
    %p118 = scmp.eq.s32.totalorder %s17, 0
    %p119 = por %p117, %p118
    %s121 = sadd.s32 %s120, 1
    %p124 = scmp.eq.s32.totalorder %s11, 1
    %p125 = scmp.ne.s32.totalorder %s120, %s122
    %p126 = scmp.eq.s32.totalorder %s11, 0
    %p127 = por %p125, %p126
    %p128 = scmp.ne.s32.totalorder %s120, %s122
    %p129 = scmp.eq.s32.totalorder %s16, 1
    %p130 = por %p128, %p129
    %p131 = scmp.ne.s32.totalorder %s122, %s123
    %p132 = scmp.eq.s32.totalorder %s16, 0
    %p133 = por %p131, %p132
    %p134 = scmp.ne.s32.totalorder %s122, %s123
    %p135 = scmp.eq.s32.totalorder %s17, 1
    %p136 = por %p134, %p135
    %p138 = scmp.ne.s32.totalorder %s123, %s137
    %p139 = scmp.eq.s32.totalorder %s17, 0
    %p140 = por %p138, %p139
    %s141 = ssub.s32 %s18, %s30
    %s142 = ssub.s32 %s19, %s26
    %s143 = sor.u32 %s141, %s142
    %p144 = scmp.eq.s32.totalorder %s143, 0
    %s146 = sadd.s32 %s145, 1
    %s147 = scalar_select %p144, %s145, %s146
    %p150 = pneg %p144
    %p151 = scmp.eq.s32.totalorder %s11, 1
    %p152 = por %p150, %p151
    %p153 = scmp.ne.s32.totalorder %s145, %s148
    %p154 = scmp.eq.s32.totalorder %s11, 0
    %p155 = por %p153, %p154
    %p156 = scmp.ne.s32.totalorder %s145, %s148
    %p157 = scmp.eq.s32.totalorder %s16, 1
    %p158 = por %p156, %p157
    %p159 = scmp.ne.s32.totalorder %s148, %s149
    %p160 = scmp.eq.s32.totalorder %s16, 0
    %p161 = por %p159, %p160
    %p162 = scmp.ne.s32.totalorder %s148, %s149
    %p163 = scmp.eq.s32.totalorder %s17, 1
    %p164 = por %p162, %p163
    %p166 = scmp.ne.s32.totalorder %s149, %s165
    %p167 = scmp.eq.s32.totalorder %s17, 0
    %p168 = por %p166, %p167
    %p169 = scmp.le.s32.totalorder 1, %s11
    %p170 = scmp.lt.s32.totalorder %s11, 3
    %p171 = pnand %p169, %p170
    %p172 = pneg %p171
    // Predicated region
    $region9: #{resnet_feature_extraction_layer.1} parent=5 // pred_check
      _
    $region10: #{resnet_feature_extraction_layer.1} parent=5 // pred_check_branch
      %174 = sbr.rel (%p171) target = $region12
    $region11: #{resnet_feature_extraction_layer.1} parent=5 // pred_region
      %s175 = ssub.s32 %s11, 1
      // Predicated region
      $region13: #{resnet_feature_extraction_layer.1} parent=11 // pred_check
        %p176 = pneg %p70
      $region14: #{resnet_feature_extraction_layer.1} parent=11 // pred_check_branch
        %178 = sbr.rel (%p176) target = $region16
      $region15: #{resnet_feature_extraction_layer.1} parent=11 // pred_region
        _
      $region16: #{resnet_feature_extraction_layer.1} parent=11 // pred_fallthru
        _
      // Predicated region
      $region17: #{resnet_feature_extraction_layer.1} parent=11 // pred_check
        %p179 = pneg %p91
      $region18: #{resnet_feature_extraction_layer.1} parent=11 // pred_check_branch
        %181 = sbr.rel (%p179) target = $region20
      $region19: #{resnet_feature_extraction_layer.1} parent=11 // pred_region
        _
      $region20: #{resnet_feature_extraction_layer.1} parent=11 // pred_fallthru
        _
      // Predicated region
      $region21: #{resnet_feature_extraction_layer.1} parent=11 // pred_check
        %p182 = pneg %p112
      $region22: #{resnet_feature_extraction_layer.1} parent=11 // pred_check_branch
        %184 = sbr.rel (%p182) target = $region24
      $region23: #{resnet_feature_extraction_layer.1} parent=11 // pred_region
        _
      $region24: #{resnet_feature_extraction_layer.1} parent=11 // pred_fallthru
        _
      // Predicated region
      $region25: #{resnet_feature_extraction_layer.1} parent=11 // pred_check
        %p185 = pneg %p133
      $region26: #{resnet_feature_extraction_layer.1} parent=11 // pred_check_branch
        %187 = sbr.rel (%p185) target = $region28
      $region27: #{resnet_feature_extraction_layer.1} parent=11 // pred_region
        _
      $region28: #{resnet_feature_extraction_layer.1} parent=11 // pred_fallthru
        _
    $region12: #{resnet_feature_extraction_layer.1} parent=5 // pred_fallthru
      _
    %p188 = scmp.lt.s32.totalorder %s11, 2
    // Predicated region
    $region29: #{resnet_feature_extraction_layer.1} parent=5 // pred_check
      %p189 = pneg %p188
    $region30: #{resnet_feature_extraction_layer.1} parent=5 // pred_check_branch
      %191 = sbr.rel (%p189) target = $region32
    $region31: #{resnet_feature_extraction_layer.1} parent=5 // pred_region
      // Predicated region
      $region33: #{resnet_feature_extraction_layer.1} parent=31 // pred_check
        %p192 = pneg %p43
      $region34: #{resnet_feature_extraction_layer.1} parent=31 // pred_check_branch
        %194 = sbr.rel (%p192) target = $region36
      $region35: #{resnet_feature_extraction_layer.1} parent=31 // pred_region
        %p195 = scmp.lt.s32.totalorder %s18, 1
        %s196 = scalar_select %p195, %s18, 1
        %s197 = smul.addr %s196, 32
        %s198 = smul.addr %s197, 4
        %s199 = scalar_lea.vmem %s0, %s198
      $region36: #{resnet_feature_extraction_layer.1} parent=31 // pred_fallthru
        _
    $region32: #{resnet_feature_extraction_layer.1} parent=5 // pred_fallthru
      _
    %p200 = scmp.le.s32.totalorder 1, %s11
    %p201 = scmp.lt.s32.totalorder %s11, 3
    %p202 = pnand %p200, %p201
    %p203 = pneg %p202
    // Predicated region
    $region37: #{resnet_feature_extraction_layer.1} parent=5 // pred_check
      _
    $region38: #{resnet_feature_extraction_layer.1} parent=5 // pred_check_branch
      %205 = sbr.rel (%p202) target = $region40
    $region39: #{resnet_feature_extraction_layer.1} parent=5 // pred_region
      %s206 = ssub.s32 %s11, 1
      %p207 = scmp.lt.s32.totalorder %s20, 1
      %s208 = scalar_select %p207, %s20, 1
      %s209 = smul.addr %s208, 32
      %s210 = smul.addr %s209, 4
      %s211 = scalar_lea.vmem %s0, %s210
      %p212 = pneg %p49
      %p213 = pneg %p46
      %p214 = pneg %p70
      %p215 = pneg %p67
      %p216 = pneg %p91
      %p217 = pneg %p88
      %p218 = pneg %p112
      %p219 = pneg %p109
      %p220 = pneg %p133
      %p221 = pneg %p130
      %p222 = pneg %p161
      %p223 = pneg %p158
      %s224 = smul.u32 24, %s21
      %p225 = scmp.lt.s32.totalorder %s20, 1
      %s226 = scalar_select %p225, %s20, 1
      %p227 = scmp.lt.s32.totalorder %s224, 23
      %s228 = scalar_select %p227, %s224, 23
      %s229 = smul.addr %s226, 24
      %s230 = sadd.s32 %s228, %s229
      %s231 = smul.addr %s230, 4
      %s232 = scalar_lea.vmem %s5, %s231
      %p233 = scmp.lt.s32.totalorder %s20, 1
      %s234 = scalar_select %p233, %s20, 1
      %s235 = smul.addr %s234, 32
      %s236 = smul.addr %s235, 4
      %s237 = scalar_lea.vmem %s0, %s236
      %s238 = smul.u32 24, %s21
      %p239 = scmp.lt.s32.totalorder %s20, 1
      %s240 = scalar_select %p239, %s20, 1
      %p241 = scmp.lt.s32.totalorder %s238, 23
      %s242 = scalar_select %p241, %s238, 23
      %s243 = smul.addr %s240, 24
      %s244 = sadd.s32 %s242, %s243
      %s245 = smul.addr %s244, 4
      %s246 = scalar_lea.vmem %s5, %s245
      %s247 = smul.u32 24, %s21
      %p249 = scmp.eq.s32.totalorder %s21, 0
      // Predicated region
      $region41: #{resnet_feature_extraction_layer.1} parent=39 // pred_check
        %p250 = pneg %p249
      $region42: #{resnet_feature_extraction_layer.1} parent=39 // pred_check_branch
        %252 = sbr.rel (%p250) target = $region44
      $region43: #{resnet_feature_extraction_layer.1} parent=39 // pred_region
        %v253 = vld [vmem:[%s237] sm:$0xf]
        %v254 = vld [vmem:[%s237 + $0x4] sm:$0xf]
        %v255 = vld [vmem:[%s237 + $0x8] sm:$0xf]
        %v256 = vld [vmem:[%s237 + $0xc] sm:$0xf]
        %v257 = vld [vmem:[%s237 + $0x10] sm:$0xf]
        %v258 = vld [vmem:[%s237 + $0x14] sm:$0xf]
        %v259 = vld [vmem:[%s237 + $0x18] sm:$0xf]
        %v260 = vld [vmem:[%s237 + $0x1c] sm:$0xf]
        %v261 = vld [vmem:[%s237 + $0x20] sm:$0xf]
        %v262 = vld [vmem:[%s237 + $0x24] sm:$0xf]
        %v263 = vld [vmem:[%s237 + $0x28] sm:$0xf]
        %v264 = vld [vmem:[%s237 + $0x2c] sm:$0xf]
        %v265 = vld [vmem:[%s237 + $0x30] sm:$0xf]
        %v266 = vld [vmem:[%s237 + $0x34] sm:$0xf]
        %v267 = vld [vmem:[%s237 + $0x38] sm:$0xf]
        %v268 = vld [vmem:[%s237 + $0x3c] sm:$0xf]
        %v269 = vld [vmem:[%s237 + $0x40] sm:$0xf]
        %v270 = vld [vmem:[%s237 + $0x44] sm:$0xf]
        %v271 = vld [vmem:[%s237 + $0x48] sm:$0xf]
        %v272 = vld [vmem:[%s237 + $0x4c] sm:$0xf]
        %v273 = vld [vmem:[%s237 + $0x50] sm:$0xf]
        %v274 = vld [vmem:[%s237 + $0x54] sm:$0xf]
        %v275 = vld [vmem:[%s237 + $0x58] sm:$0xf]
        %v276 = vld [vmem:[%s237 + $0x5c] sm:$0xf]
        %v277 = vld [vmem:[%s237 + $0x60] sm:$0xf]
        %v278 = vld [vmem:[%s237 + $0x64] sm:$0xf]
        %v279 = vld [vmem:[%s237 + $0x68] sm:$0xf]
        %v280 = vld [vmem:[%s237 + $0x6c] sm:$0xf]
        %v281 = vld [vmem:[%s237 + $0x70] sm:$0xf]
        %v282 = vld [vmem:[%s237 + $0x74] sm:$0xf]
        %v283 = vld [vmem:[%s237 + $0x78] sm:$0xf]
        %v284 = vld [vmem:[%s237 + $0x7c] sm:$0xf]
        %v285 = vld [vmem:[%s1] sm:$0xf]
        %v286 = vld [vmem:[%s1 + $0x4] sm:$0xf]
        %v287 = vld [vmem:[%s1 + $0x8] sm:$0xf]
        %v288 = vld [vmem:[%s1 + $0xc] sm:$0xf]
        %v289 = vld [vmem:[%s1 + $0x10] sm:$0xf]
        %v290 = vld [vmem:[%s1 + $0x14] sm:$0xf]
        %v291 = vld [vmem:[%s1 + $0x18] sm:$0xf]
        %v292 = vld [vmem:[%s1 + $0x1c] sm:$0xf]
        %v293 = vld [vmem:[%s1 + $0x20] sm:$0xf]
        %v294 = vld [vmem:[%s1 + $0x24] sm:$0xf]
        %v295 = vld [vmem:[%s1 + $0x28] sm:$0xf]
        %v296 = vld [vmem:[%s1 + $0x2c] sm:$0xf]
        %v297 = vld [vmem:[%s1 + $0x30] sm:$0xf]
        %v298 = vld [vmem:[%s1 + $0x34] sm:$0xf]
        %v299 = vld [vmem:[%s1 + $0x38] sm:$0xf]
        %v300 = vld [vmem:[%s1 + $0x3c] sm:$0xf]
        %v301 = vld [vmem:[%s2] sm:$0x1]
        %v303 = vlaneseq
        %v304 = vshrl.u32 %v303, 7
        %v305 = vsub.s32 0, %v304
        %v306 = vrot.slane %v301, %v305
        %v340 = vunpack.c.l.b16 %v253
        %v341 = vunpack.c.l.b16 %v254
        %v342 = vunpack.c.l.b16 %v255
        %v343 = vunpack.c.l.b16 %v256
        %v344 = vunpack.c.l.b16 %v257
        %v345 = vunpack.c.l.b16 %v258
        %v346 = vunpack.c.l.b16 %v259
        %v347 = vunpack.c.l.b16 %v260
        %v348 = vunpack.c.l.b16 %v261
        %v349 = vunpack.c.l.b16 %v262
        %v350 = vunpack.c.l.b16 %v263
        %v351 = vunpack.c.l.b16 %v264
        %v352 = vunpack.c.l.b16 %v265
        %v353 = vunpack.c.l.b16 %v266
        %v354 = vunpack.c.l.b16 %v267
        %v355 = vunpack.c.l.b16 %v268
        %v356 = vunpack.c.l.b16 %v269
        %v357 = vunpack.c.l.b16 %v270
        %v358 = vunpack.c.l.b16 %v271
        %v359 = vunpack.c.l.b16 %v272
        %v360 = vunpack.c.l.b16 %v273
        %v361 = vunpack.c.l.b16 %v274
        %v362 = vunpack.c.l.b16 %v275
        %v363 = vunpack.c.l.b16 %v276
        %v364 = vunpack.c.l.b16 %v277
        %v365 = vunpack.c.l.b16 %v278
        %v366 = vunpack.c.l.b16 %v279
        %v367 = vunpack.c.l.b16 %v280
        %v368 = vunpack.c.l.b16 %v281
        %v369 = vunpack.c.l.b16 %v282
        %v370 = vunpack.c.l.b16 %v283
        %v371 = vunpack.c.l.b16 %v284
        %v372 = vpack.c.b16 %v341, %v340
        %v373 = vpack.c.b16 %v343, %v342
        %v374 = vpack.c.b16 %v345, %v344
        %v375 = vpack.c.b16 %v347, %v346
        %v376 = vpack.c.b16 %v349, %v348
        %v377 = vpack.c.b16 %v351, %v350
        %v378 = vpack.c.b16 %v353, %v352
        %v379 = vpack.c.b16 %v355, %v354
        %v380 = vpack.c.b16 %v357, %v356
        %v381 = vpack.c.b16 %v359, %v358
        %v382 = vpack.c.b16 %v361, %v360
        %v383 = vpack.c.b16 %v363, %v362
        %v384 = vpack.c.b16 %v365, %v364
        %v385 = vpack.c.b16 %v367, %v366
        %v386 = vpack.c.b16 %v369, %v368
        %v387 = vpack.c.b16 %v371, %v370
        %v420 = vunpack.c.l.b16 %v285
        %v421 = vunpack.c.l.b16 %v286
        %v422 = vunpack.c.l.b16 %v287
        %v423 = vunpack.c.l.b16 %v288
        %v424 = vunpack.c.l.b16 %v289
        %v425 = vunpack.c.l.b16 %v290
        %v426 = vunpack.c.l.b16 %v291
        %v427 = vunpack.c.l.b16 %v292
        %v428 = vunpack.c.l.b16 %v293
        %v429 = vunpack.c.l.b16 %v294
        %v430 = vunpack.c.l.b16 %v295
        %v431 = vunpack.c.l.b16 %v296
        %v432 = vunpack.c.l.b16 %v297
        %v433 = vunpack.c.l.b16 %v298
        %v434 = vunpack.c.l.b16 %v299
        %v435 = vunpack.c.l.b16 %v300
        %v436 = vpack.c.b16 %v421, %v420
        %v437 = vpack.c.b16 %v423, %v422
        %v438 = vpack.c.b16 %v425, %v424
        %v439 = vpack.c.b16 %v427, %v426
        %v440 = vpack.c.b16 %v429, %v428
        %v441 = vpack.c.b16 %v431, %v430
        %v442 = vpack.c.b16 %v433, %v432
        %v443 = vpack.c.b16 %v435, %v434
        %452 = vmatprep.subr.bf16.mxu0 0
        %453 = vmatpush1.bf16.msra.mxu0 %v443
        %454 = vmatprep.subr.bf16.mxu0 0
        %455 = vmatpush1.bf16.msra.mxu0 %v442
        %456 = vmatprep.subr.bf16.mxu0 0
        %457 = vmatpush1.bf16.msra.mxu0 %v441
        %458 = vmatprep.subr.bf16.mxu0 0
        %459 = vmatpush1.bf16.msra.mxu0 %v440
        %460 = vmatprep.subr.bf16.mxu0 0
        %461 = vmatpush1.bf16.msra.mxu0 %v439
        %462 = vmatprep.subr.bf16.mxu0 0
        %463 = vmatpush1.bf16.msra.mxu0 %v438
        %464 = vmatprep.subr.bf16.mxu0 0
        %465 = vmatpush1.bf16.msra.mxu0 %v437
        %466 = vmatprep.subr.bf16.mxu0 0
        %467 = vmatpush1.bf16.msra.mxu0 %v436
        %468 = vmatprep.subr.bf16.mxu0 0
        %469 = vmatpush2.bf16.msra.mxu0 0
        %470 = vmatprep.subr.bf16.mxu0 0
        %471 = vmatpush2.bf16.msra.mxu0 0
        %472 = vmatprep.subr.bf16.mxu0 0
        %473 = vmatpush2.bf16.msra.mxu0 0
        %474 = vmatprep.subr.bf16.mxu0 0
        %475 = vmatpush2.bf16.msra.mxu0 0
        %476 = vmatprep.subr.bf16.mxu0 0
        %477 = vmatpush2.bf16.msra.mxu0 0
        %478 = vmatprep.subr.bf16.mxu0 0
        %479 = vmatpush2.bf16.msra.mxu0 0
        %480 = vmatprep.subr.bf16.mxu0 0
        %481 = vmatpush2.bf16.msra.mxu0 0
        %482 = vmatprep.subr.bf16.mxu0 0
        %483 = vmatpush2.bf16.msra.mxu0 0
        %484 = vmatprep.mubr.bf16.mxu0 0
        %485 = vmatmul.mubr.bf16.gmra.mxu0 %v372
        %v486 = vpop.f32.mrf.mxu0
        %v487 = vadd.f32 %v306, %v486
        %v488 = vpop.f32.mrf.mxu0
        %v489 = vpop.f32.mrf.mxu0
        %v490 = vadd.f32 %v306, %v489
        %v491 = vpop.f32.mrf.mxu0
        %492 = vmatprep.mubr.bf16.mxu0 0
        %493 = vmatmul.mubr.bf16.gmra.mxu0 %v373
        %v494 = vpop.f32.mrf.mxu0
        %v495 = vadd.f32 %v306, %v494
        %v496 = vpop.f32.mrf.mxu0
        %v497 = vpop.f32.mrf.mxu0
        %v498 = vadd.f32 %v306, %v497
        %v499 = vpop.f32.mrf.mxu0
        %500 = vmatprep.mubr.bf16.mxu0 0
        %501 = vmatmul.mubr.bf16.gmra.mxu0 %v374
        %v502 = vpop.f32.mrf.mxu0
        %v503 = vadd.f32 %v306, %v502
        %v504 = vpop.f32.mrf.mxu0
        %v505 = vpop.f32.mrf.mxu0
        %v506 = vadd.f32 %v306, %v505
        %v507 = vpop.f32.mrf.mxu0
        %508 = vmatprep.mubr.bf16.mxu0 0
        %509 = vmatmul.mubr.bf16.gmra.mxu0 %v375
        %v510 = vpop.f32.mrf.mxu0
        %v511 = vadd.f32 %v306, %v510
        %v512 = vpop.f32.mrf.mxu0
        %v513 = vpop.f32.mrf.mxu0
        %v514 = vadd.f32 %v306, %v513
        %v515 = vpop.f32.mrf.mxu0
        %516 = vmatprep.mubr.bf16.mxu0 0
        %517 = vmatmul.mubr.bf16.gmra.mxu0 %v376
        %v518 = vpop.f32.mrf.mxu0
        %v519 = vadd.f32 %v306, %v518
        %v520 = vpop.f32.mrf.mxu0
        %v521 = vpop.f32.mrf.mxu0
        %v522 = vadd.f32 %v306, %v521
        %v523 = vpop.f32.mrf.mxu0
        %524 = vmatprep.mubr.bf16.mxu0 0
        %525 = vmatmul.mubr.bf16.gmra.mxu0 %v377
        %v526 = vpop.f32.mrf.mxu0
        %v527 = vadd.f32 %v306, %v526
        %v528 = vpop.f32.mrf.mxu0
        %v529 = vpop.f32.mrf.mxu0
        %v530 = vadd.f32 %v306, %v529
        %v531 = vpop.f32.mrf.mxu0
        %532 = vmatprep.mubr.bf16.mxu0 0
        %533 = vmatmul.mubr.bf16.gmra.mxu0 %v378
        %v534 = vpop.f32.mrf.mxu0
        %v535 = vadd.f32 %v306, %v534
        %v536 = vpop.f32.mrf.mxu0
        %v537 = vpop.f32.mrf.mxu0
        %v538 = vadd.f32 %v306, %v537
        %v539 = vpop.f32.mrf.mxu0
        %540 = vmatprep.mubr.bf16.mxu0 0
        %541 = vmatmul.mubr.bf16.gmra.mxu0 %v379
        %v542 = vpop.f32.mrf.mxu0
        %v543 = vadd.f32 %v306, %v542
        %v544 = vpop.f32.mrf.mxu0
        %v545 = vpop.f32.mrf.mxu0
        %v546 = vadd.f32 %v306, %v545
        %v547 = vpop.f32.mrf.mxu0
        %548 = vmatprep.mubr.bf16.mxu0 0
        %549 = vmatmul.mubr.bf16.gmra.mxu0 %v380
        %v550 = vpop.f32.mrf.mxu0
        %v551 = vadd.f32 %v306, %v550
        %v552 = vpop.f32.mrf.mxu0
        %v553 = vpop.f32.mrf.mxu0
        %v554 = vadd.f32 %v306, %v553
        %v555 = vpop.f32.mrf.mxu0
        %556 = vmatprep.mubr.bf16.mxu0 0
        %557 = vmatmul.mubr.bf16.gmra.mxu0 %v381
        %v558 = vpop.f32.mrf.mxu0
        %v559 = vadd.f32 %v306, %v558
        %v560 = vpop.f32.mrf.mxu0
        %v561 = vpop.f32.mrf.mxu0
        %v562 = vadd.f32 %v306, %v561
        %v563 = vpop.f32.mrf.mxu0
        %564 = vmatprep.mubr.bf16.mxu0 0
        %565 = vmatmul.mubr.bf16.gmra.mxu0 %v382
        %v566 = vpop.f32.mrf.mxu0
        %v567 = vadd.f32 %v306, %v566
        %v568 = vpop.f32.mrf.mxu0
        %v569 = vpop.f32.mrf.mxu0
        %v570 = vadd.f32 %v306, %v569
        %v571 = vpop.f32.mrf.mxu0
        %572 = vmatprep.mubr.bf16.mxu0 0
        %573 = vmatmul.mubr.bf16.gmra.mxu0 %v383
        %v574 = vpop.f32.mrf.mxu0
        %v575 = vadd.f32 %v306, %v574
        %v576 = vpop.f32.mrf.mxu0
        %v577 = vpop.f32.mrf.mxu0
        %v578 = vadd.f32 %v306, %v577
        %v579 = vpop.f32.mrf.mxu0
        %580 = vmatprep.mubr.bf16.mxu0 0
        %581 = vmatmul.mubr.bf16.gmra.mxu0 %v384
        %v582 = vpop.f32.mrf.mxu0
        %v583 = vadd.f32 %v306, %v582
        %v584 = vpop.f32.mrf.mxu0
        %v585 = vpop.f32.mrf.mxu0
        %v586 = vadd.f32 %v306, %v585
        %v587 = vpop.f32.mrf.mxu0
        %588 = vmatprep.mubr.bf16.mxu0 0
        %589 = vmatmul.mubr.bf16.gmra.mxu0 %v385
        %v590 = vpop.f32.mrf.mxu0
        %v591 = vadd.f32 %v306, %v590
        %v592 = vpop.f32.mrf.mxu0
        %v593 = vpop.f32.mrf.mxu0
        %v594 = vadd.f32 %v306, %v593
        %v595 = vpop.f32.mrf.mxu0
        %596 = vmatprep.mubr.bf16.mxu0 0
        %597 = vmatmul.mubr.bf16.gmra.mxu0 %v386
        %v598 = vpop.f32.mrf.mxu0
        %v599 = vadd.f32 %v306, %v598
        %v600 = vpop.f32.mrf.mxu0
        %v601 = vpop.f32.mrf.mxu0
        %v602 = vadd.f32 %v306, %v601
        %v603 = vpop.f32.mrf.mxu0
        %604 = vmatprep.mubr.bf16.mxu0 0
        %605 = vmatmul.mubr.bf16.gmra.mxu0 %v387
        %v606 = vpop.f32.mrf.mxu0
        %v607 = vadd.f32 %v306, %v606
        %v608 = vpop.f32.mrf.mxu0
        %v609 = vpop.f32.mrf.mxu0
        %v610 = vadd.f32 %v306, %v609
        %v611 = vpop.f32.mrf.mxu0
        %612 = vdwg.mxu0
        %v613 = vmax.f32 %v487, 0.0
        %v614 = vmax.f32 %v490, 0.0
        %v615 = vmax.f32 %v495, 0.0
        %v616 = vmax.f32 %v498, 0.0
        %v617 = vmax.f32 %v503, 0.0
        %v618 = vmax.f32 %v506, 0.0
        %v619 = vmax.f32 %v511, 0.0
        %v620 = vmax.f32 %v514, 0.0
        %v621 = vmax.f32 %v519, 0.0
        %v622 = vmax.f32 %v522, 0.0
        %v623 = vmax.f32 %v527, 0.0
        %v624 = vmax.f32 %v530, 0.0
        %v625 = vmax.f32 %v535, 0.0
        %v626 = vmax.f32 %v538, 0.0
        %v627 = vmax.f32 %v543, 0.0
        %v628 = vmax.f32 %v546, 0.0
        %v629 = vmax.f32 %v551, 0.0
        %v630 = vmax.f32 %v554, 0.0
        %v631 = vmax.f32 %v559, 0.0
        %v632 = vmax.f32 %v562, 0.0
        %v633 = vmax.f32 %v567, 0.0
        %v634 = vmax.f32 %v570, 0.0
        %v635 = vmax.f32 %v575, 0.0
        %v636 = vmax.f32 %v578, 0.0
        %v637 = vmax.f32 %v583, 0.0
        %v638 = vmax.f32 %v586, 0.0
        %v639 = vmax.f32 %v591, 0.0
        %v640 = vmax.f32 %v594, 0.0
        %v641 = vmax.f32 %v599, 0.0
        %v642 = vmax.f32 %v602, 0.0
        %v643 = vmax.f32 %v607, 0.0
        %v644 = vmax.f32 %v610, 0.0
        %v645 = vpack.c.bf16 %v614, %v613
        %v646 = vpack.c.bf16 %v616, %v615
        %v647 = vpack.c.bf16 %v618, %v617
        %v648 = vpack.c.bf16 %v620, %v619
        %v649 = vpack.c.bf16 %v622, %v621
        %v650 = vpack.c.bf16 %v624, %v623
        %v651 = vpack.c.bf16 %v626, %v625
        %v652 = vpack.c.bf16 %v628, %v627
        %v653 = vpack.c.bf16 %v630, %v629
        %v654 = vpack.c.bf16 %v632, %v631
        %v655 = vpack.c.bf16 %v634, %v633
        %v656 = vpack.c.bf16 %v636, %v635
        %v657 = vpack.c.bf16 %v638, %v637
        %v658 = vpack.c.bf16 %v640, %v639
        %v659 = vpack.c.bf16 %v642, %v641
        %v660 = vpack.c.bf16 %v644, %v643
        %661 = vst [vmem:[#allocation2 + $0x26c] sm:$0xcc] 0
        %662 = vst [vmem:[#allocation2 + $0x274] sm:$0xcc] 0
        %663 = vst [vmem:[#allocation2 + $0x27c] sm:$0xc] 0
        %664 = vst [vmem:[#allocation2 + $0x280] sm:$0xff] 0
        %665 = vst [vmem:[#allocation2 + $0x288] sm:$0xff] 0
        %666 = vst [vmem:[#allocation2 + $0x290] sm:$0xf] 0
        %v683 = vunpack.c.l.b16 %v645
        %v684 = vunpack.c.h.b16 %v645
        %v685 = vunpack.c.l.b16 %v646
        %v686 = vunpack.c.h.b16 %v646
        %v687 = vunpack.c.l.b16 %v647
        %v688 = vunpack.c.h.b16 %v647
        %v689 = vunpack.c.l.b16 %v648
        %v690 = vunpack.c.h.b16 %v648
        %v691 = vunpack.c.l.b16 %v649
        %v692 = vunpack.c.h.b16 %v649
        %v693 = vunpack.c.l.b16 %v650
        %v694 = vunpack.c.h.b16 %v650
        %v695 = vunpack.c.l.b16 %v651
        %v696 = vunpack.c.h.b16 %v651
        %v697 = vunpack.c.l.b16 %v652
        %v698 = vunpack.c.h.b16 %v652
        %v699 = vunpack.c.l.b16 %v653
        %v700 = vunpack.c.h.b16 %v653
        %v701 = vunpack.c.l.b16 %v654
        %v702 = vunpack.c.h.b16 %v654
        %v703 = vunpack.c.l.b16 %v655
        %v704 = vunpack.c.h.b16 %v655
        %v705 = vunpack.c.l.b16 %v656
        %v706 = vunpack.c.h.b16 %v656
        %v707 = vunpack.c.l.b16 %v657
        %v708 = vunpack.c.h.b16 %v657
        %v709 = vunpack.c.l.b16 %v658
        %v710 = vunpack.c.h.b16 %v658
        %v711 = vunpack.c.l.b16 %v659
        %v712 = vunpack.c.h.b16 %v659
        %v713 = vunpack.c.l.b16 %v660
        %v714 = vunpack.c.h.b16 %v660
        %v715 = vpack.c.b16 %v683, %v683
        %v716 = vpack.c.b16 %v684, %v684
        %v717 = vpack.c.b16 %v685, %v685
        %v718 = vpack.c.b16 %v686, %v686
        %v719 = vpack.c.b16 %v687, %v687
        %v720 = vpack.c.b16 %v688, %v688
        %v721 = vpack.c.b16 %v689, %v689
        %v722 = vpack.c.b16 %v690, %v690
        %v723 = vpack.c.b16 %v691, %v691
        %v724 = vpack.c.b16 %v692, %v692
        %v725 = vpack.c.b16 %v693, %v693
        %v726 = vpack.c.b16 %v694, %v694
        %v727 = vpack.c.b16 %v695, %v695
        %v728 = vpack.c.b16 %v696, %v696
        %v729 = vpack.c.b16 %v697, %v697
        %v730 = vpack.c.b16 %v698, %v698
        %v731 = vpack.c.b16 %v699, %v699
        %v732 = vpack.c.b16 %v700, %v700
        %v733 = vpack.c.b16 %v701, %v701
        %v734 = vpack.c.b16 %v702, %v702
        %v735 = vpack.c.b16 %v703, %v703
        %v736 = vpack.c.b16 %v704, %v704
        %v737 = vpack.c.b16 %v705, %v705
        %v738 = vpack.c.b16 %v706, %v706
        %v739 = vpack.c.b16 %v707, %v707
        %v740 = vpack.c.b16 %v708, %v708
        %v741 = vpack.c.b16 %v709, %v709
        %v742 = vpack.c.b16 %v710, %v710
        %v743 = vpack.c.b16 %v711, %v711
        %v744 = vpack.c.b16 %v712, %v712
        %v745 = vpack.c.b16 %v713, %v713
        %v746 = vpack.c.b16 %v714, %v714
        %779 = vst [vmem:[#allocation2] sm:$0xf] %v715
        %780 = vst [vmem:[#allocation2 + $0x14] sm:$0xf] %v716
        %781 = vst [vmem:[#allocation2 + $0x28] sm:$0xf] %v717
        %782 = vst [vmem:[#allocation2 + $0x3c] sm:$0xf] %v718
        %783 = vst [vmem:[#allocation2 + $0x50] sm:$0xf] %v719
        %784 = vst [vmem:[#allocation2 + $0x64] sm:$0xf] %v720
        %785 = vst [vmem:[#allocation2 + $0x78] sm:$0xf] %v721
        %786 = vst [vmem:[#allocation2 + $0x8c] sm:$0xf] %v722
        %787 = vst [vmem:[#allocation2 + $0xa0] sm:$0xf] %v723
        %788 = vst [vmem:[#allocation2 + $0xb4] sm:$0xf] %v724
        %789 = vst [vmem:[#allocation2 + $0xc8] sm:$0xf] %v725
        %790 = vst [vmem:[#allocation2 + $0xdc] sm:$0xf] %v726
        %791 = vst [vmem:[#allocation2 + $0xf0] sm:$0xf] %v727
        %792 = vst [vmem:[#allocation2 + $0x104] sm:$0xf] %v728
        %793 = vst [vmem:[#allocation2 + $0x118] sm:$0xf] %v729
        %794 = vst [vmem:[#allocation2 + $0x12c] sm:$0xf] %v730
        %795 = vst [vmem:[#allocation2 + $0x140] sm:$0xf] %v731
        %796 = vst [vmem:[#allocation2 + $0x154] sm:$0xf] %v732
        %797 = vst [vmem:[#allocation2 + $0x168] sm:$0xf] %v733
        %798 = vst [vmem:[#allocation2 + $0x17c] sm:$0xf] %v734
        %799 = vst [vmem:[#allocation2 + $0x190] sm:$0xf] %v735
        %800 = vst [vmem:[#allocation2 + $0x1a4] sm:$0xf] %v736
        %801 = vst [vmem:[#allocation2 + $0x1b8] sm:$0xf] %v737
        %802 = vst [vmem:[#allocation2 + $0x1cc] sm:$0xf] %v738
        %803 = vst [vmem:[#allocation2 + $0x1e0] sm:$0xf] %v739
        %804 = vst [vmem:[#allocation2 + $0x1f4] sm:$0xf] %v740
        %805 = vst [vmem:[#allocation2 + $0x208] sm:$0xf] %v741
        %806 = vst [vmem:[#allocation2 + $0x21c] sm:$0xf] %v742
        %807 = vst [vmem:[#allocation2 + $0x230] sm:$0xf] %v743
        %808 = vst [vmem:[#allocation2 + $0x244] sm:$0xf] %v744
        %809 = vst [vmem:[#allocation2 + $0x258] sm:$0xf] %v745
        %810 = vst [vmem:[#allocation2 + $0x26c] sm:$0x3] %v746
        %vm811 = vsmask.f32 3328
        %vm812 = vsmask.f32 7440
        %vm813 = vmor %vm811, %vm812
        %v815 = vshrl.u32 %v715, 16
        %v817 = vrot.slane %v815, 4
        %v818 = vshll.u32 %v715, 16
        %v820 = vrot.slane %v818, 5
        %v821 = vor.u32 %v817, %v820
        %v822 = vrot.slane %v821, 4
        %v824 = vshll.u32 %v716, 16
        %v826 = vrot.slane %v824, 5
        %v827 = vsel %vm813, %v822, %v826
        %v828 = vshrl.u32 %v716, 16
        %v830 = vrot.slane %v828, 4
        %v831 = vor.u32 %v830, %v826
        %v832 = vrot.slane %v831, 4
        %v834 = vshll.u32 %v717, 16
        %v836 = vrot.slane %v834, 5
        %v837 = vsel %vm813, %v832, %v836
        %v838 = vshrl.u32 %v717, 16
        %v840 = vrot.slane %v838, 4
        %v841 = vor.u32 %v840, %v836
        %v842 = vrot.slane %v841, 4
        %v844 = vshll.u32 %v718, 16
        %v846 = vrot.slane %v844, 5
        %v847 = vsel %vm813, %v842, %v846
        %v848 = vshrl.u32 %v718, 16
        %v850 = vrot.slane %v848, 4
        %v851 = vor.u32 %v850, %v846
        %v852 = vrot.slane %v851, 4
        %v854 = vshll.u32 %v719, 16
        %v856 = vrot.slane %v854, 5
        %v857 = vsel %vm813, %v852, %v856
        %v858 = vshrl.u32 %v719, 16
        %v860 = vrot.slane %v858, 4
        %v861 = vor.u32 %v860, %v856
        %v862 = vrot.slane %v861, 4
        %v864 = vshll.u32 %v720, 16
        %v866 = vrot.slane %v864, 5
        %v867 = vsel %vm813, %v862, %v866
        %v868 = vshrl.u32 %v720, 16
        %v870 = vrot.slane %v868, 4
        %v871 = vor.u32 %v870, %v866
        %v872 = vrot.slane %v871, 4
        %v874 = vshll.u32 %v721, 16
        %v876 = vrot.slane %v874, 5
        %v877 = vsel %vm813, %v872, %v876
        %v878 = vshrl.u32 %v721, 16
        %v880 = vrot.slane %v878, 4
        %v881 = vor.u32 %v880, %v876
        %v882 = vrot.slane %v881, 4
        %v884 = vshll.u32 %v722, 16
        %v886 = vrot.slane %v884, 5
        %v887 = vsel %vm813, %v882, %v886
        %v888 = vshrl.u32 %v722, 16
        %v890 = vrot.slane %v888, 4
        %v891 = vor.u32 %v890, %v886
        %v892 = vrot.slane %v891, 4
        %v894 = vshll.u32 %v723, 16
        %v896 = vrot.slane %v894, 5
        %v897 = vsel %vm813, %v892, %v896
        %v898 = vshrl.u32 %v723, 16
        %v900 = vrot.slane %v898, 4
        %v901 = vor.u32 %v900, %v896
        %v902 = vrot.slane %v901, 4
        %v904 = vshll.u32 %v724, 16
        %v906 = vrot.slane %v904, 5
        %v907 = vsel %vm813, %v902, %v906
        %v908 = vshrl.u32 %v724, 16
        %v910 = vrot.slane %v908, 4
        %v911 = vor.u32 %v910, %v906
        %v912 = vrot.slane %v911, 4
        %v914 = vshll.u32 %v725, 16
        %v916 = vrot.slane %v914, 5
        %v917 = vsel %vm813, %v912, %v916
        %v918 = vshrl.u32 %v725, 16
        %v920 = vrot.slane %v918, 4
        %v921 = vor.u32 %v920, %v916
        %v922 = vrot.slane %v921, 4
        %v924 = vshll.u32 %v726, 16
        %v926 = vrot.slane %v924, 5
        %v927 = vsel %vm813, %v922, %v926
        %v928 = vshrl.u32 %v726, 16
        %v930 = vrot.slane %v928, 4
        %v931 = vor.u32 %v930, %v926
        %v932 = vrot.slane %v931, 4
        %v934 = vshll.u32 %v727, 16
        %v936 = vrot.slane %v934, 5
        %v937 = vsel %vm813, %v932, %v936
        %v938 = vshrl.u32 %v727, 16
        %v940 = vrot.slane %v938, 4
        %v941 = vor.u32 %v940, %v936
        %v942 = vrot.slane %v941, 4
        %v944 = vshll.u32 %v728, 16
        %v946 = vrot.slane %v944, 5
        %v947 = vsel %vm813, %v942, %v946
        %v948 = vshrl.u32 %v728, 16
        %v950 = vrot.slane %v948, 4
        %v951 = vor.u32 %v950, %v946
        %v952 = vrot.slane %v951, 4
        %v954 = vshll.u32 %v729, 16
        %v956 = vrot.slane %v954, 5
        %v957 = vsel %vm813, %v952, %v956
        %v958 = vshrl.u32 %v729, 16
        %v960 = vrot.slane %v958, 4
        %v961 = vor.u32 %v960, %v956
        %v962 = vrot.slane %v961, 4
        %v964 = vshll.u32 %v730, 16
        %v966 = vrot.slane %v964, 5
        %v967 = vsel %vm813, %v962, %v966
        %v968 = vshrl.u32 %v730, 16
        %v970 = vrot.slane %v968, 4
        %v971 = vor.u32 %v970, %v966
        %v972 = vrot.slane %v971, 4
        %v974 = vshll.u32 %v731, 16
        %v976 = vrot.slane %v974, 5
        %v977 = vsel %vm813, %v972, %v976
        %v978 = vshrl.u32 %v731, 16
        %v980 = vrot.slane %v978, 4
        %v981 = vor.u32 %v980, %v976
        %v982 = vrot.slane %v981, 4
        %v984 = vshll.u32 %v732, 16
        %v986 = vrot.slane %v984, 5
        %v987 = vsel %vm813, %v982, %v986
        %v988 = vshrl.u32 %v732, 16
        %v990 = vrot.slane %v988, 4
        %v991 = vor.u32 %v990, %v986
        %v992 = vrot.slane %v991, 4
        %v994 = vshll.u32 %v733, 16
        %v996 = vrot.slane %v994, 5
        %v997 = vsel %vm813, %v992, %v996
        %v998 = vshrl.u32 %v733, 16
        %v1000 = vrot.slane %v998, 4
        %v1001 = vor.u32 %v1000, %v996
        %v1002 = vrot.slane %v1001, 4
        %v1004 = vshll.u32 %v734, 16
        %v1006 = vrot.slane %v1004, 5
        %v1007 = vsel %vm813, %v1002, %v1006
        %v1008 = vshrl.u32 %v734, 16
        %v1010 = vrot.slane %v1008, 4
        %v1011 = vor.u32 %v1010, %v1006
        %v1012 = vrot.slane %v1011, 4
        %v1014 = vshll.u32 %v735, 16
        %v1016 = vrot.slane %v1014, 5
        %v1017 = vsel %vm813, %v1012, %v1016
        %v1018 = vshrl.u32 %v735, 16
        %v1020 = vrot.slane %v1018, 4
        %v1021 = vor.u32 %v1020, %v1016
        %v1022 = vrot.slane %v1021, 4
        %v1024 = vshll.u32 %v736, 16
        %v1026 = vrot.slane %v1024, 5
        %v1027 = vsel %vm813, %v1022, %v1026
        %v1028 = vshrl.u32 %v736, 16
        %v1030 = vrot.slane %v1028, 4
        %v1031 = vor.u32 %v1030, %v1026
        %v1032 = vrot.slane %v1031, 4
        %v1034 = vshll.u32 %v737, 16
        %v1036 = vrot.slane %v1034, 5
        %v1037 = vsel %vm813, %v1032, %v1036
        %v1038 = vshrl.u32 %v737, 16
        %v1040 = vrot.slane %v1038, 4
        %v1041 = vor.u32 %v1040, %v1036
        %v1042 = vrot.slane %v1041, 4
        %v1044 = vshll.u32 %v738, 16
        %v1046 = vrot.slane %v1044, 5
        %v1047 = vsel %vm813, %v1042, %v1046
        %v1048 = vshrl.u32 %v738, 16
        %v1050 = vrot.slane %v1048, 4
        %v1051 = vor.u32 %v1050, %v1046
        %v1052 = vrot.slane %v1051, 4
        %v1054 = vshll.u32 %v739, 16
        %v1056 = vrot.slane %v1054, 5
        %v1057 = vsel %vm813, %v1052, %v1056
        %v1058 = vshrl.u32 %v739, 16
        %v1060 = vrot.slane %v1058, 4
        %v1061 = vor.u32 %v1060, %v1056
        %v1062 = vrot.slane %v1061, 4
        %v1064 = vshll.u32 %v740, 16
        %v1066 = vrot.slane %v1064, 5
        %v1067 = vsel %vm813, %v1062, %v1066
        %v1068 = vshrl.u32 %v740, 16
        %v1070 = vrot.slane %v1068, 4
        %v1071 = vor.u32 %v1070, %v1066
        %v1072 = vrot.slane %v1071, 4
        %v1074 = vshll.u32 %v741, 16
        %v1076 = vrot.slane %v1074, 5
        %v1077 = vsel %vm813, %v1072, %v1076
        %v1078 = vshrl.u32 %v741, 16
        %v1080 = vrot.slane %v1078, 4
        %v1081 = vor.u32 %v1080, %v1076
        %v1082 = vrot.slane %v1081, 4
        %v1084 = vshll.u32 %v742, 16
        %v1086 = vrot.slane %v1084, 5
        %v1087 = vsel %vm813, %v1082, %v1086
        %v1088 = vshrl.u32 %v742, 16
        %v1090 = vrot.slane %v1088, 4
        %v1091 = vor.u32 %v1090, %v1086
        %v1092 = vrot.slane %v1091, 4
        %v1094 = vshll.u32 %v743, 16
        %v1096 = vrot.slane %v1094, 5
        %v1097 = vsel %vm813, %v1092, %v1096
        %v1098 = vshrl.u32 %v743, 16
        %v1100 = vrot.slane %v1098, 4
        %v1101 = vor.u32 %v1100, %v1096
        %v1102 = vrot.slane %v1101, 4
        %v1104 = vshll.u32 %v744, 16
        %v1106 = vrot.slane %v1104, 5
        %v1107 = vsel %vm813, %v1102, %v1106
        %v1108 = vshrl.u32 %v744, 16
        %v1110 = vrot.slane %v1108, 4
        %v1111 = vor.u32 %v1110, %v1106
        %v1112 = vrot.slane %v1111, 4
        %v1114 = vshll.u32 %v745, 16
        %v1116 = vrot.slane %v1114, 5
        %v1117 = vsel %vm813, %v1112, %v1116
        %v1118 = vshrl.u32 %v745, 16
        %v1120 = vrot.slane %v1118, 4
        %v1121 = vor.u32 %v1120, %v1116
        %v1122 = vrot.slane %v1121, 4
        %v1124 = vshll.u32 %v746, 16
        %v1126 = vrot.slane %v1124, 5
        %v1127 = vsel %vm813, %v1122, %v1126
        %v1128 = vshrl.u32 %v746, 16
        %v1130 = vrot.slane %v1128, 4
        %v1131 = vor.u32 %v1130, %v1126
        %v1132 = vrot.slane %v1131, 4
        %1165 = vst [vmem:[#allocation2 + $0x4] sm:$0xf] %v827
        %1166 = vst [vmem:[#allocation2 + $0x18] sm:$0xf] %v837
        %1167 = vst [vmem:[#allocation2 + $0x2c] sm:$0xf] %v847
        %1168 = vst [vmem:[#allocation2 + $0x40] sm:$0xf] %v857
        %1169 = vst [vmem:[#allocation2 + $0x54] sm:$0xf] %v867
        %1170 = vst [vmem:[#allocation2 + $0x68] sm:$0xf] %v877
        %1171 = vst [vmem:[#allocation2 + $0x7c] sm:$0xf] %v887
        %1172 = vst [vmem:[#allocation2 + $0x90] sm:$0xf] %v897
        %1173 = vst [vmem:[#allocation2 + $0xa4] sm:$0xf] %v907
        %1174 = vst [vmem:[#allocation2 + $0xb8] sm:$0xf] %v917
        %1175 = vst [vmem:[#allocation2 + $0xcc] sm:$0xf] %v927
        %1176 = vst [vmem:[#allocation2 + $0xe0] sm:$0xf] %v937
        %1177 = vst [vmem:[#allocation2 + $0xf4] sm:$0xf] %v947
        %1178 = vst [vmem:[#allocation2 + $0x108] sm:$0xf] %v957
        %1179 = vst [vmem:[#allocation2 + $0x11c] sm:$0xf] %v967
        %1180 = vst [vmem:[#allocation2 + $0x130] sm:$0xf] %v977
        %1181 = vst [vmem:[#allocation2 + $0x144] sm:$0xf] %v987
        %1182 = vst [vmem:[#allocation2 + $0x158] sm:$0xf] %v997
        %1183 = vst [vmem:[#allocation2 + $0x16c] sm:$0xf] %v1007
        %1184 = vst [vmem:[#allocation2 + $0x180] sm:$0xf] %v1017
        %1185 = vst [vmem:[#allocation2 + $0x194] sm:$0xf] %v1027
        %1186 = vst [vmem:[#allocation2 + $0x1a8] sm:$0xf] %v1037
        %1187 = vst [vmem:[#allocation2 + $0x1bc] sm:$0xf] %v1047
        %1188 = vst [vmem:[#allocation2 + $0x1d0] sm:$0xf] %v1057
        %1189 = vst [vmem:[#allocation2 + $0x1e4] sm:$0xf] %v1067
        %1190 = vst [vmem:[#allocation2 + $0x1f8] sm:$0xf] %v1077
        %1191 = vst [vmem:[#allocation2 + $0x20c] sm:$0xf] %v1087
        %1192 = vst [vmem:[#allocation2 + $0x220] sm:$0xf] %v1097
        %1193 = vst [vmem:[#allocation2 + $0x234] sm:$0xf] %v1107
        %1194 = vst [vmem:[#allocation2 + $0x248] sm:$0xf] %v1117
        %1195 = vst [vmem:[#allocation2 + $0x25c] sm:$0xf] %v1127
        %1196 = vst [vmem:[#allocation2 + $0x270] sm:$0x3] %v1132
        %vm1197 = vcmask 1042432
        %vm1198 = vcmask 1046532
        %vm1199 = vmor %vm1197, %vm1198
        %v1200 = vrot.slane %v715, 5
        %v1201 = vrot.slane %v1200, 4
        %v1202 = vrot.slane %v716, 5
        %v1203 = vsel %vm1199, %v1201, %v1202
        %v1204 = vrot.slane %v1202, 4
        %v1205 = vrot.slane %v717, 5
        %v1206 = vsel %vm1199, %v1204, %v1205
        %v1207 = vrot.slane %v1205, 4
        %v1208 = vrot.slane %v718, 5
        %v1209 = vsel %vm1199, %v1207, %v1208
        %v1210 = vrot.slane %v1208, 4
        %v1211 = vrot.slane %v719, 5
        %v1212 = vsel %vm1199, %v1210, %v1211
        %v1213 = vrot.slane %v1211, 4
        %v1214 = vrot.slane %v720, 5
        %v1215 = vsel %vm1199, %v1213, %v1214
        %v1216 = vrot.slane %v1214, 4
        %v1217 = vrot.slane %v721, 5
        %v1218 = vsel %vm1199, %v1216, %v1217
        %v1219 = vrot.slane %v1217, 4
        %v1220 = vrot.slane %v722, 5
        %v1221 = vsel %vm1199, %v1219, %v1220
        %v1222 = vrot.slane %v1220, 4
        %v1223 = vrot.slane %v723, 5
        %v1224 = vsel %vm1199, %v1222, %v1223
        %v1225 = vrot.slane %v1223, 4
        %v1226 = vrot.slane %v724, 5
        %v1227 = vsel %vm1199, %v1225, %v1226
        %v1228 = vrot.slane %v1226, 4
        %v1229 = vrot.slane %v725, 5
        %v1230 = vsel %vm1199, %v1228, %v1229
        %v1231 = vrot.slane %v1229, 4
        %v1232 = vrot.slane %v726, 5
        %v1233 = vsel %vm1199, %v1231, %v1232
        %v1234 = vrot.slane %v1232, 4
        %v1235 = vrot.slane %v727, 5
        %v1236 = vsel %vm1199, %v1234, %v1235
        %v1237 = vrot.slane %v1235, 4
        %v1238 = vrot.slane %v728, 5
        %v1239 = vsel %vm1199, %v1237, %v1238
        %v1240 = vrot.slane %v1238, 4
        %v1241 = vrot.slane %v729, 5
        %v1242 = vsel %vm1199, %v1240, %v1241
        %v1243 = vrot.slane %v1241, 4
        %v1244 = vrot.slane %v730, 5
        %v1245 = vsel %vm1199, %v1243, %v1244
        %v1246 = vrot.slane %v1244, 4
        %v1247 = vrot.slane %v731, 5
        %v1248 = vsel %vm1199, %v1246, %v1247
        %v1249 = vrot.slane %v1247, 4
        %v1250 = vrot.slane %v732, 5
        %v1251 = vsel %vm1199, %v1249, %v1250
        %v1252 = vrot.slane %v1250, 4
        %v1253 = vrot.slane %v733, 5
        %v1254 = vsel %vm1199, %v1252, %v1253
        %v1255 = vrot.slane %v1253, 4
        %v1256 = vrot.slane %v734, 5
        %v1257 = vsel %vm1199, %v1255, %v1256
        %v1258 = vrot.slane %v1256, 4
        %v1259 = vrot.slane %v735, 5
        %v1260 = vsel %vm1199, %v1258, %v1259
        %v1261 = vrot.slane %v1259, 4
        %v1262 = vrot.slane %v736, 5
        %v1263 = vsel %vm1199, %v1261, %v1262
        %v1264 = vrot.slane %v1262, 4
        %v1265 = vrot.slane %v737, 5
        %v1266 = vsel %vm1199, %v1264, %v1265
        %v1267 = vrot.slane %v1265, 4
        %v1268 = vrot.slane %v738, 5
        %v1269 = vsel %vm1199, %v1267, %v1268
        %v1270 = vrot.slane %v1268, 4
        %v1271 = vrot.slane %v739, 5
        %v1272 = vsel %vm1199, %v1270, %v1271
        %v1273 = vrot.slane %v1271, 4
        %v1274 = vrot.slane %v740, 5
        %v1275 = vsel %vm1199, %v1273, %v1274
        %v1276 = vrot.slane %v1274, 4
        %v1277 = vrot.slane %v741, 5
        %v1278 = vsel %vm1199, %v1276, %v1277
        %v1279 = vrot.slane %v1277, 4
        %v1280 = vrot.slane %v742, 5
        %v1281 = vsel %vm1199, %v1279, %v1280
        %v1282 = vrot.slane %v1280, 4
        %v1283 = vrot.slane %v743, 5
        %v1284 = vsel %vm1199, %v1282, %v1283
        %v1285 = vrot.slane %v1283, 4
        %v1286 = vrot.slane %v744, 5
        %v1287 = vsel %vm1199, %v1285, %v1286
        %v1288 = vrot.slane %v1286, 4
        %v1289 = vrot.slane %v745, 5
        %v1290 = vsel %vm1199, %v1288, %v1289
        %v1291 = vrot.slane %v1289, 4
        %v1292 = vrot.slane %v746, 5
        %v1293 = vsel %vm1199, %v1291, %v1292
        %v1294 = vrot.slane %v1292, 4
        %1327 = vst [vmem:[#allocation2 + $0x8] sm:$0xf] %v1203
        %1328 = vst [vmem:[#allocation2 + $0x1c] sm:$0xf] %v1206
        %1329 = vst [vmem:[#allocation2 + $0x30] sm:$0xf] %v1209
        %1330 = vst [vmem:[#allocation2 + $0x44] sm:$0xf] %v1212
        %1331 = vst [vmem:[#allocation2 + $0x58] sm:$0xf] %v1215
        %1332 = vst [vmem:[#allocation2 + $0x6c] sm:$0xf] %v1218
        %1333 = vst [vmem:[#allocation2 + $0x80] sm:$0xf] %v1221
        %1334 = vst [vmem:[#allocation2 + $0x94] sm:$0xf] %v1224
        %1335 = vst [vmem:[#allocation2 + $0xa8] sm:$0xf] %v1227
        %1336 = vst [vmem:[#allocation2 + $0xbc] sm:$0xf] %v1230
        %1337 = vst [vmem:[#allocation2 + $0xd0] sm:$0xf] %v1233
        %1338 = vst [vmem:[#allocation2 + $0xe4] sm:$0xf] %v1236
        %1339 = vst [vmem:[#allocation2 + $0xf8] sm:$0xf] %v1239
        %1340 = vst [vmem:[#allocation2 + $0x10c] sm:$0xf] %v1242
        %1341 = vst [vmem:[#allocation2 + $0x120] sm:$0xf] %v1245
        %1342 = vst [vmem:[#allocation2 + $0x134] sm:$0xf] %v1248
        %1343 = vst [vmem:[#allocation2 + $0x148] sm:$0xf] %v1251
        %1344 = vst [vmem:[#allocation2 + $0x15c] sm:$0xf] %v1254
        %1345 = vst [vmem:[#allocation2 + $0x170] sm:$0xf] %v1257
        %1346 = vst [vmem:[#allocation2 + $0x184] sm:$0xf] %v1260
        %1347 = vst [vmem:[#allocation2 + $0x198] sm:$0xf] %v1263
        %1348 = vst [vmem:[#allocation2 + $0x1ac] sm:$0xf] %v1266
        %1349 = vst [vmem:[#allocation2 + $0x1c0] sm:$0xf] %v1269
        %1350 = vst [vmem:[#allocation2 + $0x1d4] sm:$0xf] %v1272
        %1351 = vst [vmem:[#allocation2 + $0x1e8] sm:$0xf] %v1275
        %1352 = vst [vmem:[#allocation2 + $0x1fc] sm:$0xf] %v1278
        %1353 = vst [vmem:[#allocation2 + $0x210] sm:$0xf] %v1281
        %1354 = vst [vmem:[#allocation2 + $0x224] sm:$0xf] %v1284
        %1355 = vst [vmem:[#allocation2 + $0x238] sm:$0xf] %v1287
        %1356 = vst [vmem:[#allocation2 + $0x24c] sm:$0xf] %v1290
        %1357 = vst [vmem:[#allocation2 + $0x260] sm:$0xf] %v1293
        %1358 = vst [vmem:[#allocation2 + $0x274] sm:$0x3] %v1294
        %vm1359 = vsmask.f32 2304
        %vm1360 = vsmask.f32 6416
        %vm1361 = vmor %vm1359, %vm1360
        %v1362 = vrot.slane %v815, 5
        %v1363 = vrot.slane %v818, 6
        %v1364 = vor.u32 %v1362, %v1363
        %v1365 = vrot.slane %v1364, 4
        %v1366 = vrot.slane %v828, 5
        %v1367 = vrot.slane %v824, 6
        %v1368 = vor.u32 %v1366, %v1367
        %v1369 = vsel %vm1361, %v1365, %v1368
        %v1370 = vrot.slane %v1368, 4
        %v1371 = vrot.slane %v838, 5
        %v1372 = vrot.slane %v834, 6
        %v1373 = vor.u32 %v1371, %v1372
        %v1374 = vsel %vm1361, %v1370, %v1373
        %v1375 = vrot.slane %v1373, 4
        %v1376 = vrot.slane %v848, 5
        %v1377 = vrot.slane %v844, 6
        %v1378 = vor.u32 %v1376, %v1377
        %v1379 = vsel %vm1361, %v1375, %v1378
        %v1380 = vrot.slane %v1378, 4
        %v1381 = vrot.slane %v858, 5
        %v1382 = vrot.slane %v854, 6
        %v1383 = vor.u32 %v1381, %v1382
        %v1384 = vsel %vm1361, %v1380, %v1383
        %v1385 = vrot.slane %v1383, 4
        %v1386 = vrot.slane %v868, 5
        %v1387 = vrot.slane %v864, 6
        %v1388 = vor.u32 %v1386, %v1387
        %v1389 = vsel %vm1361, %v1385, %v1388
        %v1390 = vrot.slane %v1388, 4
        %v1391 = vrot.slane %v878, 5
        %v1392 = vrot.slane %v874, 6
        %v1393 = vor.u32 %v1391, %v1392
        %v1394 = vsel %vm1361, %v1390, %v1393
        %v1395 = vrot.slane %v1393, 4
        %v1396 = vrot.slane %v888, 5
        %v1397 = vrot.slane %v884, 6
        %v1398 = vor.u32 %v1396, %v1397
        %v1399 = vsel %vm1361, %v1395, %v1398
        %v1400 = vrot.slane %v1398, 4
        %v1401 = vrot.slane %v898, 5
        %v1402 = vrot.slane %v894, 6
        %v1403 = vor.u32 %v1401, %v1402
        %v1404 = vsel %vm1361, %v1400, %v1403
        %v1405 = vrot.slane %v1403, 4
        %v1406 = vrot.slane %v908, 5
        %v1407 = vrot.slane %v904, 6
        %v1408 = vor.u32 %v1406, %v1407
        %v1409 = vsel %vm1361, %v1405, %v1408
        %v1410 = vrot.slane %v1408, 4
        %v1411 = vrot.slane %v918, 5
        %v1412 = vrot.slane %v914, 6
        %v1413 = vor.u32 %v1411, %v1412
        %v1414 = vsel %vm1361, %v1410, %v1413
        %v1415 = vrot.slane %v1413, 4
        %v1416 = vrot.slane %v928, 5
        %v1417 = vrot.slane %v924, 6
        %v1418 = vor.u32 %v1416, %v1417
        %v1419 = vsel %vm1361, %v1415, %v1418
        %v1420 = vrot.slane %v1418, 4
        %v1421 = vrot.slane %v938, 5
        %v1422 = vrot.slane %v934, 6
        %v1423 = vor.u32 %v1421, %v1422
        %v1424 = vsel %vm1361, %v1420, %v1423
        %v1425 = vrot.slane %v1423, 4
        %v1426 = vrot.slane %v948, 5
        %v1427 = vrot.slane %v944, 6
        %v1428 = vor.u32 %v1426, %v1427
        %v1429 = vsel %vm1361, %v1425, %v1428
        %v1430 = vrot.slane %v1428, 4
        %v1431 = vrot.slane %v958, 5
        %v1432 = vrot.slane %v954, 6
        %v1433 = vor.u32 %v1431, %v1432
        %v1434 = vsel %vm1361, %v1430, %v1433
        %v1435 = vrot.slane %v1433, 4
        %v1436 = vrot.slane %v968, 5
        %v1437 = vrot.slane %v964, 6
        %v1438 = vor.u32 %v1436, %v1437
        %v1439 = vsel %vm1361, %v1435, %v1438
        %v1440 = vrot.slane %v1438, 4
        %v1441 = vrot.slane %v978, 5
        %v1442 = vrot.slane %v974, 6
        %v1443 = vor.u32 %v1441, %v1442
        %v1444 = vsel %vm1361, %v1440, %v1443
        %v1445 = vrot.slane %v1443, 4
        %v1446 = vrot.slane %v988, 5
        %v1447 = vrot.slane %v984, 6
        %v1448 = vor.u32 %v1446, %v1447
        %v1449 = vsel %vm1361, %v1445, %v1448
        %v1450 = vrot.slane %v1448, 4
        %v1451 = vrot.slane %v998, 5
        %v1452 = vrot.slane %v994, 6
        %v1453 = vor.u32 %v1451, %v1452
        %v1454 = vsel %vm1361, %v1450, %v1453
        %v1455 = vrot.slane %v1453, 4
        %v1456 = vrot.slane %v1008, 5
        %v1457 = vrot.slane %v1004, 6
        %v1458 = vor.u32 %v1456, %v1457
        %v1459 = vsel %vm1361, %v1455, %v1458
        %v1460 = vrot.slane %v1458, 4
        %v1461 = vrot.slane %v1018, 5
        %v1462 = vrot.slane %v1014, 6
        %v1463 = vor.u32 %v1461, %v1462
        %v1464 = vsel %vm1361, %v1460, %v1463
        %v1465 = vrot.slane %v1463, 4
        %v1466 = vrot.slane %v1028, 5
        %v1467 = vrot.slane %v1024, 6
        %v1468 = vor.u32 %v1466, %v1467
        %v1469 = vsel %vm1361, %v1465, %v1468
        %v1470 = vrot.slane %v1468, 4
        %v1471 = vrot.slane %v1038, 5
        %v1472 = vrot.slane %v1034, 6
        %v1473 = vor.u32 %v1471, %v1472
        %v1474 = vsel %vm1361, %v1470, %v1473
        %v1475 = vrot.slane %v1473, 4
        %v1476 = vrot.slane %v1048, 5
        %v1477 = vrot.slane %v1044, 6
        %v1478 = vor.u32 %v1476, %v1477
        %v1479 = vsel %vm1361, %v1475, %v1478
        %v1480 = vrot.slane %v1478, 4
        %v1481 = vrot.slane %v1058, 5
        %v1482 = vrot.slane %v1054, 6
        %v1483 = vor.u32 %v1481, %v1482
        %v1484 = vsel %vm1361, %v1480, %v1483
        %v1485 = vrot.slane %v1483, 4
        %v1486 = vrot.slane %v1068, 5
        %v1487 = vrot.slane %v1064, 6
        %v1488 = vor.u32 %v1486, %v1487
        %v1489 = vsel %vm1361, %v1485, %v1488
        %v1490 = vrot.slane %v1488, 4
        %v1491 = vrot.slane %v1078, 5
        %v1492 = vrot.slane %v1074, 6
        %v1493 = vor.u32 %v1491, %v1492
        %v1494 = vsel %vm1361, %v1490, %v1493
        %v1495 = vrot.slane %v1493, 4
        %v1496 = vrot.slane %v1088, 5
        %v1497 = vrot.slane %v1084, 6
        %v1498 = vor.u32 %v1496, %v1497
        %v1499 = vsel %vm1361, %v1495, %v1498
        %v1500 = vrot.slane %v1498, 4
        %v1501 = vrot.slane %v1098, 5
        %v1502 = vrot.slane %v1094, 6
        %v1503 = vor.u32 %v1501, %v1502
        %v1504 = vsel %vm1361, %v1500, %v1503
        %v1505 = vrot.slane %v1503, 4
        %v1506 = vrot.slane %v1108, 5
        %v1507 = vrot.slane %v1104, 6
        %v1508 = vor.u32 %v1506, %v1507
        %v1509 = vsel %vm1361, %v1505, %v1508
        %v1510 = vrot.slane %v1508, 4
        %v1511 = vrot.slane %v1118, 5
        %v1512 = vrot.slane %v1114, 6
        %v1513 = vor.u32 %v1511, %v1512
        %v1514 = vsel %vm1361, %v1510, %v1513
        %v1515 = vrot.slane %v1513, 4
        %v1516 = vrot.slane %v1128, 5
        %v1517 = vrot.slane %v1124, 6
        %v1518 = vor.u32 %v1516, %v1517
        %v1519 = vsel %vm1361, %v1515, %v1518
        %v1520 = vrot.slane %v1518, 4
        %1553 = vst [vmem:[#allocation2 + $0xc] sm:$0xf] %v1369
        %1554 = vst [vmem:[#allocation2 + $0x20] sm:$0xf] %v1374
        %1555 = vst [vmem:[#allocation2 + $0x34] sm:$0xf] %v1379
        %1556 = vst [vmem:[#allocation2 + $0x48] sm:$0xf] %v1384
        %1557 = vst [vmem:[#allocation2 + $0x5c] sm:$0xf] %v1389
        %1558 = vst [vmem:[#allocation2 + $0x70] sm:$0xf] %v1394
        %1559 = vst [vmem:[#allocation2 + $0x84] sm:$0xf] %v1399
        %1560 = vst [vmem:[#allocation2 + $0x98] sm:$0xf] %v1404
        %1561 = vst [vmem:[#allocation2 + $0xac] sm:$0xf] %v1409
        %1562 = vst [vmem:[#allocation2 + $0xc0] sm:$0xf] %v1414
        %1563 = vst [vmem:[#allocation2 + $0xd4] sm:$0xf] %v1419
        %1564 = vst [vmem:[#allocation2 + $0xe8] sm:$0xf] %v1424
        %1565 = vst [vmem:[#allocation2 + $0xfc] sm:$0xf] %v1429
        %1566 = vst [vmem:[#allocation2 + $0x110] sm:$0xf] %v1434
        %1567 = vst [vmem:[#allocation2 + $0x124] sm:$0xf] %v1439
        %1568 = vst [vmem:[#allocation2 + $0x138] sm:$0xf] %v1444
        %1569 = vst [vmem:[#allocation2 + $0x14c] sm:$0xf] %v1449
        %1570 = vst [vmem:[#allocation2 + $0x160] sm:$0xf] %v1454
        %1571 = vst [vmem:[#allocation2 + $0x174] sm:$0xf] %v1459
        %1572 = vst [vmem:[#allocation2 + $0x188] sm:$0xf] %v1464
        %1573 = vst [vmem:[#allocation2 + $0x19c] sm:$0xf] %v1469
        %1574 = vst [vmem:[#allocation2 + $0x1b0] sm:$0xf] %v1474
        %1575 = vst [vmem:[#allocation2 + $0x1c4] sm:$0xf] %v1479
        %1576 = vst [vmem:[#allocation2 + $0x1d8] sm:$0xf] %v1484
        %1577 = vst [vmem:[#allocation2 + $0x1ec] sm:$0xf] %v1489
        %1578 = vst [vmem:[#allocation2 + $0x200] sm:$0xf] %v1494
        %1579 = vst [vmem:[#allocation2 + $0x214] sm:$0xf] %v1499
        %1580 = vst [vmem:[#allocation2 + $0x228] sm:$0xf] %v1504
        %1581 = vst [vmem:[#allocation2 + $0x23c] sm:$0xf] %v1509
        %1582 = vst [vmem:[#allocation2 + $0x250] sm:$0xf] %v1514
        %1583 = vst [vmem:[#allocation2 + $0x264] sm:$0xf] %v1519
        %1584 = vst [vmem:[#allocation2 + $0x278] sm:$0x3] %v1520
        %vm1585 = vcmask 1041408
        %vm1586 = vcmask 1045508
        %vm1587 = vmor %vm1585, %vm1586
        %v1588 = vrot.slane %v715, 6
        %v1589 = vrot.slane %v1588, 4
        %v1590 = vrot.slane %v716, 6
        %v1591 = vsel %vm1587, %v1589, %v1590
        %v1592 = vrot.slane %v1590, 4
        %v1593 = vrot.slane %v717, 6
        %v1594 = vsel %vm1587, %v1592, %v1593
        %v1595 = vrot.slane %v1593, 4
        %v1596 = vrot.slane %v718, 6
        %v1597 = vsel %vm1587, %v1595, %v1596
        %v1598 = vrot.slane %v1596, 4
        %v1599 = vrot.slane %v719, 6
        %v1600 = vsel %vm1587, %v1598, %v1599
        %v1601 = vrot.slane %v1599, 4
        %v1602 = vrot.slane %v720, 6
        %v1603 = vsel %vm1587, %v1601, %v1602
        %v1604 = vrot.slane %v1602, 4
        %v1605 = vrot.slane %v721, 6
        %v1606 = vsel %vm1587, %v1604, %v1605
        %v1607 = vrot.slane %v1605, 4
        %v1608 = vrot.slane %v722, 6
        %v1609 = vsel %vm1587, %v1607, %v1608
        %v1610 = vrot.slane %v1608, 4
        %v1611 = vrot.slane %v723, 6
        %v1612 = vsel %vm1587, %v1610, %v1611
        %v1613 = vrot.slane %v1611, 4
        %v1614 = vrot.slane %v724, 6
        %v1615 = vsel %vm1587, %v1613, %v1614
        %v1616 = vrot.slane %v1614, 4
        %v1617 = vrot.slane %v725, 6
        %v1618 = vsel %vm1587, %v1616, %v1617
        %v1619 = vrot.slane %v1617, 4
        %v1620 = vrot.slane %v726, 6
        %v1621 = vsel %vm1587, %v1619, %v1620
        %v1622 = vrot.slane %v1620, 4
        %v1623 = vrot.slane %v727, 6
        %v1624 = vsel %vm1587, %v1622, %v1623
        %v1625 = vrot.slane %v1623, 4
        %v1626 = vrot.slane %v728, 6
        %v1627 = vsel %vm1587, %v1625, %v1626
        %v1628 = vrot.slane %v1626, 4
        %v1629 = vrot.slane %v729, 6
        %v1630 = vsel %vm1587, %v1628, %v1629
        %v1631 = vrot.slane %v1629, 4
        %v1632 = vrot.slane %v730, 6
        %v1633 = vsel %vm1587, %v1631, %v1632
        %v1634 = vrot.slane %v1632, 4
        %v1635 = vrot.slane %v731, 6
        %v1636 = vsel %vm1587, %v1634, %v1635
        %v1637 = vrot.slane %v1635, 4
        %v1638 = vrot.slane %v732, 6
        %v1639 = vsel %vm1587, %v1637, %v1638
        %v1640 = vrot.slane %v1638, 4
        %v1641 = vrot.slane %v733, 6
        %v1642 = vsel %vm1587, %v1640, %v1641
        %v1643 = vrot.slane %v1641, 4
        %v1644 = vrot.slane %v734, 6
        %v1645 = vsel %vm1587, %v1643, %v1644
        %v1646 = vrot.slane %v1644, 4
        %v1647 = vrot.slane %v735, 6
        %v1648 = vsel %vm1587, %v1646, %v1647
        %v1649 = vrot.slane %v1647, 4
        %v1650 = vrot.slane %v736, 6
        %v1651 = vsel %vm1587, %v1649, %v1650
        %v1652 = vrot.slane %v1650, 4
        %v1653 = vrot.slane %v737, 6
        %v1654 = vsel %vm1587, %v1652, %v1653
        %v1655 = vrot.slane %v1653, 4
        %v1656 = vrot.slane %v738, 6
        %v1657 = vsel %vm1587, %v1655, %v1656
        %v1658 = vrot.slane %v1656, 4
        %v1659 = vrot.slane %v739, 6
        %v1660 = vsel %vm1587, %v1658, %v1659
        %v1661 = vrot.slane %v1659, 4
        %v1662 = vrot.slane %v740, 6
        %v1663 = vsel %vm1587, %v1661, %v1662
        %v1664 = vrot.slane %v1662, 4
        %v1665 = vrot.slane %v741, 6
        %v1666 = vsel %vm1587, %v1664, %v1665
        %v1667 = vrot.slane %v1665, 4
        %v1668 = vrot.slane %v742, 6
        %v1669 = vsel %vm1587, %v1667, %v1668
        %v1670 = vrot.slane %v1668, 4
        %v1671 = vrot.slane %v743, 6
        %v1672 = vsel %vm1587, %v1670, %v1671
        %v1673 = vrot.slane %v1671, 4
        %v1674 = vrot.slane %v744, 6
        %v1675 = vsel %vm1587, %v1673, %v1674
        %v1676 = vrot.slane %v1674, 4
        %v1677 = vrot.slane %v745, 6
        %v1678 = vsel %vm1587, %v1676, %v1677
        %v1679 = vrot.slane %v1677, 4
        %v1680 = vrot.slane %v746, 6
        %v1681 = vsel %vm1587, %v1679, %v1680
        %v1682 = vrot.slane %v1680, 4
        %1715 = vst [vmem:[#allocation2 + $0x10] sm:$0xf] %v1591
        %1716 = vst [vmem:[#allocation2 + $0x24] sm:$0xf] %v1594
        %1717 = vst [vmem:[#allocation2 + $0x38] sm:$0xf] %v1597
        %1718 = vst [vmem:[#allocation2 + $0x4c] sm:$0xf] %v1600
        %1719 = vst [vmem:[#allocation2 + $0x60] sm:$0xf] %v1603
        %1720 = vst [vmem:[#allocation2 + $0x74] sm:$0xf] %v1606
        %1721 = vst [vmem:[#allocation2 + $0x88] sm:$0xf] %v1609
        %1722 = vst [vmem:[#allocation2 + $0x9c] sm:$0xf] %v1612
        %1723 = vst [vmem:[#allocation2 + $0xb0] sm:$0xf] %v1615
        %1724 = vst [vmem:[#allocation2 + $0xc4] sm:$0xf] %v1618
        %1725 = vst [vmem:[#allocation2 + $0xd8] sm:$0xf] %v1621
        %1726 = vst [vmem:[#allocation2 + $0xec] sm:$0xf] %v1624
        %1727 = vst [vmem:[#allocation2 + $0x100] sm:$0xf] %v1627
        %1728 = vst [vmem:[#allocation2 + $0x114] sm:$0xf] %v1630
        %1729 = vst [vmem:[#allocation2 + $0x128] sm:$0xf] %v1633
        %1730 = vst [vmem:[#allocation2 + $0x13c] sm:$0xf] %v1636
        %1731 = vst [vmem:[#allocation2 + $0x150] sm:$0xf] %v1639
        %1732 = vst [vmem:[#allocation2 + $0x164] sm:$0xf] %v1642
        %1733 = vst [vmem:[#allocation2 + $0x178] sm:$0xf] %v1645
        %1734 = vst [vmem:[#allocation2 + $0x18c] sm:$0xf] %v1648
        %1735 = vst [vmem:[#allocation2 + $0x1a0] sm:$0xf] %v1651
        %1736 = vst [vmem:[#allocation2 + $0x1b4] sm:$0xf] %v1654
        %1737 = vst [vmem:[#allocation2 + $0x1c8] sm:$0xf] %v1657
        %1738 = vst [vmem:[#allocation2 + $0x1dc] sm:$0xf] %v1660
        %1739 = vst [vmem:[#allocation2 + $0x1f0] sm:$0xf] %v1663
        %1740 = vst [vmem:[#allocation2 + $0x204] sm:$0xf] %v1666
        %1741 = vst [vmem:[#allocation2 + $0x218] sm:$0xf] %v1669
        %1742 = vst [vmem:[#allocation2 + $0x22c] sm:$0xf] %v1672
        %1743 = vst [vmem:[#allocation2 + $0x240] sm:$0xf] %v1675
        %1744 = vst [vmem:[#allocation2 + $0x254] sm:$0xf] %v1678
        %1745 = vst [vmem:[#allocation2 + $0x268] sm:$0xf] %v1681
        %1746 = vst [vmem:[#allocation2 + $0x27c] sm:$0x3] %v1682
      $region44: #{resnet_feature_extraction_layer.1} parent=39 // pred_fallthru
        _
      %s1747 = smul.u32 %s21, 192
      %s1748 = sshra.s32 %s1747, 3
      %s1749 = sand.u32 %s1747, 7
      %s1750 = smul.u32 %s1748, 5
      %s1751 = smul.addr %s1750, 4
      %s1752 = scalar_lea.vmem [#allocation2], %s1751
      %v1753 = vld [vmem:[%s1752] sm:$0xff]
      %v1754 = vld [vmem:[%s1752 + $0x8] sm:$0xff]
      %v1755 = vld [vmem:[%s1752 + $0x10] sm:$0xf]
      %v1756 = vld [vmem:[%s1752 + $0x14] sm:$0xff]
      %v1757 = vld [vmem:[%s1752 + $0x1c] sm:$0xff]
      %v1758 = vld [vmem:[%s1752 + $0x24] sm:$0xf]
      %v1759 = vld [vmem:[%s1752 + $0x28] sm:$0xff]
      %v1760 = vld [vmem:[%s1752 + $0x30] sm:$0xff]
      %v1761 = vld [vmem:[%s1752 + $0x38] sm:$0xf]
      %v1762 = vld [vmem:[%s1752 + $0x3c] sm:$0xff]
      %v1763 = vld [vmem:[%s1752 + $0x44] sm:$0xff]
      %v1764 = vld [vmem:[%s1752 + $0x4c] sm:$0xf]
      %v1765 = vld [vmem:[%s1752 + $0x50] sm:$0xff]
      %v1766 = vld [vmem:[%s1752 + $0x58] sm:$0xff]
      %v1767 = vld [vmem:[%s1752 + $0x60] sm:$0xf]
      %v1768 = vld [vmem:[%s1752 + $0x64] sm:$0xff]
      %v1769 = vld [vmem:[%s1752 + $0x6c] sm:$0xff]
      %v1770 = vld [vmem:[%s1752 + $0x74] sm:$0xf]
      %v1771 = vld [vmem:[%s1752 + $0x78] sm:$0xff]
      %v1772 = vld [vmem:[%s1752 + $0x80] sm:$0xff]
      %v1773 = vld [vmem:[%s1752 + $0x88] sm:$0xf]
      %v1774 = vld [vmem:[%s1752 + $0x8c] sm:$0xff]
      %v1775 = vld [vmem:[%s1752 + $0x94] sm:$0xff]
      %v1776 = vld [vmem:[%s1752 + $0x9c] sm:$0xf]
      %v1777 = vld [vmem:[%s1752 + $0xa0] sm:$0xff]
      %v1778 = vld [vmem:[%s1752 + $0xa8] sm:$0xff]
      %v1779 = vld [vmem:[%s1752 + $0xb0] sm:$0xf]
      %v1780 = vld [vmem:[%s1752 + $0xb4] sm:$0xff]
      %v1781 = vld [vmem:[%s1752 + $0xbc] sm:$0xff]
      %v1782 = vld [vmem:[%s1752 + $0xc4] sm:$0xf]
      %v1783 = vld [vmem:[%s1752 + $0xc8] sm:$0xff]
      %v1784 = vld [vmem:[%s1752 + $0xd0] sm:$0xff]
      %v1785 = vld [vmem:[%s1752 + $0xd8] sm:$0xf]
      %v1786 = vld [vmem:[%s1752 + $0xdc] sm:$0xff]
      %v1787 = vld [vmem:[%s1752 + $0xe4] sm:$0xff]
      %v1788 = vld [vmem:[%s1752 + $0xec] sm:$0xf]
      %v1789 = vld [vmem:[%s1752 + $0xf0] sm:$0xff]
      %v1790 = vld [vmem:[%s1752 + $0xf8] sm:$0xff]
      %v1791 = vld [vmem:[%s1752 + $0x100] sm:$0xf]
      %v1792 = vld [vmem:[%s1752 + $0x104] sm:$0xff]
      %v1793 = vld [vmem:[%s1752 + $0x10c] sm:$0xff]
      %v1794 = vld [vmem:[%s1752 + $0x114] sm:$0xf]
      %v1795 = vld [vmem:[%s1752 + $0x118] sm:$0xff]
      %v1796 = vld [vmem:[%s1752 + $0x120] sm:$0xff]
      %v1797 = vld [vmem:[%s1752 + $0x128] sm:$0xf]
      %v1798 = vld [vmem:[%s1752 + $0x12c] sm:$0xff]
      %v1799 = vld [vmem:[%s1752 + $0x134] sm:$0xff]
      %v1800 = vld [vmem:[%s1752 + $0x13c] sm:$0xf]
      %v1801 = vld [vmem:[%s1752 + $0x140] sm:$0xff]
      %v1802 = vld [vmem:[%s1752 + $0x148] sm:$0xff]
      %v1803 = vld [vmem:[%s1752 + $0x150] sm:$0xf]
      %v1804 = vld [vmem:[%s1752 + $0x154] sm:$0xff]
      %v1805 = vld [vmem:[%s1752 + $0x15c] sm:$0xff]
      %v1806 = vld [vmem:[%s1752 + $0x164] sm:$0xf]
      %v1807 = vld [vmem:[%s1752 + $0x168] sm:$0xff]
      %v1808 = vld [vmem:[%s1752 + $0x170] sm:$0xff]
      %v1809 = vld [vmem:[%s1752 + $0x178] sm:$0xf]
      %v1810 = vld [vmem:[%s1752 + $0x17c] sm:$0xff]
      %v1811 = vld [vmem:[%s1752 + $0x184] sm:$0xff]
      %v1812 = vld [vmem:[%s1752 + $0x18c] sm:$0xf]
      %v1813 = vld [vmem:[%s1752 + $0x190] sm:$0xff]
      %v1814 = vld [vmem:[%s1752 + $0x198] sm:$0xff]
      %v1815 = vld [vmem:[%s1752 + $0x1a0] sm:$0xf]
      %v1816 = vld [vmem:[%s1752 + $0x1a4] sm:$0xff]
      %v1817 = vld [vmem:[%s1752 + $0x1ac] sm:$0xff]
      %v1818 = vld [vmem:[%s1752 + $0x1b4] sm:$0xf]
      %v1819 = vld [vmem:[%s1752 + $0x1b8] sm:$0xff]
      %v1820 = vld [vmem:[%s1752 + $0x1c0] sm:$0xff]
      %v1821 = vld [vmem:[%s1752 + $0x1c8] sm:$0xf]
      %v1822 = vld [vmem:[%s1752 + $0x1cc] sm:$0xff]
      %v1823 = vld [vmem:[%s1752 + $0x1d4] sm:$0xff]
      %v1824 = vld [vmem:[%s1752 + $0x1dc] sm:$0xf]
      %v1825 = vld [vmem:[%s3] sm:$0xf]
      %v1826 = vld [vmem:[%s3 + $0x4] sm:$0xf]
      %v1827 = vld [vmem:[%s3 + $0x8] sm:$0xf]
      %v1828 = vld [vmem:[%s3 + $0xc] sm:$0xf]
      %v1829 = vld [vmem:[%s3 + $0x10] sm:$0xf]
      %v1830 = vld [vmem:[%s3 + $0x14] sm:$0xf]
      %v1831 = vld [vmem:[%s3 + $0x18] sm:$0xf]
      %v1832 = vld [vmem:[%s3 + $0x1c] sm:$0xf]
      %v1833 = vld [vmem:[%s3 + $0x20] sm:$0xf]
      %v1834 = vld [vmem:[%s3 + $0x24] sm:$0xf]
      %v1835 = vld [vmem:[%s3 + $0x28] sm:$0xf]
      %v1836 = vld [vmem:[%s3 + $0x2c] sm:$0xf]
      %v1837 = vld [vmem:[%s3 + $0x30] sm:$0xf]
      %v1838 = vld [vmem:[%s3 + $0x34] sm:$0xf]
      %v1839 = vld [vmem:[%s3 + $0x38] sm:$0xf]
      %v1840 = vld [vmem:[%s3 + $0x3c] sm:$0xf]
      %v1841 = vld [vmem:[%s3 + $0x40] sm:$0xf]
      %v1842 = vld [vmem:[%s3 + $0x44] sm:$0xf]
      %v1843 = vld [vmem:[%s3 + $0x48] sm:$0xf]
      %v1844 = vld [vmem:[%s3 + $0x4c] sm:$0xf]
      %v1845 = vld [vmem:[%s3 + $0x50] sm:$0xf]
      %v1846 = vld [vmem:[%s3 + $0x54] sm:$0xf]
      %v1847 = vld [vmem:[%s3 + $0x58] sm:$0xf]
      %v1848 = vld [vmem:[%s3 + $0x5c] sm:$0xf]
      %v1849 = vld [vmem:[%s3 + $0x60] sm:$0xf]
      %v1850 = vld [vmem:[%s3 + $0x64] sm:$0xf]
      %v1851 = vld [vmem:[%s3 + $0x68] sm:$0xf]
      %v1852 = vld [vmem:[%s3 + $0x6c] sm:$0xf]
      %v1853 = vld [vmem:[%s3 + $0x70] sm:$0xf]
      %v1854 = vld [vmem:[%s3 + $0x74] sm:$0xf]
      %v1855 = vld [vmem:[%s3 + $0x78] sm:$0xf]
      %v1856 = vld [vmem:[%s3 + $0x7c] sm:$0xf]
      %v1857 = vld [vmem:[%s3 + $0x80] sm:$0xf]
      %v1858 = vld [vmem:[%s3 + $0x84] sm:$0xf]
      %v1859 = vld [vmem:[%s3 + $0x88] sm:$0xf]
      %v1860 = vld [vmem:[%s3 + $0x8c] sm:$0xf]
      %v1861 = vld [vmem:[%s3 + $0x90] sm:$0xf]
      %v1862 = vld [vmem:[%s3 + $0x94] sm:$0xf]
      %v1863 = vld [vmem:[%s3 + $0x98] sm:$0xf]
      %v1864 = vld [vmem:[%s3 + $0x9c] sm:$0xf]
      %v1865 = vld [vmem:[%s3 + $0xa0] sm:$0xf]
      %v1866 = vld [vmem:[%s3 + $0xa4] sm:$0xf]
      %v1867 = vld [vmem:[%s3 + $0xa8] sm:$0xf]
      %v1868 = vld [vmem:[%s3 + $0xac] sm:$0xf]
      %v1869 = vld [vmem:[%s3 + $0xb0] sm:$0xf]
      %v1870 = vld [vmem:[%s3 + $0xb4] sm:$0xf]
      %v1871 = vld [vmem:[%s3 + $0xb8] sm:$0xf]
      %v1872 = vld [vmem:[%s3 + $0xbc] sm:$0xf]
      %v1873 = vld [vmem:[%s3 + $0xc0] sm:$0xf]
      %v1874 = vld [vmem:[%s3 + $0xc4] sm:$0xf]
      %v1875 = vld [vmem:[%s3 + $0xc8] sm:$0xf]
      %v1876 = vld [vmem:[%s3 + $0xcc] sm:$0xf]
      %v1877 = vld [vmem:[%s3 + $0xd0] sm:$0xf]
      %v1878 = vld [vmem:[%s3 + $0xd4] sm:$0xf]
      %v1879 = vld [vmem:[%s3 + $0xd8] sm:$0xf]
      %v1880 = vld [vmem:[%s3 + $0xdc] sm:$0xf]
      %v1881 = vld [vmem:[%s3 + $0xe0] sm:$0xf]
      %v1882 = vld [vmem:[%s3 + $0xe4] sm:$0xf]
      %v1883 = vld [vmem:[%s3 + $0xe8] sm:$0xf]
      %v1884 = vld [vmem:[%s3 + $0xec] sm:$0xf]
      %v1885 = vld [vmem:[%s3 + $0xf0] sm:$0xf]
      %v1886 = vld [vmem:[%s3 + $0xf4] sm:$0xf]
      %v1887 = vld [vmem:[%s3 + $0xf8] sm:$0xf]
      %v1888 = vld [vmem:[%s3 + $0xfc] sm:$0xf]
      %v1889 = vld [vmem:[%s3 + $0x100] sm:$0xf]
      %v1890 = vld [vmem:[%s3 + $0x104] sm:$0xf]
      %v1891 = vld [vmem:[%s3 + $0x108] sm:$0xf]
      %v1892 = vld [vmem:[%s3 + $0x10c] sm:$0xf]
      %v1893 = vld [vmem:[%s3 + $0x110] sm:$0xf]
      %v1894 = vld [vmem:[%s3 + $0x114] sm:$0xf]
      %v1895 = vld [vmem:[%s3 + $0x118] sm:$0xf]
      %v1896 = vld [vmem:[%s3 + $0x11c] sm:$0xf]
      %v1897 = vld [vmem:[%s3 + $0x120] sm:$0xf]
      %v1898 = vld [vmem:[%s3 + $0x124] sm:$0xf]
      %v1899 = vld [vmem:[%s3 + $0x128] sm:$0xf]
      %v1900 = vld [vmem:[%s3 + $0x12c] sm:$0xf]
      %v1901 = vld [vmem:[%s3 + $0x130] sm:$0xf]
      %v1902 = vld [vmem:[%s3 + $0x134] sm:$0xf]
      %v1903 = vld [vmem:[%s3 + $0x138] sm:$0xf]
      %v1904 = vld [vmem:[%s3 + $0x13c] sm:$0xf]
      %s1905 = sadd.s32 %s1747, 16
      %s1906 = sshra.s32 %s1905, 3
      %s1907 = sand.u32 %s1905, 7
      %s1908 = smul.u32 %s1906, 5
      %s1909 = smul.addr %s1908, 4
      %s1910 = scalar_lea.vmem [#allocation2], %s1909
      %v1911 = vld [vmem:[%s1910] sm:$0xff]
      %v1912 = vld [vmem:[%s1910 + $0x8] sm:$0xff]
      %v1913 = vld [vmem:[%s1910 + $0x10] sm:$0xf]
      %v1914 = vld [vmem:[%s1910 + $0x14] sm:$0xff]
      %v1915 = vld [vmem:[%s1910 + $0x1c] sm:$0xff]
      %v1916 = vld [vmem:[%s1910 + $0x24] sm:$0xf]
      %v1917 = vld [vmem:[%s1910 + $0x28] sm:$0xff]
      %v1918 = vld [vmem:[%s1910 + $0x30] sm:$0xff]
      %v1919 = vld [vmem:[%s1910 + $0x38] sm:$0xf]
      %v1920 = vld [vmem:[%s1910 + $0x3c] sm:$0xff]
      %v1921 = vld [vmem:[%s1910 + $0x44] sm:$0xff]
      %v1922 = vld [vmem:[%s1910 + $0x4c] sm:$0xf]
      %v1923 = vld [vmem:[%s1910 + $0x50] sm:$0xff]
      %v1924 = vld [vmem:[%s1910 + $0x58] sm:$0xff]
      %v1925 = vld [vmem:[%s1910 + $0x60] sm:$0xf]
      %v1926 = vld [vmem:[%s1910 + $0x64] sm:$0xff]
      %v1927 = vld [vmem:[%s1910 + $0x6c] sm:$0xff]
      %v1928 = vld [vmem:[%s1910 + $0x74] sm:$0xf]
      %v1929 = vld [vmem:[%s1910 + $0x78] sm:$0xff]
      %v1930 = vld [vmem:[%s1910 + $0x80] sm:$0xff]
      %v1931 = vld [vmem:[%s1910 + $0x88] sm:$0xf]
      %v1932 = vld [vmem:[%s1910 + $0x8c] sm:$0xff]
      %v1933 = vld [vmem:[%s1910 + $0x94] sm:$0xff]
      %v1934 = vld [vmem:[%s1910 + $0x9c] sm:$0xf]
      %v1935 = vld [vmem:[%s1910 + $0xa0] sm:$0xff]
      %v1936 = vld [vmem:[%s1910 + $0xa8] sm:$0xff]
      %v1937 = vld [vmem:[%s1910 + $0xb0] sm:$0xf]
      %v1938 = vld [vmem:[%s1910 + $0xb4] sm:$0xff]
      %v1939 = vld [vmem:[%s1910 + $0xbc] sm:$0xff]
      %v1940 = vld [vmem:[%s1910 + $0xc4] sm:$0xf]
      %v1941 = vld [vmem:[%s1910 + $0xc8] sm:$0xff]
      %v1942 = vld [vmem:[%s1910 + $0xd0] sm:$0xff]
      %v1943 = vld [vmem:[%s1910 + $0xd8] sm:$0xf]
      %v1944 = vld [vmem:[%s1910 + $0xdc] sm:$0xff]
      %v1945 = vld [vmem:[%s1910 + $0xe4] sm:$0xff]
      %v1946 = vld [vmem:[%s1910 + $0xec] sm:$0xf]
      %v1947 = vld [vmem:[%s1910 + $0xf0] sm:$0xff]
      %v1948 = vld [vmem:[%s1910 + $0xf8] sm:$0xff]
      %v1949 = vld [vmem:[%s1910 + $0x100] sm:$0xf]
      %v1950 = vld [vmem:[%s1910 + $0x104] sm:$0xff]
      %v1951 = vld [vmem:[%s1910 + $0x10c] sm:$0xff]
      %v1952 = vld [vmem:[%s1910 + $0x114] sm:$0xf]
      %v1953 = vld [vmem:[%s1910 + $0x118] sm:$0xff]
      %v1954 = vld [vmem:[%s1910 + $0x120] sm:$0xff]
      %v1955 = vld [vmem:[%s1910 + $0x128] sm:$0xf]
      %v1956 = vld [vmem:[%s1910 + $0x12c] sm:$0xff]
      %v1957 = vld [vmem:[%s1910 + $0x134] sm:$0xff]
      %v1958 = vld [vmem:[%s1910 + $0x13c] sm:$0xf]
      %v1959 = vld [vmem:[%s1910 + $0x140] sm:$0xff]
      %v1960 = vld [vmem:[%s1910 + $0x148] sm:$0xff]
      %v1961 = vld [vmem:[%s1910 + $0x150] sm:$0xf]
      %v1962 = vld [vmem:[%s1910 + $0x154] sm:$0xff]
      %v1963 = vld [vmem:[%s1910 + $0x15c] sm:$0xff]
      %v1964 = vld [vmem:[%s1910 + $0x164] sm:$0xf]
      %v1965 = vld [vmem:[%s1910 + $0x168] sm:$0xff]
      %v1966 = vld [vmem:[%s1910 + $0x170] sm:$0xff]
      %v1967 = vld [vmem:[%s1910 + $0x178] sm:$0xf]
      %v1968 = vld [vmem:[%s1910 + $0x17c] sm:$0xff]
      %v1969 = vld [vmem:[%s1910 + $0x184] sm:$0xff]
      %v1970 = vld [vmem:[%s1910 + $0x18c] sm:$0xf]
      %v1971 = vld [vmem:[%s1910 + $0x190] sm:$0xff]
      %v1972 = vld [vmem:[%s1910 + $0x198] sm:$0xff]
      %v1973 = vld [vmem:[%s1910 + $0x1a0] sm:$0xf]
      %v1974 = vld [vmem:[%s1910 + $0x1a4] sm:$0xff]
      %v1975 = vld [vmem:[%s1910 + $0x1ac] sm:$0xff]
      %v1976 = vld [vmem:[%s1910 + $0x1b4] sm:$0xf]
      %v1977 = vld [vmem:[%s1910 + $0x1b8] sm:$0xff]
      %v1978 = vld [vmem:[%s1910 + $0x1c0] sm:$0xff]
      %v1979 = vld [vmem:[%s1910 + $0x1c8] sm:$0xf]
      %v1980 = vld [vmem:[%s1910 + $0x1cc] sm:$0xff]
      %v1981 = vld [vmem:[%s1910 + $0x1d4] sm:$0xff]
      %v1982 = vld [vmem:[%s1910 + $0x1dc] sm:$0xf]
      %s1983 = scalar_lea.vmem %s3, 320
      %v1984 = vld [vmem:[%s1983] sm:$0xf]
      %v1985 = vld [vmem:[%s1983 + $0x4] sm:$0xf]
      %v1986 = vld [vmem:[%s1983 + $0x8] sm:$0xf]
      %v1987 = vld [vmem:[%s1983 + $0xc] sm:$0xf]
      %v1988 = vld [vmem:[%s1983 + $0x10] sm:$0xf]
      %v1989 = vld [vmem:[%s1983 + $0x14] sm:$0xf]
      %v1990 = vld [vmem:[%s1983 + $0x18] sm:$0xf]
      %v1991 = vld [vmem:[%s1983 + $0x1c] sm:$0xf]
      %v1992 = vld [vmem:[%s1983 + $0x20] sm:$0xf]
      %v1993 = vld [vmem:[%s1983 + $0x24] sm:$0xf]
      %v1994 = vld [vmem:[%s1983 + $0x28] sm:$0xf]
      %v1995 = vld [vmem:[%s1983 + $0x2c] sm:$0xf]
      %v1996 = vld [vmem:[%s1983 + $0x30] sm:$0xf]
      %v1997 = vld [vmem:[%s1983 + $0x34] sm:$0xf]
      %v1998 = vld [vmem:[%s1983 + $0x38] sm:$0xf]
      %v1999 = vld [vmem:[%s1983 + $0x3c] sm:$0xf]
      %v2000 = vld [vmem:[%s1983 + $0x40] sm:$0xf]
      %v2001 = vld [vmem:[%s1983 + $0x44] sm:$0xf]
      %v2002 = vld [vmem:[%s1983 + $0x48] sm:$0xf]
      %v2003 = vld [vmem:[%s1983 + $0x4c] sm:$0xf]
      %v2004 = vld [vmem:[%s1983 + $0x50] sm:$0xf]
      %v2005 = vld [vmem:[%s1983 + $0x54] sm:$0xf]
      %v2006 = vld [vmem:[%s1983 + $0x58] sm:$0xf]
      %v2007 = vld [vmem:[%s1983 + $0x5c] sm:$0xf]
      %v2008 = vld [vmem:[%s1983 + $0x60] sm:$0xf]
      %v2009 = vld [vmem:[%s1983 + $0x64] sm:$0xf]
      %v2010 = vld [vmem:[%s1983 + $0x68] sm:$0xf]
      %v2011 = vld [vmem:[%s1983 + $0x6c] sm:$0xf]
      %v2012 = vld [vmem:[%s1983 + $0x70] sm:$0xf]
      %v2013 = vld [vmem:[%s1983 + $0x74] sm:$0xf]
      %v2014 = vld [vmem:[%s1983 + $0x78] sm:$0xf]
      %v2015 = vld [vmem:[%s1983 + $0x7c] sm:$0xf]
      %v2016 = vld [vmem:[%s1983 + $0x80] sm:$0xf]
      %v2017 = vld [vmem:[%s1983 + $0x84] sm:$0xf]
      %v2018 = vld [vmem:[%s1983 + $0x88] sm:$0xf]
      %v2019 = vld [vmem:[%s1983 + $0x8c] sm:$0xf]
      %v2020 = vld [vmem:[%s1983 + $0x90] sm:$0xf]
      %v2021 = vld [vmem:[%s1983 + $0x94] sm:$0xf]
      %v2022 = vld [vmem:[%s1983 + $0x98] sm:$0xf]
      %v2023 = vld [vmem:[%s1983 + $0x9c] sm:$0xf]
      %v2024 = vld [vmem:[%s1983 + $0xa0] sm:$0xf]
      %v2025 = vld [vmem:[%s1983 + $0xa4] sm:$0xf]
      %v2026 = vld [vmem:[%s1983 + $0xa8] sm:$0xf]
      %v2027 = vld [vmem:[%s1983 + $0xac] sm:$0xf]
      %v2028 = vld [vmem:[%s1983 + $0xb0] sm:$0xf]
      %v2029 = vld [vmem:[%s1983 + $0xb4] sm:$0xf]
      %v2030 = vld [vmem:[%s1983 + $0xb8] sm:$0xf]
      %v2031 = vld [vmem:[%s1983 + $0xbc] sm:$0xf]
      %v2032 = vld [vmem:[%s1983 + $0xc0] sm:$0xf]
      %v2033 = vld [vmem:[%s1983 + $0xc4] sm:$0xf]
      %v2034 = vld [vmem:[%s1983 + $0xc8] sm:$0xf]
      %v2035 = vld [vmem:[%s1983 + $0xcc] sm:$0xf]
      %v2036 = vld [vmem:[%s1983 + $0xd0] sm:$0xf]
      %v2037 = vld [vmem:[%s1983 + $0xd4] sm:$0xf]
      %v2038 = vld [vmem:[%s1983 + $0xd8] sm:$0xf]
      %v2039 = vld [vmem:[%s1983 + $0xdc] sm:$0xf]
      %v2040 = vld [vmem:[%s1983 + $0xe0] sm:$0xf]
      %v2041 = vld [vmem:[%s1983 + $0xe4] sm:$0xf]
      %v2042 = vld [vmem:[%s1983 + $0xe8] sm:$0xf]
      %v2043 = vld [vmem:[%s1983 + $0xec] sm:$0xf]
      %v2044 = vld [vmem:[%s1983 + $0xf0] sm:$0xf]
      %v2045 = vld [vmem:[%s1983 + $0xf4] sm:$0xf]
      %v2046 = vld [vmem:[%s1983 + $0xf8] sm:$0xf]
      %v2047 = vld [vmem:[%s1983 + $0xfc] sm:$0xf]
      %v2048 = vld [vmem:[%s1983 + $0x100] sm:$0xf]
      %v2049 = vld [vmem:[%s1983 + $0x104] sm:$0xf]
      %v2050 = vld [vmem:[%s1983 + $0x108] sm:$0xf]
      %v2051 = vld [vmem:[%s1983 + $0x10c] sm:$0xf]
      %v2052 = vld [vmem:[%s1983 + $0x110] sm:$0xf]
      %v2053 = vld [vmem:[%s1983 + $0x114] sm:$0xf]
      %v2054 = vld [vmem:[%s1983 + $0x118] sm:$0xf]
      %v2055 = vld [vmem:[%s1983 + $0x11c] sm:$0xf]
      %v2056 = vld [vmem:[%s1983 + $0x120] sm:$0xf]
      %v2057 = vld [vmem:[%s1983 + $0x124] sm:$0xf]
      %v2058 = vld [vmem:[%s1983 + $0x128] sm:$0xf]
      %v2059 = vld [vmem:[%s1983 + $0x12c] sm:$0xf]
      %v2060 = vld [vmem:[%s1983 + $0x130] sm:$0xf]
      %v2061 = vld [vmem:[%s1983 + $0x134] sm:$0xf]
      %v2062 = vld [vmem:[%s1983 + $0x138] sm:$0xf]
      %v2063 = vld [vmem:[%s1983 + $0x13c] sm:$0xf]
      %v2136 = vunpack.c.l.b16 %v1911
      %v2137 = vunpack.c.h.b16 %v1911
      %v2138 = vunpack.c.l.b16 %v1912
      %v2139 = vunpack.c.h.b16 %v1912
      %v2140 = vunpack.c.l.b16 %v1913
      %v2141 = vunpack.c.l.b16 %v1914
      %v2142 = vunpack.c.h.b16 %v1914
      %v2143 = vunpack.c.l.b16 %v1915
      %v2144 = vunpack.c.h.b16 %v1915
      %v2145 = vunpack.c.l.b16 %v1916
      %v2146 = vunpack.c.l.b16 %v1917
      %v2147 = vunpack.c.h.b16 %v1917
      %v2148 = vunpack.c.l.b16 %v1918
      %v2149 = vunpack.c.h.b16 %v1918
      %v2150 = vunpack.c.l.b16 %v1919
      %v2151 = vunpack.c.l.b16 %v1920
      %v2152 = vunpack.c.h.b16 %v1920
      %v2153 = vunpack.c.l.b16 %v1921
      %v2154 = vunpack.c.h.b16 %v1921
      %v2155 = vunpack.c.l.b16 %v1922
      %v2156 = vunpack.c.l.b16 %v1923
      %v2157 = vunpack.c.h.b16 %v1923
      %v2158 = vunpack.c.l.b16 %v1924
      %v2159 = vunpack.c.h.b16 %v1924
      %v2160 = vunpack.c.l.b16 %v1925
      %v2161 = vunpack.c.l.b16 %v1926
      %v2162 = vunpack.c.h.b16 %v1926
      %v2163 = vunpack.c.l.b16 %v1927
      %v2164 = vunpack.c.h.b16 %v1927
      %v2165 = vunpack.c.l.b16 %v1928
      %v2166 = vunpack.c.l.b16 %v1929
      %v2167 = vunpack.c.h.b16 %v1929
      %v2168 = vunpack.c.l.b16 %v1930
      %v2169 = vunpack.c.h.b16 %v1930
      %v2170 = vunpack.c.l.b16 %v1931
      %v2171 = vunpack.c.l.b16 %v1932
      %v2172 = vunpack.c.h.b16 %v1932
      %v2173 = vunpack.c.l.b16 %v1933
      %v2174 = vunpack.c.h.b16 %v1933
      %v2175 = vunpack.c.l.b16 %v1934
      %v2176 = vunpack.c.l.b16 %v1935
      %v2177 = vunpack.c.h.b16 %v1935
      %v2178 = vunpack.c.l.b16 %v1936
      %v2179 = vunpack.c.h.b16 %v1936
      %v2180 = vunpack.c.l.b16 %v1937
      %v2181 = vunpack.c.l.b16 %v1938
      %v2182 = vunpack.c.h.b16 %v1938
      %v2183 = vunpack.c.l.b16 %v1939
      %v2184 = vunpack.c.h.b16 %v1939
      %v2185 = vunpack.c.l.b16 %v1940
      %v2186 = vunpack.c.l.b16 %v1941
      %v2187 = vunpack.c.h.b16 %v1941
      %v2188 = vunpack.c.l.b16 %v1942
      %v2189 = vunpack.c.h.b16 %v1942
      %v2190 = vunpack.c.l.b16 %v1943
      %v2191 = vunpack.c.l.b16 %v1944
      %v2192 = vunpack.c.h.b16 %v1944
      %v2193 = vunpack.c.l.b16 %v1945
      %v2194 = vunpack.c.h.b16 %v1945
      %v2195 = vunpack.c.l.b16 %v1946
      %v2196 = vunpack.c.l.b16 %v1947
      %v2197 = vunpack.c.h.b16 %v1947
      %v2198 = vunpack.c.l.b16 %v1948
      %v2199 = vunpack.c.h.b16 %v1948
      %v2200 = vunpack.c.l.b16 %v1949
      %v2201 = vunpack.c.l.b16 %v1950
      %v2202 = vunpack.c.h.b16 %v1950
      %v2203 = vunpack.c.l.b16 %v1951
      %v2204 = vunpack.c.h.b16 %v1951
      %v2205 = vunpack.c.l.b16 %v1952
      %v2206 = vunpack.c.l.b16 %v1953
      %v2207 = vunpack.c.h.b16 %v1953
      %v2208 = vunpack.c.l.b16 %v1954
      %v2209 = vunpack.c.h.b16 %v1954
      %v2210 = vunpack.c.l.b16 %v1955
      %v2211 = vunpack.c.l.b16 %v1956
      %v2212 = vunpack.c.h.b16 %v1956
      %v2213 = vunpack.c.l.b16 %v1957
      %v2214 = vunpack.c.h.b16 %v1957
      %v2215 = vunpack.c.l.b16 %v1958
      %v2216 = vunpack.c.l.b16 %v1959
      %v2217 = vunpack.c.h.b16 %v1959
      %v2218 = vunpack.c.l.b16 %v1960
      %v2219 = vunpack.c.h.b16 %v1960
      %v2220 = vunpack.c.l.b16 %v1961
      %v2221 = vunpack.c.l.b16 %v1962
      %v2222 = vunpack.c.h.b16 %v1962
      %v2223 = vunpack.c.l.b16 %v1963
      %v2224 = vunpack.c.h.b16 %v1963
      %v2225 = vunpack.c.l.b16 %v1964
      %v2226 = vunpack.c.l.b16 %v1965
      %v2227 = vunpack.c.h.b16 %v1965
      %v2228 = vunpack.c.l.b16 %v1966
      %v2229 = vunpack.c.h.b16 %v1966
      %v2230 = vunpack.c.l.b16 %v1967
      %v2231 = vunpack.c.l.b16 %v1968
      %v2232 = vunpack.c.h.b16 %v1968
      %v2233 = vunpack.c.l.b16 %v1969
      %v2234 = vunpack.c.h.b16 %v1969
      %v2235 = vunpack.c.l.b16 %v1970
      %v2236 = vunpack.c.l.b16 %v1971
      %v2237 = vunpack.c.h.b16 %v1971
      %v2238 = vunpack.c.l.b16 %v1972
      %v2239 = vunpack.c.h.b16 %v1972
      %v2240 = vunpack.c.l.b16 %v1973
      %v2241 = vunpack.c.l.b16 %v1974
      %v2242 = vunpack.c.h.b16 %v1974
      %v2243 = vunpack.c.l.b16 %v1975
      %v2244 = vunpack.c.h.b16 %v1975
      %v2245 = vunpack.c.l.b16 %v1976
      %v2246 = vunpack.c.l.b16 %v1977
      %v2247 = vunpack.c.h.b16 %v1977
      %v2248 = vunpack.c.l.b16 %v1978
      %v2249 = vunpack.c.h.b16 %v1978
      %v2250 = vunpack.c.l.b16 %v1979
      %v2251 = vunpack.c.l.b16 %v1980
      %v2252 = vunpack.c.h.b16 %v1980
      %v2253 = vunpack.c.l.b16 %v1981
      %v2254 = vunpack.c.h.b16 %v1981
      %v2255 = vunpack.c.l.b16 %v1982
      %v2256 = vpack.c.b16 %v2141, %v2136
      %v2257 = vpack.c.b16 %v2142, %v2137
      %v2258 = vpack.c.b16 %v2143, %v2138
      %v2259 = vpack.c.b16 %v2144, %v2139
      %v2260 = vpack.c.b16 %v2145, %v2140
      %v2261 = vpack.c.b16 %v2151, %v2146
      %v2262 = vpack.c.b16 %v2152, %v2147
      %v2263 = vpack.c.b16 %v2153, %v2148
      %v2264 = vpack.c.b16 %v2154, %v2149
      %v2265 = vpack.c.b16 %v2155, %v2150
      %v2266 = vpack.c.b16 %v2161, %v2156
      %v2267 = vpack.c.b16 %v2162, %v2157
      %v2268 = vpack.c.b16 %v2163, %v2158
      %v2269 = vpack.c.b16 %v2164, %v2159
      %v2270 = vpack.c.b16 %v2165, %v2160
      %v2271 = vpack.c.b16 %v2171, %v2166
      %v2272 = vpack.c.b16 %v2172, %v2167
      %v2273 = vpack.c.b16 %v2173, %v2168
      %v2274 = vpack.c.b16 %v2174, %v2169
      %v2275 = vpack.c.b16 %v2175, %v2170
      %v2276 = vpack.c.b16 %v2181, %v2176
      %v2277 = vpack.c.b16 %v2182, %v2177
      %v2278 = vpack.c.b16 %v2183, %v2178
      %v2279 = vpack.c.b16 %v2184, %v2179
      %v2280 = vpack.c.b16 %v2185, %v2180
      %v2281 = vpack.c.b16 %v2191, %v2186
      %v2282 = vpack.c.b16 %v2192, %v2187
      %v2283 = vpack.c.b16 %v2193, %v2188
      %v2284 = vpack.c.b16 %v2194, %v2189
      %v2285 = vpack.c.b16 %v2195, %v2190
      %v2286 = vpack.c.b16 %v2201, %v2196
      %v2287 = vpack.c.b16 %v2202, %v2197
      %v2288 = vpack.c.b16 %v2203, %v2198
      %v2289 = vpack.c.b16 %v2204, %v2199
      %v2290 = vpack.c.b16 %v2205, %v2200
      %v2291 = vpack.c.b16 %v2211, %v2206
      %v2292 = vpack.c.b16 %v2212, %v2207
      %v2293 = vpack.c.b16 %v2213, %v2208
      %v2294 = vpack.c.b16 %v2214, %v2209
      %v2295 = vpack.c.b16 %v2215, %v2210
      %v2296 = vpack.c.b16 %v2221, %v2216
      %v2297 = vpack.c.b16 %v2222, %v2217
      %v2298 = vpack.c.b16 %v2223, %v2218
      %v2299 = vpack.c.b16 %v2224, %v2219
      %v2300 = vpack.c.b16 %v2225, %v2220
      %v2301 = vpack.c.b16 %v2231, %v2226
      %v2302 = vpack.c.b16 %v2232, %v2227
      %v2303 = vpack.c.b16 %v2233, %v2228
      %v2304 = vpack.c.b16 %v2234, %v2229
      %v2305 = vpack.c.b16 %v2235, %v2230
      %v2306 = vpack.c.b16 %v2241, %v2236
      %v2307 = vpack.c.b16 %v2242, %v2237
      %v2308 = vpack.c.b16 %v2243, %v2238
      %v2309 = vpack.c.b16 %v2244, %v2239
      %v2310 = vpack.c.b16 %v2245, %v2240
      %v2311 = vpack.c.b16 %v2251, %v2246
      %v2312 = vpack.c.b16 %v2252, %v2247
      %v2313 = vpack.c.b16 %v2253, %v2248
      %v2314 = vpack.c.b16 %v2254, %v2249
      %v2315 = vpack.c.b16 %v2255, %v2250
      %v2456 = vunpack.c.l.b16 %v1984
      %v2457 = vunpack.c.l.b16 %v1985
      %v2458 = vunpack.c.l.b16 %v1986
      %v2459 = vunpack.c.l.b16 %v1987
      %v2460 = vunpack.c.l.b16 %v1988
      %v2461 = vunpack.c.l.b16 %v1989
      %v2462 = vunpack.c.l.b16 %v1990
      %v2463 = vunpack.c.l.b16 %v1991
      %v2464 = vunpack.c.l.b16 %v1992
      %v2465 = vunpack.c.l.b16 %v1993
      %v2466 = vunpack.c.l.b16 %v1994
      %v2467 = vunpack.c.l.b16 %v1995
      %v2468 = vunpack.c.l.b16 %v1996
      %v2469 = vunpack.c.l.b16 %v1997
      %v2470 = vunpack.c.l.b16 %v1998
      %v2471 = vunpack.c.l.b16 %v1999
      %v2472 = vunpack.c.l.b16 %v2000
      %v2473 = vunpack.c.l.b16 %v2001
      %v2474 = vunpack.c.l.b16 %v2002
      %v2475 = vunpack.c.l.b16 %v2003
      %v2476 = vunpack.c.l.b16 %v2004
      %v2477 = vunpack.c.l.b16 %v2005
      %v2478 = vunpack.c.l.b16 %v2006
      %v2479 = vunpack.c.l.b16 %v2007
      %v2480 = vunpack.c.l.b16 %v2008
      %v2481 = vunpack.c.l.b16 %v2009
      %v2482 = vunpack.c.l.b16 %v2010
      %v2483 = vunpack.c.l.b16 %v2011
      %v2484 = vunpack.c.l.b16 %v2012
      %v2485 = vunpack.c.l.b16 %v2013
      %v2486 = vunpack.c.l.b16 %v2014
      %v2487 = vunpack.c.l.b16 %v2015
      %v2488 = vunpack.c.l.b16 %v2016
      %v2489 = vunpack.c.l.b16 %v2017
      %v2490 = vunpack.c.l.b16 %v2018
      %v2491 = vunpack.c.l.b16 %v2019
      %v2492 = vunpack.c.l.b16 %v2020
      %v2493 = vunpack.c.l.b16 %v2021
      %v2494 = vunpack.c.l.b16 %v2022
      %v2495 = vunpack.c.l.b16 %v2023
      %v2496 = vunpack.c.l.b16 %v2024
      %v2497 = vunpack.c.l.b16 %v2025
      %v2498 = vunpack.c.l.b16 %v2026
      %v2499 = vunpack.c.l.b16 %v2027
      %v2500 = vunpack.c.l.b16 %v2028
      %v2501 = vunpack.c.l.b16 %v2029
      %v2502 = vunpack.c.l.b16 %v2030
      %v2503 = vunpack.c.l.b16 %v2031
      %v2504 = vunpack.c.l.b16 %v2032
      %v2505 = vunpack.c.l.b16 %v2033
      %v2506 = vunpack.c.l.b16 %v2034
      %v2507 = vunpack.c.l.b16 %v2035
      %v2508 = vunpack.c.l.b16 %v2036
      %v2509 = vunpack.c.l.b16 %v2037
      %v2510 = vunpack.c.l.b16 %v2038
      %v2511 = vunpack.c.l.b16 %v2039
      %v2512 = vunpack.c.l.b16 %v2040
      %v2513 = vunpack.c.l.b16 %v2041
      %v2514 = vunpack.c.l.b16 %v2042
      %v2515 = vunpack.c.l.b16 %v2043
      %v2516 = vunpack.c.l.b16 %v2044
      %v2517 = vunpack.c.l.b16 %v2045
      %v2518 = vunpack.c.l.b16 %v2046
      %v2519 = vunpack.c.l.b16 %v2047
      %v2520 = vunpack.c.l.b16 %v2048
      %v2521 = vunpack.c.l.b16 %v2049
      %v2522 = vunpack.c.l.b16 %v2050
      %v2523 = vunpack.c.l.b16 %v2051
      %v2524 = vunpack.c.l.b16 %v2052
      %v2525 = vunpack.c.l.b16 %v2053
      %v2526 = vunpack.c.l.b16 %v2054
      %v2527 = vunpack.c.l.b16 %v2055
      %v2528 = vunpack.c.l.b16 %v2056
      %v2529 = vunpack.c.l.b16 %v2057
      %v2530 = vunpack.c.l.b16 %v2058
      %v2531 = vunpack.c.l.b16 %v2059
      %v2532 = vunpack.c.l.b16 %v2060
      %v2533 = vunpack.c.l.b16 %v2061
      %v2534 = vunpack.c.l.b16 %v2062
      %v2535 = vunpack.c.l.b16 %v2063
      %v2536 = vpack.c.b16 %v2457, %v2456
      %v2537 = vpack.c.b16 %v2459, %v2458
      %v2538 = vpack.c.b16 %v2461, %v2460
      %v2539 = vpack.c.b16 %v2463, %v2462
      %v2540 = vpack.c.b16 %v2465, %v2464
      %v2541 = vpack.c.b16 %v2467, %v2466
      %v2542 = vpack.c.b16 %v2469, %v2468
      %v2543 = vpack.c.b16 %v2471, %v2470
      %v2544 = vpack.c.b16 %v2473, %v2472
      %v2545 = vpack.c.b16 %v2475, %v2474
      %v2546 = vpack.c.b16 %v2477, %v2476
      %v2547 = vpack.c.b16 %v2479, %v2478
      %v2548 = vpack.c.b16 %v2481, %v2480
      %v2549 = vpack.c.b16 %v2483, %v2482
      %v2550 = vpack.c.b16 %v2485, %v2484
      %v2551 = vpack.c.b16 %v2487, %v2486
      %v2552 = vpack.c.b16 %v2489, %v2488
      %v2553 = vpack.c.b16 %v2491, %v2490
      %v2554 = vpack.c.b16 %v2493, %v2492
      %v2555 = vpack.c.b16 %v2495, %v2494
      %v2556 = vpack.c.b16 %v2497, %v2496
      %v2557 = vpack.c.b16 %v2499, %v2498
      %v2558 = vpack.c.b16 %v2501, %v2500
      %v2559 = vpack.c.b16 %v2503, %v2502
      %v2560 = vpack.c.b16 %v2505, %v2504
      %v2561 = vpack.c.b16 %v2507, %v2506
      %v2562 = vpack.c.b16 %v2509, %v2508
      %v2563 = vpack.c.b16 %v2511, %v2510
      %v2564 = vpack.c.b16 %v2513, %v2512
      %v2565 = vpack.c.b16 %v2515, %v2514
      %v2566 = vpack.c.b16 %v2517, %v2516
      %v2567 = vpack.c.b16 %v2519, %v2518
      %v2568 = vpack.c.b16 %v2521, %v2520
      %v2569 = vpack.c.b16 %v2523, %v2522
      %v2570 = vpack.c.b16 %v2525, %v2524
      %v2571 = vpack.c.b16 %v2527, %v2526
      %v2572 = vpack.c.b16 %v2529, %v2528
      %v2573 = vpack.c.b16 %v2531, %v2530
      %v2574 = vpack.c.b16 %v2533, %v2532
      %v2575 = vpack.c.b16 %v2535, %v2534
      %2616 = vmatprep.subr.bf16.mxu0 0
      %2617 = vmatpush1.bf16.msra.mxu0 %v2543
      %2618 = vmatprep.subr.bf16.mxu0 0
      %2619 = vmatpush1.bf16.msra.mxu0 %v2542
      %2620 = vmatprep.subr.bf16.mxu0 0
      %2621 = vmatpush1.bf16.msra.mxu0 %v2541
      %2622 = vmatprep.subr.bf16.mxu0 0
      %2623 = vmatpush1.bf16.msra.mxu0 %v2540
      %2624 = vmatprep.subr.bf16.mxu0 0
      %2625 = vmatpush1.bf16.msra.mxu0 %v2539
      %2626 = vmatprep.subr.bf16.mxu0 0
      %2627 = vmatpush1.bf16.msra.mxu0 %v2538
      %2628 = vmatprep.subr.bf16.mxu0 0
      %2629 = vmatpush1.bf16.msra.mxu0 %v2537
      %2630 = vmatprep.subr.bf16.mxu0 0
      %2631 = vmatpush1.bf16.msra.mxu0 %v2536
      %2632 = vmatprep.subr.bf16.mxu0 0
      %2633 = vmatpush2.bf16.msra.mxu0 %v2551
      %2634 = vmatprep.subr.bf16.mxu0 0
      %2635 = vmatpush2.bf16.msra.mxu0 %v2550
      %2636 = vmatprep.subr.bf16.mxu0 0
      %2637 = vmatpush2.bf16.msra.mxu0 %v2549
      %2638 = vmatprep.subr.bf16.mxu0 0
      %2639 = vmatpush2.bf16.msra.mxu0 %v2548
      %2640 = vmatprep.subr.bf16.mxu0 0
      %2641 = vmatpush2.bf16.msra.mxu0 %v2547
      %2642 = vmatprep.subr.bf16.mxu0 0
      %2643 = vmatpush2.bf16.msra.mxu0 %v2546
      %2644 = vmatprep.subr.bf16.mxu0 0
      %2645 = vmatpush2.bf16.msra.mxu0 %v2545
      %2646 = vmatprep.subr.bf16.mxu0 0
      %2647 = vmatpush2.bf16.msra.mxu0 %v2544
      %2648 = vmatprep.mubr.bf16.mxu0 %v2257
      %2649 = vmatmul.mubr.bf16.gmra.mxu0 %v2256
      %v2650 = vpop.f32.mrf.mxu0
      %v2651 = vadd.f32 0.0, %v2650
      %v2652 = vpop.f32.mrf.mxu0
      %v2653 = vpop.f32.mrf.mxu0
      %v2654 = vadd.f32 0.0, %v2653
      %v2655 = vpop.f32.mrf.mxu0
      %2656 = vmatprep.mubr.bf16.mxu0 %v2262
      %2657 = vmatmul.mubr.bf16.gmra.mxu0 %v2261
      %v2658 = vpop.f32.mrf.mxu0
      %v2659 = vadd.f32 0.0, %v2658
      %v2660 = vpop.f32.mrf.mxu0
      %v2661 = vpop.f32.mrf.mxu0
      %v2662 = vadd.f32 0.0, %v2661
      %v2663 = vpop.f32.mrf.mxu0
      %2664 = vmatprep.mubr.bf16.mxu0 %v2267
      %2665 = vmatmul.mubr.bf16.gmra.mxu0 %v2266
      %v2666 = vpop.f32.mrf.mxu0
      %v2667 = vadd.f32 0.0, %v2666
      %v2668 = vpop.f32.mrf.mxu0
      %v2669 = vpop.f32.mrf.mxu0
      %v2670 = vadd.f32 0.0, %v2669
      %v2671 = vpop.f32.mrf.mxu0
      %2672 = vmatprep.mubr.bf16.mxu0 %v2272
      %2673 = vmatmul.mubr.bf16.gmra.mxu0 %v2271
      %v2674 = vpop.f32.mrf.mxu0
      %v2675 = vadd.f32 0.0, %v2674
      %v2676 = vpop.f32.mrf.mxu0
      %v2677 = vpop.f32.mrf.mxu0
      %v2678 = vadd.f32 0.0, %v2677
      %v2679 = vpop.f32.mrf.mxu0
      %2680 = vmatprep.mubr.bf16.mxu0 %v2277
      %2681 = vmatmul.mubr.bf16.gmra.mxu0 %v2276
      %v2682 = vpop.f32.mrf.mxu0
      %v2683 = vadd.f32 0.0, %v2682
      %v2684 = vpop.f32.mrf.mxu0
      %v2685 = vpop.f32.mrf.mxu0
      %v2686 = vadd.f32 0.0, %v2685
      %v2687 = vpop.f32.mrf.mxu0
      %2688 = vmatprep.mubr.bf16.mxu0 %v2282
      %2689 = vmatmul.mubr.bf16.gmra.mxu0 %v2281
      %v2690 = vpop.f32.mrf.mxu0
      %v2691 = vadd.f32 0.0, %v2690
      %v2692 = vpop.f32.mrf.mxu0
      %v2693 = vpop.f32.mrf.mxu0
      %v2694 = vadd.f32 0.0, %v2693
      %v2695 = vpop.f32.mrf.mxu0
      %2696 = vmatprep.mubr.bf16.mxu0 %v2287
      %2697 = vmatmul.mubr.bf16.gmra.mxu0 %v2286
      %v2698 = vpop.f32.mrf.mxu0
      %v2699 = vadd.f32 0.0, %v2698
      %v2700 = vpop.f32.mrf.mxu0
      %v2701 = vpop.f32.mrf.mxu0
      %v2702 = vadd.f32 0.0, %v2701
      %v2703 = vpop.f32.mrf.mxu0
      %2704 = vmatprep.mubr.bf16.mxu0 %v2292
      %2705 = vmatmul.mubr.bf16.gmra.mxu0 %v2291
      %v2706 = vpop.f32.mrf.mxu0
      %v2707 = vadd.f32 0.0, %v2706
      %v2708 = vpop.f32.mrf.mxu0
      %v2709 = vpop.f32.mrf.mxu0
      %v2710 = vadd.f32 0.0, %v2709
      %v2711 = vpop.f32.mrf.mxu0
      %2712 = vmatprep.mubr.bf16.mxu0 %v2297
      %2713 = vmatmul.mubr.bf16.gmra.mxu0 %v2296
      %v2714 = vpop.f32.mrf.mxu0
      %v2715 = vadd.f32 0.0, %v2714
      %v2716 = vpop.f32.mrf.mxu0
      %v2717 = vpop.f32.mrf.mxu0
      %v2718 = vadd.f32 0.0, %v2717
      %v2719 = vpop.f32.mrf.mxu0
      %2720 = vmatprep.mubr.bf16.mxu0 %v2302
      %2721 = vmatmul.mubr.bf16.gmra.mxu0 %v2301
      %v2722 = vpop.f32.mrf.mxu0
      %v2723 = vadd.f32 0.0, %v2722
      %v2724 = vpop.f32.mrf.mxu0
      %v2725 = vpop.f32.mrf.mxu0
      %v2726 = vadd.f32 0.0, %v2725
      %v2727 = vpop.f32.mrf.mxu0
      %2728 = vmatprep.mubr.bf16.mxu0 %v2307
      %2729 = vmatmul.mubr.bf16.gmra.mxu0 %v2306
      %v2730 = vpop.f32.mrf.mxu0
      %v2731 = vadd.f32 0.0, %v2730
      %v2732 = vpop.f32.mrf.mxu0
      %v2733 = vpop.f32.mrf.mxu0
      %v2734 = vadd.f32 0.0, %v2733
      %v2735 = vpop.f32.mrf.mxu0
      %2736 = vmatprep.mubr.bf16.mxu0 %v2312
      %2737 = vmatmul.mubr.bf16.gmra.mxu0 %v2311
      %v2738 = vpop.f32.mrf.mxu0
      %v2739 = vadd.f32 0.0, %v2738
      %v2740 = vpop.f32.mrf.mxu0
      %v2741 = vpop.f32.mrf.mxu0
      %v2742 = vadd.f32 0.0, %v2741
      %v2743 = vpop.f32.mrf.mxu0
      %2744 = vdwg.mxu0
      %2745 = vmatprep.subr.bf16.mxu0 0
      %2746 = vmatpush1.bf16.msra.mxu0 %v2559
      %2747 = vmatprep.subr.bf16.mxu0 0
      %2748 = vmatpush1.bf16.msra.mxu0 %v2558
      %2749 = vmatprep.subr.bf16.mxu0 0
      %2750 = vmatpush1.bf16.msra.mxu0 %v2557
      %2751 = vmatprep.subr.bf16.mxu0 0
      %2752 = vmatpush1.bf16.msra.mxu0 %v2556
      %2753 = vmatprep.subr.bf16.mxu0 0
      %2754 = vmatpush1.bf16.msra.mxu0 %v2555
      %2755 = vmatprep.subr.bf16.mxu0 0
      %2756 = vmatpush1.bf16.msra.mxu0 %v2554
      %2757 = vmatprep.subr.bf16.mxu0 0
      %2758 = vmatpush1.bf16.msra.mxu0 %v2553
      %2759 = vmatprep.subr.bf16.mxu0 0
      %2760 = vmatpush1.bf16.msra.mxu0 %v2552
      %2761 = vmatprep.subr.bf16.mxu0 0
      %2762 = vmatpush2.bf16.msra.mxu0 %v2567
      %2763 = vmatprep.subr.bf16.mxu0 0
      %2764 = vmatpush2.bf16.msra.mxu0 %v2566
      %2765 = vmatprep.subr.bf16.mxu0 0
      %2766 = vmatpush2.bf16.msra.mxu0 %v2565
      %2767 = vmatprep.subr.bf16.mxu0 0
      %2768 = vmatpush2.bf16.msra.mxu0 %v2564
      %2769 = vmatprep.subr.bf16.mxu0 0
      %2770 = vmatpush2.bf16.msra.mxu0 %v2563
      %2771 = vmatprep.subr.bf16.mxu0 0
      %2772 = vmatpush2.bf16.msra.mxu0 %v2562
      %2773 = vmatprep.subr.bf16.mxu0 0
      %2774 = vmatpush2.bf16.msra.mxu0 %v2561
      %2775 = vmatprep.subr.bf16.mxu0 0
      %2776 = vmatpush2.bf16.msra.mxu0 %v2560
      %2777 = vmatprep.mubr.bf16.mxu0 %v2259
      %2778 = vmatmul.mubr.bf16.gmra.mxu0 %v2258
      %v2779 = vpop.f32.mrf.mxu0
      %v2780 = vadd.f32 %v2651, %v2779
      %v2781 = vpop.f32.mrf.mxu0
      %v2782 = vpop.f32.mrf.mxu0
      %v2783 = vadd.f32 %v2654, %v2782
      %v2784 = vpop.f32.mrf.mxu0
      %2785 = vmatprep.mubr.bf16.mxu0 %v2264
      %2786 = vmatmul.mubr.bf16.gmra.mxu0 %v2263
      %v2787 = vpop.f32.mrf.mxu0
      %v2788 = vadd.f32 %v2659, %v2787
      %v2789 = vpop.f32.mrf.mxu0
      %v2790 = vpop.f32.mrf.mxu0
      %v2791 = vadd.f32 %v2662, %v2790
      %v2792 = vpop.f32.mrf.mxu0
      %2793 = vmatprep.mubr.bf16.mxu0 %v2269
      %2794 = vmatmul.mubr.bf16.gmra.mxu0 %v2268
      %v2795 = vpop.f32.mrf.mxu0
      %v2796 = vadd.f32 %v2667, %v2795
      %v2797 = vpop.f32.mrf.mxu0
      %v2798 = vpop.f32.mrf.mxu0
      %v2799 = vadd.f32 %v2670, %v2798
      %v2800 = vpop.f32.mrf.mxu0
      %2801 = vmatprep.mubr.bf16.mxu0 %v2274
      %2802 = vmatmul.mubr.bf16.gmra.mxu0 %v2273
      %v2803 = vpop.f32.mrf.mxu0
      %v2804 = vadd.f32 %v2675, %v2803
      %v2805 = vpop.f32.mrf.mxu0
      %v2806 = vpop.f32.mrf.mxu0
      %v2807 = vadd.f32 %v2678, %v2806
      %v2808 = vpop.f32.mrf.mxu0
      %2809 = vmatprep.mubr.bf16.mxu0 %v2279
      %2810 = vmatmul.mubr.bf16.gmra.mxu0 %v2278
      %v2811 = vpop.f32.mrf.mxu0
      %v2812 = vadd.f32 %v2683, %v2811
      %v2813 = vpop.f32.mrf.mxu0
      %v2814 = vpop.f32.mrf.mxu0
      %v2815 = vadd.f32 %v2686, %v2814
      %v2816 = vpop.f32.mrf.mxu0
      %2817 = vmatprep.mubr.bf16.mxu0 %v2284
      %2818 = vmatmul.mubr.bf16.gmra.mxu0 %v2283
      %v2819 = vpop.f32.mrf.mxu0
      %v2820 = vadd.f32 %v2691, %v2819
      %v2821 = vpop.f32.mrf.mxu0
      %v2822 = vpop.f32.mrf.mxu0
      %v2823 = vadd.f32 %v2694, %v2822
      %v2824 = vpop.f32.mrf.mxu0
      %2825 = vmatprep.mubr.bf16.mxu0 %v2289
      %2826 = vmatmul.mubr.bf16.gmra.mxu0 %v2288
      %v2827 = vpop.f32.mrf.mxu0
      %v2828 = vadd.f32 %v2699, %v2827
      %v2829 = vpop.f32.mrf.mxu0
      %v2830 = vpop.f32.mrf.mxu0
      %v2831 = vadd.f32 %v2702, %v2830
      %v2832 = vpop.f32.mrf.mxu0
      %2833 = vmatprep.mubr.bf16.mxu0 %v2294
      %2834 = vmatmul.mubr.bf16.gmra.mxu0 %v2293
      %v2835 = vpop.f32.mrf.mxu0
      %v2836 = vadd.f32 %v2707, %v2835
      %v2837 = vpop.f32.mrf.mxu0
      %v2838 = vpop.f32.mrf.mxu0
      %v2839 = vadd.f32 %v2710, %v2838
      %v2840 = vpop.f32.mrf.mxu0
      %2841 = vmatprep.mubr.bf16.mxu0 %v2299
      %2842 = vmatmul.mubr.bf16.gmra.mxu0 %v2298
      %v2843 = vpop.f32.mrf.mxu0
      %v2844 = vadd.f32 %v2715, %v2843
      %v2845 = vpop.f32.mrf.mxu0
      %v2846 = vpop.f32.mrf.mxu0
      %v2847 = vadd.f32 %v2718, %v2846
      %v2848 = vpop.f32.mrf.mxu0
      %2849 = vmatprep.mubr.bf16.mxu0 %v2304
      %2850 = vmatmul.mubr.bf16.gmra.mxu0 %v2303
      %v2851 = vpop.f32.mrf.mxu0
      %v2852 = vadd.f32 %v2723, %v2851
      %v2853 = vpop.f32.mrf.mxu0
      %v2854 = vpop.f32.mrf.mxu0
      %v2855 = vadd.f32 %v2726, %v2854
      %v2856 = vpop.f32.mrf.mxu0
      %2857 = vmatprep.mubr.bf16.mxu0 %v2309
      %2858 = vmatmul.mubr.bf16.gmra.mxu0 %v2308
      %v2859 = vpop.f32.mrf.mxu0
      %v2860 = vadd.f32 %v2731, %v2859
      %v2861 = vpop.f32.mrf.mxu0
      %v2862 = vpop.f32.mrf.mxu0
      %v2863 = vadd.f32 %v2734, %v2862
      %v2864 = vpop.f32.mrf.mxu0
      %2865 = vmatprep.mubr.bf16.mxu0 %v2314
      %2866 = vmatmul.mubr.bf16.gmra.mxu0 %v2313
      %v2867 = vpop.f32.mrf.mxu0
      %v2868 = vadd.f32 %v2739, %v2867
      %v2869 = vpop.f32.mrf.mxu0
      %v2870 = vpop.f32.mrf.mxu0
      %v2871 = vadd.f32 %v2742, %v2870
      %v2872 = vpop.f32.mrf.mxu0
      %2873 = vdwg.mxu0
      %2874 = vmatprep.subr.bf16.mxu0 0
      %2875 = vmatpush1.bf16.msra.mxu0 %v2575
      %2876 = vmatprep.subr.bf16.mxu0 0
      %2877 = vmatpush1.bf16.msra.mxu0 %v2574
      %2878 = vmatprep.subr.bf16.mxu0 0
      %2879 = vmatpush1.bf16.msra.mxu0 %v2573
      %2880 = vmatprep.subr.bf16.mxu0 0
      %2881 = vmatpush1.bf16.msra.mxu0 %v2572
      %2882 = vmatprep.subr.bf16.mxu0 0
      %2883 = vmatpush1.bf16.msra.mxu0 %v2571
      %2884 = vmatprep.subr.bf16.mxu0 0
      %2885 = vmatpush1.bf16.msra.mxu0 %v2570
      %2886 = vmatprep.subr.bf16.mxu0 0
      %2887 = vmatpush1.bf16.msra.mxu0 %v2569
      %2888 = vmatprep.subr.bf16.mxu0 0
      %2889 = vmatpush1.bf16.msra.mxu0 %v2568
      %2890 = vmatprep.subr.bf16.mxu0 0
      %2891 = vmatpush2.bf16.msra.mxu0 0
      %2892 = vmatprep.subr.bf16.mxu0 0
      %2893 = vmatpush2.bf16.msra.mxu0 0
      %2894 = vmatprep.subr.bf16.mxu0 0
      %2895 = vmatpush2.bf16.msra.mxu0 0
      %2896 = vmatprep.subr.bf16.mxu0 0
      %2897 = vmatpush2.bf16.msra.mxu0 0
      %2898 = vmatprep.subr.bf16.mxu0 0
      %2899 = vmatpush2.bf16.msra.mxu0 0
      %2900 = vmatprep.subr.bf16.mxu0 0
      %2901 = vmatpush2.bf16.msra.mxu0 0
      %2902 = vmatprep.subr.bf16.mxu0 0
      %2903 = vmatpush2.bf16.msra.mxu0 0
      %2904 = vmatprep.subr.bf16.mxu0 0
      %2905 = vmatpush2.bf16.msra.mxu0 0
      %2906 = vmatprep.mubr.bf16.mxu0 0
      %2907 = vmatmul.mubr.bf16.gmra.mxu0 %v2260
      %v2908 = vpop.f32.mrf.mxu0
      %v2909 = vadd.f32 %v2780, %v2908
      %v2910 = vpop.f32.mrf.mxu0
      %v2911 = vpop.f32.mrf.mxu0
      %v2912 = vadd.f32 %v2783, %v2911
      %v2913 = vpop.f32.mrf.mxu0
      %2914 = vmatprep.mubr.bf16.mxu0 0
      %2915 = vmatmul.mubr.bf16.gmra.mxu0 %v2265
      %v2916 = vpop.f32.mrf.mxu0
      %v2917 = vadd.f32 %v2788, %v2916
      %v2918 = vpop.f32.mrf.mxu0
      %v2919 = vpop.f32.mrf.mxu0
      %v2920 = vadd.f32 %v2791, %v2919
      %v2921 = vpop.f32.mrf.mxu0
      %2922 = vmatprep.mubr.bf16.mxu0 0
      %2923 = vmatmul.mubr.bf16.gmra.mxu0 %v2270
      %v2924 = vpop.f32.mrf.mxu0
      %v2925 = vadd.f32 %v2796, %v2924
      %v2926 = vpop.f32.mrf.mxu0
      %v2927 = vpop.f32.mrf.mxu0
      %v2928 = vadd.f32 %v2799, %v2927
      %v2929 = vpop.f32.mrf.mxu0
      %2930 = vmatprep.mubr.bf16.mxu0 0
      %2931 = vmatmul.mubr.bf16.gmra.mxu0 %v2275
      %v2932 = vpop.f32.mrf.mxu0
      %v2933 = vadd.f32 %v2804, %v2932
      %v2934 = vpop.f32.mrf.mxu0
      %v2935 = vpop.f32.mrf.mxu0
      %v2936 = vadd.f32 %v2807, %v2935
      %v2937 = vpop.f32.mrf.mxu0
      %2938 = vmatprep.mubr.bf16.mxu0 0
      %2939 = vmatmul.mubr.bf16.gmra.mxu0 %v2280
      %v2940 = vpop.f32.mrf.mxu0
      %v2941 = vadd.f32 %v2812, %v2940
      %v2942 = vpop.f32.mrf.mxu0
      %v2943 = vpop.f32.mrf.mxu0
      %v2944 = vadd.f32 %v2815, %v2943
      %v2945 = vpop.f32.mrf.mxu0
      %2946 = vmatprep.mubr.bf16.mxu0 0
      %2947 = vmatmul.mubr.bf16.gmra.mxu0 %v2285
      %v2948 = vpop.f32.mrf.mxu0
      %v2949 = vadd.f32 %v2820, %v2948
      %v2950 = vpop.f32.mrf.mxu0
      %v2951 = vpop.f32.mrf.mxu0
      %v2952 = vadd.f32 %v2823, %v2951
      %v2953 = vpop.f32.mrf.mxu0
      %2954 = vmatprep.mubr.bf16.mxu0 0
      %2955 = vmatmul.mubr.bf16.gmra.mxu0 %v2290
      %v2956 = vpop.f32.mrf.mxu0
      %v2957 = vadd.f32 %v2828, %v2956
      %v2958 = vpop.f32.mrf.mxu0
      %v2959 = vpop.f32.mrf.mxu0
      %v2960 = vadd.f32 %v2831, %v2959
      %v2961 = vpop.f32.mrf.mxu0
      %2962 = vmatprep.mubr.bf16.mxu0 0
      %2963 = vmatmul.mubr.bf16.gmra.mxu0 %v2295
      %v2964 = vpop.f32.mrf.mxu0
      %v2965 = vadd.f32 %v2836, %v2964
      %v2966 = vpop.f32.mrf.mxu0
      %v2967 = vpop.f32.mrf.mxu0
      %v2968 = vadd.f32 %v2839, %v2967
      %v2969 = vpop.f32.mrf.mxu0
      %2970 = vmatprep.mubr.bf16.mxu0 0
      %2971 = vmatmul.mubr.bf16.gmra.mxu0 %v2300
      %v2972 = vpop.f32.mrf.mxu0
      %v2973 = vadd.f32 %v2844, %v2972
      %v2974 = vpop.f32.mrf.mxu0
      %v2975 = vpop.f32.mrf.mxu0
      %v2976 = vadd.f32 %v2847, %v2975
      %v2977 = vpop.f32.mrf.mxu0
      %2978 = vmatprep.mubr.bf16.mxu0 0
      %2979 = vmatmul.mubr.bf16.gmra.mxu0 %v2305
      %v2980 = vpop.f32.mrf.mxu0
      %v2981 = vadd.f32 %v2852, %v2980
      %v2982 = vpop.f32.mrf.mxu0
      %v2983 = vpop.f32.mrf.mxu0
      %v2984 = vadd.f32 %v2855, %v2983
      %v2985 = vpop.f32.mrf.mxu0
      %2986 = vmatprep.mubr.bf16.mxu0 0
      %2987 = vmatmul.mubr.bf16.gmra.mxu0 %v2310
      %v2988 = vpop.f32.mrf.mxu0
      %v2989 = vadd.f32 %v2860, %v2988
      %v2990 = vpop.f32.mrf.mxu0
      %v2991 = vpop.f32.mrf.mxu0
      %v2992 = vadd.f32 %v2863, %v2991
      %v2993 = vpop.f32.mrf.mxu0
      %2994 = vmatprep.mubr.bf16.mxu0 0
      %2995 = vmatmul.mubr.bf16.gmra.mxu0 %v2315
      %v2996 = vpop.f32.mrf.mxu0
      %v2997 = vadd.f32 %v2868, %v2996
      %v2998 = vpop.f32.mrf.mxu0
      %v2999 = vpop.f32.mrf.mxu0
      %v3000 = vadd.f32 %v2871, %v2999
      %v3001 = vpop.f32.mrf.mxu0
      %3002 = vdwg.mxu0
      %v3075 = vunpack.c.l.b16 %v1753
      %v3076 = vunpack.c.h.b16 %v1753
      %v3077 = vunpack.c.l.b16 %v1754
      %v3078 = vunpack.c.h.b16 %v1754
      %v3079 = vunpack.c.l.b16 %v1755
      %v3080 = vunpack.c.l.b16 %v1756
      %v3081 = vunpack.c.h.b16 %v1756
      %v3082 = vunpack.c.l.b16 %v1757
      %v3083 = vunpack.c.h.b16 %v1757
      %v3084 = vunpack.c.l.b16 %v1758
      %v3085 = vunpack.c.l.b16 %v1759
      %v3086 = vunpack.c.h.b16 %v1759
      %v3087 = vunpack.c.l.b16 %v1760
      %v3088 = vunpack.c.h.b16 %v1760
      %v3089 = vunpack.c.l.b16 %v1761
      %v3090 = vunpack.c.l.b16 %v1762
      %v3091 = vunpack.c.h.b16 %v1762
      %v3092 = vunpack.c.l.b16 %v1763
      %v3093 = vunpack.c.h.b16 %v1763
      %v3094 = vunpack.c.l.b16 %v1764
      %v3095 = vunpack.c.l.b16 %v1765
      %v3096 = vunpack.c.h.b16 %v1765
      %v3097 = vunpack.c.l.b16 %v1766
      %v3098 = vunpack.c.h.b16 %v1766
      %v3099 = vunpack.c.l.b16 %v1767
      %v3100 = vunpack.c.l.b16 %v1768
      %v3101 = vunpack.c.h.b16 %v1768
      %v3102 = vunpack.c.l.b16 %v1769
      %v3103 = vunpack.c.h.b16 %v1769
      %v3104 = vunpack.c.l.b16 %v1770
      %v3105 = vunpack.c.l.b16 %v1771
      %v3106 = vunpack.c.h.b16 %v1771
      %v3107 = vunpack.c.l.b16 %v1772
      %v3108 = vunpack.c.h.b16 %v1772
      %v3109 = vunpack.c.l.b16 %v1773
      %v3110 = vunpack.c.l.b16 %v1774
      %v3111 = vunpack.c.h.b16 %v1774
      %v3112 = vunpack.c.l.b16 %v1775
      %v3113 = vunpack.c.h.b16 %v1775
      %v3114 = vunpack.c.l.b16 %v1776
      %v3115 = vunpack.c.l.b16 %v1777
      %v3116 = vunpack.c.h.b16 %v1777
      %v3117 = vunpack.c.l.b16 %v1778
      %v3118 = vunpack.c.h.b16 %v1778
      %v3119 = vunpack.c.l.b16 %v1779
      %v3120 = vunpack.c.l.b16 %v1780
      %v3121 = vunpack.c.h.b16 %v1780
      %v3122 = vunpack.c.l.b16 %v1781
      %v3123 = vunpack.c.h.b16 %v1781
      %v3124 = vunpack.c.l.b16 %v1782
      %v3125 = vunpack.c.l.b16 %v1783
      %v3126 = vunpack.c.h.b16 %v1783
      %v3127 = vunpack.c.l.b16 %v1784
      %v3128 = vunpack.c.h.b16 %v1784
      %v3129 = vunpack.c.l.b16 %v1785
      %v3130 = vunpack.c.l.b16 %v1786
      %v3131 = vunpack.c.h.b16 %v1786
      %v3132 = vunpack.c.l.b16 %v1787
      %v3133 = vunpack.c.h.b16 %v1787
      %v3134 = vunpack.c.l.b16 %v1788
      %v3135 = vunpack.c.l.b16 %v1789
      %v3136 = vunpack.c.h.b16 %v1789
      %v3137 = vunpack.c.l.b16 %v1790
      %v3138 = vunpack.c.h.b16 %v1790
      %v3139 = vunpack.c.l.b16 %v1791
      %v3140 = vunpack.c.l.b16 %v1792
      %v3141 = vunpack.c.h.b16 %v1792
      %v3142 = vunpack.c.l.b16 %v1793
      %v3143 = vunpack.c.h.b16 %v1793
      %v3144 = vunpack.c.l.b16 %v1794
      %v3145 = vunpack.c.l.b16 %v1795
      %v3146 = vunpack.c.h.b16 %v1795
      %v3147 = vunpack.c.l.b16 %v1796
      %v3148 = vunpack.c.h.b16 %v1796
      %v3149 = vunpack.c.l.b16 %v1797
      %v3150 = vunpack.c.l.b16 %v1798
      %v3151 = vunpack.c.h.b16 %v1798
      %v3152 = vunpack.c.l.b16 %v1799
      %v3153 = vunpack.c.h.b16 %v1799
      %v3154 = vunpack.c.l.b16 %v1800
      %v3155 = vunpack.c.l.b16 %v1801
      %v3156 = vunpack.c.h.b16 %v1801
      %v3157 = vunpack.c.l.b16 %v1802
      %v3158 = vunpack.c.h.b16 %v1802
      %v3159 = vunpack.c.l.b16 %v1803
      %v3160 = vunpack.c.l.b16 %v1804
      %v3161 = vunpack.c.h.b16 %v1804
      %v3162 = vunpack.c.l.b16 %v1805
      %v3163 = vunpack.c.h.b16 %v1805
      %v3164 = vunpack.c.l.b16 %v1806
      %v3165 = vunpack.c.l.b16 %v1807
      %v3166 = vunpack.c.h.b16 %v1807
      %v3167 = vunpack.c.l.b16 %v1808
      %v3168 = vunpack.c.h.b16 %v1808
      %v3169 = vunpack.c.l.b16 %v1809
      %v3170 = vunpack.c.l.b16 %v1810
      %v3171 = vunpack.c.h.b16 %v1810
      %v3172 = vunpack.c.l.b16 %v1811
      %v3173 = vunpack.c.h.b16 %v1811
      %v3174 = vunpack.c.l.b16 %v1812
      %v3175 = vunpack.c.l.b16 %v1813
      %v3176 = vunpack.c.h.b16 %v1813
      %v3177 = vunpack.c.l.b16 %v1814
      %v3178 = vunpack.c.h.b16 %v1814
      %v3179 = vunpack.c.l.b16 %v1815
      %v3180 = vunpack.c.l.b16 %v1816
      %v3181 = vunpack.c.h.b16 %v1816
      %v3182 = vunpack.c.l.b16 %v1817
      %v3183 = vunpack.c.h.b16 %v1817
      %v3184 = vunpack.c.l.b16 %v1818
      %v3185 = vunpack.c.l.b16 %v1819
      %v3186 = vunpack.c.h.b16 %v1819
      %v3187 = vunpack.c.l.b16 %v1820
      %v3188 = vunpack.c.h.b16 %v1820
      %v3189 = vunpack.c.l.b16 %v1821
      %v3190 = vunpack.c.l.b16 %v1822
      %v3191 = vunpack.c.h.b16 %v1822
      %v3192 = vunpack.c.l.b16 %v1823
      %v3193 = vunpack.c.h.b16 %v1823
      %v3194 = vunpack.c.l.b16 %v1824
      %v3195 = vpack.c.b16 %v3080, %v3075
      %v3196 = vpack.c.b16 %v3081, %v3076
      %v3197 = vpack.c.b16 %v3082, %v3077
      %v3198 = vpack.c.b16 %v3083, %v3078
      %v3199 = vpack.c.b16 %v3084, %v3079
      %v3200 = vpack.c.b16 %v3090, %v3085
      %v3201 = vpack.c.b16 %v3091, %v3086
      %v3202 = vpack.c.b16 %v3092, %v3087
      %v3203 = vpack.c.b16 %v3093, %v3088
      %v3204 = vpack.c.b16 %v3094, %v3089
      %v3205 = vpack.c.b16 %v3100, %v3095
      %v3206 = vpack.c.b16 %v3101, %v3096
      %v3207 = vpack.c.b16 %v3102, %v3097
      %v3208 = vpack.c.b16 %v3103, %v3098
      %v3209 = vpack.c.b16 %v3104, %v3099
      %v3210 = vpack.c.b16 %v3110, %v3105
      %v3211 = vpack.c.b16 %v3111, %v3106
      %v3212 = vpack.c.b16 %v3112, %v3107
      %v3213 = vpack.c.b16 %v3113, %v3108
      %v3214 = vpack.c.b16 %v3114, %v3109
      %v3215 = vpack.c.b16 %v3120, %v3115
      %v3216 = vpack.c.b16 %v3121, %v3116
      %v3217 = vpack.c.b16 %v3122, %v3117
      %v3218 = vpack.c.b16 %v3123, %v3118
      %v3219 = vpack.c.b16 %v3124, %v3119
      %v3220 = vpack.c.b16 %v3130, %v3125
      %v3221 = vpack.c.b16 %v3131, %v3126
      %v3222 = vpack.c.b16 %v3132, %v3127
      %v3223 = vpack.c.b16 %v3133, %v3128
      %v3224 = vpack.c.b16 %v3134, %v3129
      %v3225 = vpack.c.b16 %v3140, %v3135
      %v3226 = vpack.c.b16 %v3141, %v3136
      %v3227 = vpack.c.b16 %v3142, %v3137
      %v3228 = vpack.c.b16 %v3143, %v3138
      %v3229 = vpack.c.b16 %v3144, %v3139
      %v3230 = vpack.c.b16 %v3150, %v3145
      %v3231 = vpack.c.b16 %v3151, %v3146
      %v3232 = vpack.c.b16 %v3152, %v3147
      %v3233 = vpack.c.b16 %v3153, %v3148
      %v3234 = vpack.c.b16 %v3154, %v3149
      %v3235 = vpack.c.b16 %v3160, %v3155
      %v3236 = vpack.c.b16 %v3161, %v3156
      %v3237 = vpack.c.b16 %v3162, %v3157
      %v3238 = vpack.c.b16 %v3163, %v3158
      %v3239 = vpack.c.b16 %v3164, %v3159
      %v3240 = vpack.c.b16 %v3170, %v3165
      %v3241 = vpack.c.b16 %v3171, %v3166
      %v3242 = vpack.c.b16 %v3172, %v3167
      %v3243 = vpack.c.b16 %v3173, %v3168
      %v3244 = vpack.c.b16 %v3174, %v3169
      %v3245 = vpack.c.b16 %v3180, %v3175
      %v3246 = vpack.c.b16 %v3181, %v3176
      %v3247 = vpack.c.b16 %v3182, %v3177
      %v3248 = vpack.c.b16 %v3183, %v3178
      %v3249 = vpack.c.b16 %v3184, %v3179
      %v3250 = vpack.c.b16 %v3190, %v3185
      %v3251 = vpack.c.b16 %v3191, %v3186
      %v3252 = vpack.c.b16 %v3192, %v3187
      %v3253 = vpack.c.b16 %v3193, %v3188
      %v3254 = vpack.c.b16 %v3194, %v3189
      %v3395 = vunpack.c.l.b16 %v1825
      %v3396 = vunpack.c.l.b16 %v1826
      %v3397 = vunpack.c.l.b16 %v1827
      %v3398 = vunpack.c.l.b16 %v1828
      %v3399 = vunpack.c.l.b16 %v1829
      %v3400 = vunpack.c.l.b16 %v1830
      %v3401 = vunpack.c.l.b16 %v1831
      %v3402 = vunpack.c.l.b16 %v1832
      %v3403 = vunpack.c.l.b16 %v1833
      %v3404 = vunpack.c.l.b16 %v1834
      %v3405 = vunpack.c.l.b16 %v1835
      %v3406 = vunpack.c.l.b16 %v1836
      %v3407 = vunpack.c.l.b16 %v1837
      %v3408 = vunpack.c.l.b16 %v1838
      %v3409 = vunpack.c.l.b16 %v1839
      %v3410 = vunpack.c.l.b16 %v1840
      %v3411 = vunpack.c.l.b16 %v1841
      %v3412 = vunpack.c.l.b16 %v1842
      %v3413 = vunpack.c.l.b16 %v1843
      %v3414 = vunpack.c.l.b16 %v1844
      %v3415 = vunpack.c.l.b16 %v1845
      %v3416 = vunpack.c.l.b16 %v1846
      %v3417 = vunpack.c.l.b16 %v1847
      %v3418 = vunpack.c.l.b16 %v1848
      %v3419 = vunpack.c.l.b16 %v1849
      %v3420 = vunpack.c.l.b16 %v1850
      %v3421 = vunpack.c.l.b16 %v1851
      %v3422 = vunpack.c.l.b16 %v1852
      %v3423 = vunpack.c.l.b16 %v1853
      %v3424 = vunpack.c.l.b16 %v1854
      %v3425 = vunpack.c.l.b16 %v1855
      %v3426 = vunpack.c.l.b16 %v1856
      %v3427 = vunpack.c.l.b16 %v1857
      %v3428 = vunpack.c.l.b16 %v1858
      %v3429 = vunpack.c.l.b16 %v1859
      %v3430 = vunpack.c.l.b16 %v1860
      %v3431 = vunpack.c.l.b16 %v1861
      %v3432 = vunpack.c.l.b16 %v1862
      %v3433 = vunpack.c.l.b16 %v1863
      %v3434 = vunpack.c.l.b16 %v1864
      %v3435 = vunpack.c.l.b16 %v1865
      %v3436 = vunpack.c.l.b16 %v1866
      %v3437 = vunpack.c.l.b16 %v1867
      %v3438 = vunpack.c.l.b16 %v1868
      %v3439 = vunpack.c.l.b16 %v1869
      %v3440 = vunpack.c.l.b16 %v1870
      %v3441 = vunpack.c.l.b16 %v1871
      %v3442 = vunpack.c.l.b16 %v1872
      %v3443 = vunpack.c.l.b16 %v1873
      %v3444 = vunpack.c.l.b16 %v1874
      %v3445 = vunpack.c.l.b16 %v1875
      %v3446 = vunpack.c.l.b16 %v1876
      %v3447 = vunpack.c.l.b16 %v1877
      %v3448 = vunpack.c.l.b16 %v1878
      %v3449 = vunpack.c.l.b16 %v1879
      %v3450 = vunpack.c.l.b16 %v1880
      %v3451 = vunpack.c.l.b16 %v1881
      %v3452 = vunpack.c.l.b16 %v1882
      %v3453 = vunpack.c.l.b16 %v1883
      %v3454 = vunpack.c.l.b16 %v1884
      %v3455 = vunpack.c.l.b16 %v1885
      %v3456 = vunpack.c.l.b16 %v1886
      %v3457 = vunpack.c.l.b16 %v1887
      %v3458 = vunpack.c.l.b16 %v1888
      %v3459 = vunpack.c.l.b16 %v1889
      %v3460 = vunpack.c.l.b16 %v1890
      %v3461 = vunpack.c.l.b16 %v1891
      %v3462 = vunpack.c.l.b16 %v1892
      %v3463 = vunpack.c.l.b16 %v1893
      %v3464 = vunpack.c.l.b16 %v1894
      %v3465 = vunpack.c.l.b16 %v1895
      %v3466 = vunpack.c.l.b16 %v1896
      %v3467 = vunpack.c.l.b16 %v1897
      %v3468 = vunpack.c.l.b16 %v1898
      %v3469 = vunpack.c.l.b16 %v1899
      %v3470 = vunpack.c.l.b16 %v1900
      %v3471 = vunpack.c.l.b16 %v1901
      %v3472 = vunpack.c.l.b16 %v1902
      %v3473 = vunpack.c.l.b16 %v1903
      %v3474 = vunpack.c.l.b16 %v1904
      %v3475 = vpack.c.b16 %v3396, %v3395
      %v3476 = vpack.c.b16 %v3398, %v3397
      %v3477 = vpack.c.b16 %v3400, %v3399
      %v3478 = vpack.c.b16 %v3402, %v3401
      %v3479 = vpack.c.b16 %v3404, %v3403
      %v3480 = vpack.c.b16 %v3406, %v3405
      %v3481 = vpack.c.b16 %v3408, %v3407
      %v3482 = vpack.c.b16 %v3410, %v3409
      %v3483 = vpack.c.b16 %v3412, %v3411
      %v3484 = vpack.c.b16 %v3414, %v3413
      %v3485 = vpack.c.b16 %v3416, %v3415
      %v3486 = vpack.c.b16 %v3418, %v3417
      %v3487 = vpack.c.b16 %v3420, %v3419
      %v3488 = vpack.c.b16 %v3422, %v3421
      %v3489 = vpack.c.b16 %v3424, %v3423
      %v3490 = vpack.c.b16 %v3426, %v3425
      %v3491 = vpack.c.b16 %v3428, %v3427
      %v3492 = vpack.c.b16 %v3430, %v3429
      %v3493 = vpack.c.b16 %v3432, %v3431
      %v3494 = vpack.c.b16 %v3434, %v3433
      %v3495 = vpack.c.b16 %v3436, %v3435
      %v3496 = vpack.c.b16 %v3438, %v3437
      %v3497 = vpack.c.b16 %v3440, %v3439
      %v3498 = vpack.c.b16 %v3442, %v3441
      %v3499 = vpack.c.b16 %v3444, %v3443
      %v3500 = vpack.c.b16 %v3446, %v3445
      %v3501 = vpack.c.b16 %v3448, %v3447
      %v3502 = vpack.c.b16 %v3450, %v3449
      %v3503 = vpack.c.b16 %v3452, %v3451
      %v3504 = vpack.c.b16 %v3454, %v3453
      %v3505 = vpack.c.b16 %v3456, %v3455
      %v3506 = vpack.c.b16 %v3458, %v3457
      %v3507 = vpack.c.b16 %v3460, %v3459
      %v3508 = vpack.c.b16 %v3462, %v3461
      %v3509 = vpack.c.b16 %v3464, %v3463
      %v3510 = vpack.c.b16 %v3466, %v3465
      %v3511 = vpack.c.b16 %v3468, %v3467
      %v3512 = vpack.c.b16 %v3470, %v3469
      %v3513 = vpack.c.b16 %v3472, %v3471
      %v3514 = vpack.c.b16 %v3474, %v3473
      %3555 = vmatprep.subr.bf16.mxu0 0
      %3556 = vmatpush1.bf16.msra.mxu0 %v3482
      %3557 = vmatprep.subr.bf16.mxu0 0
      %3558 = vmatpush1.bf16.msra.mxu0 %v3481
      %3559 = vmatprep.subr.bf16.mxu0 0
      %3560 = vmatpush1.bf16.msra.mxu0 %v3480
      %3561 = vmatprep.subr.bf16.mxu0 0
      %3562 = vmatpush1.bf16.msra.mxu0 %v3479
      %3563 = vmatprep.subr.bf16.mxu0 0
      %3564 = vmatpush1.bf16.msra.mxu0 %v3478
      %3565 = vmatprep.subr.bf16.mxu0 0
      %3566 = vmatpush1.bf16.msra.mxu0 %v3477
      %3567 = vmatprep.subr.bf16.mxu0 0
      %3568 = vmatpush1.bf16.msra.mxu0 %v3476
      %3569 = vmatprep.subr.bf16.mxu0 0
      %3570 = vmatpush1.bf16.msra.mxu0 %v3475
      %3571 = vmatprep.subr.bf16.mxu0 0
      %3572 = vmatpush2.bf16.msra.mxu0 %v3490
      %3573 = vmatprep.subr.bf16.mxu0 0
      %3574 = vmatpush2.bf16.msra.mxu0 %v3489
      %3575 = vmatprep.subr.bf16.mxu0 0
      %3576 = vmatpush2.bf16.msra.mxu0 %v3488
      %3577 = vmatprep.subr.bf16.mxu0 0
      %3578 = vmatpush2.bf16.msra.mxu0 %v3487
      %3579 = vmatprep.subr.bf16.mxu0 0
      %3580 = vmatpush2.bf16.msra.mxu0 %v3486
      %3581 = vmatprep.subr.bf16.mxu0 0
      %3582 = vmatpush2.bf16.msra.mxu0 %v3485
      %3583 = vmatprep.subr.bf16.mxu0 0
      %3584 = vmatpush2.bf16.msra.mxu0 %v3484
      %3585 = vmatprep.subr.bf16.mxu0 0
      %3586 = vmatpush2.bf16.msra.mxu0 %v3483
      %3587 = vmatprep.mubr.bf16.mxu0 %v3196
      %3588 = vmatmul.mubr.bf16.gmra.mxu0 %v3195
      %v3589 = vpop.f32.mrf.mxu0
      %v3590 = vadd.f32 %v2909, %v3589
      %v3591 = vpop.f32.mrf.mxu0
      %v3592 = vpop.f32.mrf.mxu0
      %v3593 = vadd.f32 %v2912, %v3592
      %v3594 = vpop.f32.mrf.mxu0
      %3595 = vmatprep.mubr.bf16.mxu0 %v3201
      %3596 = vmatmul.mubr.bf16.gmra.mxu0 %v3200
      %v3597 = vpop.f32.mrf.mxu0
      %v3598 = vadd.f32 %v2917, %v3597
      %v3599 = vpop.f32.mrf.mxu0
      %v3600 = vpop.f32.mrf.mxu0
      %v3601 = vadd.f32 %v2920, %v3600
      %v3602 = vpop.f32.mrf.mxu0
      %3603 = vmatprep.mubr.bf16.mxu0 %v3206
      %3604 = vmatmul.mubr.bf16.gmra.mxu0 %v3205
      %v3605 = vpop.f32.mrf.mxu0
      %v3606 = vadd.f32 %v2925, %v3605
      %v3607 = vpop.f32.mrf.mxu0
      %v3608 = vpop.f32.mrf.mxu0
      %v3609 = vadd.f32 %v2928, %v3608
      %v3610 = vpop.f32.mrf.mxu0
      %3611 = vmatprep.mubr.bf16.mxu0 %v3211
      %3612 = vmatmul.mubr.bf16.gmra.mxu0 %v3210
      %v3613 = vpop.f32.mrf.mxu0
      %v3614 = vadd.f32 %v2933, %v3613
      %v3615 = vpop.f32.mrf.mxu0
      %v3616 = vpop.f32.mrf.mxu0
      %v3617 = vadd.f32 %v2936, %v3616
      %v3618 = vpop.f32.mrf.mxu0
      %3619 = vmatprep.mubr.bf16.mxu0 %v3216
      %3620 = vmatmul.mubr.bf16.gmra.mxu0 %v3215
      %v3621 = vpop.f32.mrf.mxu0
      %v3622 = vadd.f32 %v2941, %v3621
      %v3623 = vpop.f32.mrf.mxu0
      %v3624 = vpop.f32.mrf.mxu0
      %v3625 = vadd.f32 %v2944, %v3624
      %v3626 = vpop.f32.mrf.mxu0
      %3627 = vmatprep.mubr.bf16.mxu0 %v3221
      %3628 = vmatmul.mubr.bf16.gmra.mxu0 %v3220
      %v3629 = vpop.f32.mrf.mxu0
      %v3630 = vadd.f32 %v2949, %v3629
      %v3631 = vpop.f32.mrf.mxu0
      %v3632 = vpop.f32.mrf.mxu0
      %v3633 = vadd.f32 %v2952, %v3632
      %v3634 = vpop.f32.mrf.mxu0
      %3635 = vmatprep.mubr.bf16.mxu0 %v3226
      %3636 = vmatmul.mubr.bf16.gmra.mxu0 %v3225
      %v3637 = vpop.f32.mrf.mxu0
      %v3638 = vadd.f32 %v2957, %v3637
      %v3639 = vpop.f32.mrf.mxu0
      %v3640 = vpop.f32.mrf.mxu0
      %v3641 = vadd.f32 %v2960, %v3640
      %v3642 = vpop.f32.mrf.mxu0
      %3643 = vmatprep.mubr.bf16.mxu0 %v3231
      %3644 = vmatmul.mubr.bf16.gmra.mxu0 %v3230
      %v3645 = vpop.f32.mrf.mxu0
      %v3646 = vadd.f32 %v2965, %v3645
      %v3647 = vpop.f32.mrf.mxu0
      %v3648 = vpop.f32.mrf.mxu0
      %v3649 = vadd.f32 %v2968, %v3648
      %v3650 = vpop.f32.mrf.mxu0
      %3651 = vmatprep.mubr.bf16.mxu0 %v3236
      %3652 = vmatmul.mubr.bf16.gmra.mxu0 %v3235
      %v3653 = vpop.f32.mrf.mxu0
      %v3654 = vadd.f32 %v2973, %v3653
      %v3655 = vpop.f32.mrf.mxu0
      %v3656 = vpop.f32.mrf.mxu0
      %v3657 = vadd.f32 %v2976, %v3656
      %v3658 = vpop.f32.mrf.mxu0
      %3659 = vmatprep.mubr.bf16.mxu0 %v3241
      %3660 = vmatmul.mubr.bf16.gmra.mxu0 %v3240
      %v3661 = vpop.f32.mrf.mxu0
      %v3662 = vadd.f32 %v2981, %v3661
      %v3663 = vpop.f32.mrf.mxu0
      %v3664 = vpop.f32.mrf.mxu0
      %v3665 = vadd.f32 %v2984, %v3664
      %v3666 = vpop.f32.mrf.mxu0
      %3667 = vmatprep.mubr.bf16.mxu0 %v3246
      %3668 = vmatmul.mubr.bf16.gmra.mxu0 %v3245
      %v3669 = vpop.f32.mrf.mxu0
      %v3670 = vadd.f32 %v2989, %v3669
      %v3671 = vpop.f32.mrf.mxu0
      %v3672 = vpop.f32.mrf.mxu0
      %v3673 = vadd.f32 %v2992, %v3672
      %v3674 = vpop.f32.mrf.mxu0
      %3675 = vmatprep.mubr.bf16.mxu0 %v3251
      %3676 = vmatmul.mubr.bf16.gmra.mxu0 %v3250
      %v3677 = vpop.f32.mrf.mxu0
      %v3678 = vadd.f32 %v2997, %v3677
      %v3679 = vpop.f32.mrf.mxu0
      %v3680 = vpop.f32.mrf.mxu0
      %v3681 = vadd.f32 %v3000, %v3680
      %v3682 = vpop.f32.mrf.mxu0
      %3683 = vdwg.mxu0
      %3684 = vmatprep.subr.bf16.mxu0 0
      %3685 = vmatpush1.bf16.msra.mxu0 %v3498
      %3686 = vmatprep.subr.bf16.mxu0 0
      %3687 = vmatpush1.bf16.msra.mxu0 %v3497
      %3688 = vmatprep.subr.bf16.mxu0 0
      %3689 = vmatpush1.bf16.msra.mxu0 %v3496
      %3690 = vmatprep.subr.bf16.mxu0 0
      %3691 = vmatpush1.bf16.msra.mxu0 %v3495
      %3692 = vmatprep.subr.bf16.mxu0 0
      %3693 = vmatpush1.bf16.msra.mxu0 %v3494
      %3694 = vmatprep.subr.bf16.mxu0 0
      %3695 = vmatpush1.bf16.msra.mxu0 %v3493
      %3696 = vmatprep.subr.bf16.mxu0 0
      %3697 = vmatpush1.bf16.msra.mxu0 %v3492
      %3698 = vmatprep.subr.bf16.mxu0 0
      %3699 = vmatpush1.bf16.msra.mxu0 %v3491
      %3700 = vmatprep.subr.bf16.mxu0 0
      %3701 = vmatpush2.bf16.msra.mxu0 %v3506
      %3702 = vmatprep.subr.bf16.mxu0 0
      %3703 = vmatpush2.bf16.msra.mxu0 %v3505
      %3704 = vmatprep.subr.bf16.mxu0 0
      %3705 = vmatpush2.bf16.msra.mxu0 %v3504
      %3706 = vmatprep.subr.bf16.mxu0 0
      %3707 = vmatpush2.bf16.msra.mxu0 %v3503
      %3708 = vmatprep.subr.bf16.mxu0 0
      %3709 = vmatpush2.bf16.msra.mxu0 %v3502
      %3710 = vmatprep.subr.bf16.mxu0 0
      %3711 = vmatpush2.bf16.msra.mxu0 %v3501
      %3712 = vmatprep.subr.bf16.mxu0 0
      %3713 = vmatpush2.bf16.msra.mxu0 %v3500
      %3714 = vmatprep.subr.bf16.mxu0 0
      %3715 = vmatpush2.bf16.msra.mxu0 %v3499
      %3716 = vmatprep.mubr.bf16.mxu0 %v3198
      %3717 = vmatmul.mubr.bf16.gmra.mxu0 %v3197
      %v3718 = vpop.f32.mrf.mxu0
      %v3719 = vadd.f32 %v3590, %v3718
      %v3720 = vpop.f32.mrf.mxu0
      %v3721 = vpop.f32.mrf.mxu0
      %v3722 = vadd.f32 %v3593, %v3721
      %v3723 = vpop.f32.mrf.mxu0
      %3724 = vmatprep.mubr.bf16.mxu0 %v3203
      %3725 = vmatmul.mubr.bf16.gmra.mxu0 %v3202
      %v3726 = vpop.f32.mrf.mxu0
      %v3727 = vadd.f32 %v3598, %v3726
      %v3728 = vpop.f32.mrf.mxu0
      %v3729 = vpop.f32.mrf.mxu0
      %v3730 = vadd.f32 %v3601, %v3729
      %v3731 = vpop.f32.mrf.mxu0
      %3732 = vmatprep.mubr.bf16.mxu0 %v3208
      %3733 = vmatmul.mubr.bf16.gmra.mxu0 %v3207
      %v3734 = vpop.f32.mrf.mxu0
      %v3735 = vadd.f32 %v3606, %v3734
      %v3736 = vpop.f32.mrf.mxu0
      %v3737 = vpop.f32.mrf.mxu0
      %v3738 = vadd.f32 %v3609, %v3737
      %v3739 = vpop.f32.mrf.mxu0
      %3740 = vmatprep.mubr.bf16.mxu0 %v3213
      %3741 = vmatmul.mubr.bf16.gmra.mxu0 %v3212
      %v3742 = vpop.f32.mrf.mxu0
      %v3743 = vadd.f32 %v3614, %v3742
      %v3744 = vpop.f32.mrf.mxu0
      %v3745 = vpop.f32.mrf.mxu0
      %v3746 = vadd.f32 %v3617, %v3745
      %v3747 = vpop.f32.mrf.mxu0
      %3748 = vmatprep.mubr.bf16.mxu0 %v3218
      %3749 = vmatmul.mubr.bf16.gmra.mxu0 %v3217
      %v3750 = vpop.f32.mrf.mxu0
      %v3751 = vadd.f32 %v3622, %v3750
      %v3752 = vpop.f32.mrf.mxu0
      %v3753 = vpop.f32.mrf.mxu0
      %v3754 = vadd.f32 %v3625, %v3753
      %v3755 = vpop.f32.mrf.mxu0
      %3756 = vmatprep.mubr.bf16.mxu0 %v3223
      %3757 = vmatmul.mubr.bf16.gmra.mxu0 %v3222
      %v3758 = vpop.f32.mrf.mxu0
      %v3759 = vadd.f32 %v3630, %v3758
      %v3760 = vpop.f32.mrf.mxu0
      %v3761 = vpop.f32.mrf.mxu0
      %v3762 = vadd.f32 %v3633, %v3761
      %v3763 = vpop.f32.mrf.mxu0
      %3764 = vmatprep.mubr.bf16.mxu0 %v3228
      %3765 = vmatmul.mubr.bf16.gmra.mxu0 %v3227
      %v3766 = vpop.f32.mrf.mxu0
      %v3767 = vadd.f32 %v3638, %v3766
      %v3768 = vpop.f32.mrf.mxu0
      %v3769 = vpop.f32.mrf.mxu0
      %v3770 = vadd.f32 %v3641, %v3769
      %v3771 = vpop.f32.mrf.mxu0
      %3772 = vmatprep.mubr.bf16.mxu0 %v3233
      %3773 = vmatmul.mubr.bf16.gmra.mxu0 %v3232
      %v3774 = vpop.f32.mrf.mxu0
      %v3775 = vadd.f32 %v3646, %v3774
      %v3776 = vpop.f32.mrf.mxu0
      %v3777 = vpop.f32.mrf.mxu0
      %v3778 = vadd.f32 %v3649, %v3777
      %v3779 = vpop.f32.mrf.mxu0
      %3780 = vmatprep.mubr.bf16.mxu0 %v3238
      %3781 = vmatmul.mubr.bf16.gmra.mxu0 %v3237
      %v3782 = vpop.f32.mrf.mxu0
      %v3783 = vadd.f32 %v3654, %v3782
      %v3784 = vpop.f32.mrf.mxu0
      %v3785 = vpop.f32.mrf.mxu0
      %v3786 = vadd.f32 %v3657, %v3785
      %v3787 = vpop.f32.mrf.mxu0
      %3788 = vmatprep.mubr.bf16.mxu0 %v3243
      %3789 = vmatmul.mubr.bf16.gmra.mxu0 %v3242
      %v3790 = vpop.f32.mrf.mxu0
      %v3791 = vadd.f32 %v3662, %v3790
      %v3792 = vpop.f32.mrf.mxu0
      %v3793 = vpop.f32.mrf.mxu0
      %v3794 = vadd.f32 %v3665, %v3793
      %v3795 = vpop.f32.mrf.mxu0
      %3796 = vmatprep.mubr.bf16.mxu0 %v3248
      %3797 = vmatmul.mubr.bf16.gmra.mxu0 %v3247
      %v3798 = vpop.f32.mrf.mxu0
      %v3799 = vadd.f32 %v3670, %v3798
      %v3800 = vpop.f32.mrf.mxu0
      %v3801 = vpop.f32.mrf.mxu0
      %v3802 = vadd.f32 %v3673, %v3801
      %v3803 = vpop.f32.mrf.mxu0
      %3804 = vmatprep.mubr.bf16.mxu0 %v3253
      %3805 = vmatmul.mubr.bf16.gmra.mxu0 %v3252
      %v3806 = vpop.f32.mrf.mxu0
      %v3807 = vadd.f32 %v3678, %v3806
      %v3808 = vpop.f32.mrf.mxu0
      %v3809 = vpop.f32.mrf.mxu0
      %v3810 = vadd.f32 %v3681, %v3809
      %v3811 = vpop.f32.mrf.mxu0
      %3812 = vdwg.mxu0
      %3813 = vmatprep.subr.bf16.mxu0 0
      %3814 = vmatpush1.bf16.msra.mxu0 %v3514
      %3815 = vmatprep.subr.bf16.mxu0 0
      %3816 = vmatpush1.bf16.msra.mxu0 %v3513
      %3817 = vmatprep.subr.bf16.mxu0 0
      %3818 = vmatpush1.bf16.msra.mxu0 %v3512
      %3819 = vmatprep.subr.bf16.mxu0 0
      %3820 = vmatpush1.bf16.msra.mxu0 %v3511
      %3821 = vmatprep.subr.bf16.mxu0 0
      %3822 = vmatpush1.bf16.msra.mxu0 %v3510
      %3823 = vmatprep.subr.bf16.mxu0 0
      %3824 = vmatpush1.bf16.msra.mxu0 %v3509
      %3825 = vmatprep.subr.bf16.mxu0 0
      %3826 = vmatpush1.bf16.msra.mxu0 %v3508
      %3827 = vmatprep.subr.bf16.mxu0 0
      %3828 = vmatpush1.bf16.msra.mxu0 %v3507
      %3829 = vmatprep.subr.bf16.mxu0 0
      %3830 = vmatpush2.bf16.msra.mxu0 0
      %3831 = vmatprep.subr.bf16.mxu0 0
      %3832 = vmatpush2.bf16.msra.mxu0 0
      %3833 = vmatprep.subr.bf16.mxu0 0
      %3834 = vmatpush2.bf16.msra.mxu0 0
      %3835 = vmatprep.subr.bf16.mxu0 0
      %3836 = vmatpush2.bf16.msra.mxu0 0
      %3837 = vmatprep.subr.bf16.mxu0 0
      %3838 = vmatpush2.bf16.msra.mxu0 0
      %3839 = vmatprep.subr.bf16.mxu0 0
      %3840 = vmatpush2.bf16.msra.mxu0 0
      %3841 = vmatprep.subr.bf16.mxu0 0
      %3842 = vmatpush2.bf16.msra.mxu0 0
      %3843 = vmatprep.subr.bf16.mxu0 0
      %3844 = vmatpush2.bf16.msra.mxu0 0
      %3845 = vmatprep.mubr.bf16.mxu0 0
      %3846 = vmatmul.mubr.bf16.gmra.mxu0 %v3199
      %v3847 = vpop.f32.mrf.mxu0
      %v3848 = vadd.f32 %v3719, %v3847
      %v3849 = vpop.f32.mrf.mxu0
      %v3850 = vpop.f32.mrf.mxu0
      %v3851 = vadd.f32 %v3722, %v3850
      %v3852 = vpop.f32.mrf.mxu0
      %3853 = vmatprep.mubr.bf16.mxu0 0
      %3854 = vmatmul.mubr.bf16.gmra.mxu0 %v3204
      %v3855 = vpop.f32.mrf.mxu0
      %v3856 = vadd.f32 %v3727, %v3855
      %v3857 = vpop.f32.mrf.mxu0
      %v3858 = vpop.f32.mrf.mxu0
      %v3859 = vadd.f32 %v3730, %v3858
      %v3860 = vpop.f32.mrf.mxu0
      %3861 = vmatprep.mubr.bf16.mxu0 0
      %3862 = vmatmul.mubr.bf16.gmra.mxu0 %v3209
      %v3863 = vpop.f32.mrf.mxu0
      %v3864 = vadd.f32 %v3735, %v3863
      %v3865 = vpop.f32.mrf.mxu0
      %v3866 = vpop.f32.mrf.mxu0
      %v3867 = vadd.f32 %v3738, %v3866
      %v3868 = vpop.f32.mrf.mxu0
      %3869 = vmatprep.mubr.bf16.mxu0 0
      %3870 = vmatmul.mubr.bf16.gmra.mxu0 %v3214
      %v3871 = vpop.f32.mrf.mxu0
      %v3872 = vadd.f32 %v3743, %v3871
      %v3873 = vpop.f32.mrf.mxu0
      %v3874 = vpop.f32.mrf.mxu0
      %v3875 = vadd.f32 %v3746, %v3874
      %v3876 = vpop.f32.mrf.mxu0
      %3877 = vmatprep.mubr.bf16.mxu0 0
      %3878 = vmatmul.mubr.bf16.gmra.mxu0 %v3219
      %v3879 = vpop.f32.mrf.mxu0
      %v3880 = vadd.f32 %v3751, %v3879
      %v3881 = vpop.f32.mrf.mxu0
      %v3882 = vpop.f32.mrf.mxu0
      %v3883 = vadd.f32 %v3754, %v3882
      %v3884 = vpop.f32.mrf.mxu0
      %3885 = vmatprep.mubr.bf16.mxu0 0
      %3886 = vmatmul.mubr.bf16.gmra.mxu0 %v3224
      %v3887 = vpop.f32.mrf.mxu0
      %v3888 = vadd.f32 %v3759, %v3887
      %v3889 = vpop.f32.mrf.mxu0
      %v3890 = vpop.f32.mrf.mxu0
      %v3891 = vadd.f32 %v3762, %v3890
      %v3892 = vpop.f32.mrf.mxu0
      %3893 = vmatprep.mubr.bf16.mxu0 0
      %3894 = vmatmul.mubr.bf16.gmra.mxu0 %v3229
      %v3895 = vpop.f32.mrf.mxu0
      %v3896 = vadd.f32 %v3767, %v3895
      %v3897 = vpop.f32.mrf.mxu0
      %v3898 = vpop.f32.mrf.mxu0
      %v3899 = vadd.f32 %v3770, %v3898
      %v3900 = vpop.f32.mrf.mxu0
      %3901 = vmatprep.mubr.bf16.mxu0 0
      %3902 = vmatmul.mubr.bf16.gmra.mxu0 %v3234
      %v3903 = vpop.f32.mrf.mxu0
      %v3904 = vadd.f32 %v3775, %v3903
      %v3905 = vpop.f32.mrf.mxu0
      %v3906 = vpop.f32.mrf.mxu0
      %v3907 = vadd.f32 %v3778, %v3906
      %v3908 = vpop.f32.mrf.mxu0
      %3909 = vmatprep.mubr.bf16.mxu0 0
      %3910 = vmatmul.mubr.bf16.gmra.mxu0 %v3239
      %v3911 = vpop.f32.mrf.mxu0
      %v3912 = vadd.f32 %v3783, %v3911
      %v3913 = vpop.f32.mrf.mxu0
      %v3914 = vpop.f32.mrf.mxu0
      %v3915 = vadd.f32 %v3786, %v3914
      %v3916 = vpop.f32.mrf.mxu0
      %3917 = vmatprep.mubr.bf16.mxu0 0
      %3918 = vmatmul.mubr.bf16.gmra.mxu0 %v3244
      %v3919 = vpop.f32.mrf.mxu0
      %v3920 = vadd.f32 %v3791, %v3919
      %v3921 = vpop.f32.mrf.mxu0
      %v3922 = vpop.f32.mrf.mxu0
      %v3923 = vadd.f32 %v3794, %v3922
      %v3924 = vpop.f32.mrf.mxu0
      %3925 = vmatprep.mubr.bf16.mxu0 0
      %3926 = vmatmul.mubr.bf16.gmra.mxu0 %v3249
      %v3927 = vpop.f32.mrf.mxu0
      %v3928 = vadd.f32 %v3799, %v3927
      %v3929 = vpop.f32.mrf.mxu0
      %v3930 = vpop.f32.mrf.mxu0
      %v3931 = vadd.f32 %v3802, %v3930
      %v3932 = vpop.f32.mrf.mxu0
      %3933 = vmatprep.mubr.bf16.mxu0 0
      %3934 = vmatmul.mubr.bf16.gmra.mxu0 %v3254
      %v3935 = vpop.f32.mrf.mxu0
      %v3936 = vadd.f32 %v3807, %v3935
      %v3937 = vpop.f32.mrf.mxu0
      %v3938 = vpop.f32.mrf.mxu0
      %v3939 = vadd.f32 %v3810, %v3938
      %v3940 = vpop.f32.mrf.mxu0
      %3941 = vdwg.mxu0
      %s3942 = sadd.s32 %s1747, 32
      %s3943 = sshra.s32 %s3942, 3
      %s3944 = sand.u32 %s3942, 7
      %s3945 = smul.u32 %s3943, 5
      %s3946 = smul.addr %s3945, 4
      %s3947 = scalar_lea.vmem [#allocation2], %s3946
      %v3948 = vld [vmem:[%s3947] sm:$0xff]
      %v3949 = vld [vmem:[%s3947 + $0x8] sm:$0xff]
      %v3950 = vld [vmem:[%s3947 + $0x10] sm:$0xf]
      %v3951 = vld [vmem:[%s3947 + $0x14] sm:$0xff]
      %v3952 = vld [vmem:[%s3947 + $0x1c] sm:$0xff]
      %v3953 = vld [vmem:[%s3947 + $0x24] sm:$0xf]
      %v3954 = vld [vmem:[%s3947 + $0x28] sm:$0xff]
      %v3955 = vld [vmem:[%s3947 + $0x30] sm:$0xff]
      %v3956 = vld [vmem:[%s3947 + $0x38] sm:$0xf]
      %v3957 = vld [vmem:[%s3947 + $0x3c] sm:$0xff]
      %v3958 = vld [vmem:[%s3947 + $0x44] sm:$0xff]
      %v3959 = vld [vmem:[%s3947 + $0x4c] sm:$0xf]
      %v3960 = vld [vmem:[%s3947 + $0x50] sm:$0xff]
      %v3961 = vld [vmem:[%s3947 + $0x58] sm:$0xff]
      %v3962 = vld [vmem:[%s3947 + $0x60] sm:$0xf]
      %v3963 = vld [vmem:[%s3947 + $0x64] sm:$0xff]
      %v3964 = vld [vmem:[%s3947 + $0x6c] sm:$0xff]
      %v3965 = vld [vmem:[%s3947 + $0x74] sm:$0xf]
      %v3966 = vld [vmem:[%s3947 + $0x78] sm:$0xff]
      %v3967 = vld [vmem:[%s3947 + $0x80] sm:$0xff]
      %v3968 = vld [vmem:[%s3947 + $0x88] sm:$0xf]
      %v3969 = vld [vmem:[%s3947 + $0x8c] sm:$0xff]
      %v3970 = vld [vmem:[%s3947 + $0x94] sm:$0xff]
      %v3971 = vld [vmem:[%s3947 + $0x9c] sm:$0xf]
      %v3972 = vld [vmem:[%s3947 + $0xa0] sm:$0xff]
      %v3973 = vld [vmem:[%s3947 + $0xa8] sm:$0xff]
      %v3974 = vld [vmem:[%s3947 + $0xb0] sm:$0xf]
      %v3975 = vld [vmem:[%s3947 + $0xb4] sm:$0xff]
      %v3976 = vld [vmem:[%s3947 + $0xbc] sm:$0xff]
      %v3977 = vld [vmem:[%s3947 + $0xc4] sm:$0xf]
      %v3978 = vld [vmem:[%s3947 + $0xc8] sm:$0xff]
      %v3979 = vld [vmem:[%s3947 + $0xd0] sm:$0xff]
      %v3980 = vld [vmem:[%s3947 + $0xd8] sm:$0xf]
      %v3981 = vld [vmem:[%s3947 + $0xdc] sm:$0xff]
      %v3982 = vld [vmem:[%s3947 + $0xe4] sm:$0xff]
      %v3983 = vld [vmem:[%s3947 + $0xec] sm:$0xf]
      %v3984 = vld [vmem:[%s3947 + $0xf0] sm:$0xff]
      %v3985 = vld [vmem:[%s3947 + $0xf8] sm:$0xff]
      %v3986 = vld [vmem:[%s3947 + $0x100] sm:$0xf]
      %v3987 = vld [vmem:[%s3947 + $0x104] sm:$0xff]
      %v3988 = vld [vmem:[%s3947 + $0x10c] sm:$0xff]
      %v3989 = vld [vmem:[%s3947 + $0x114] sm:$0xf]
      %v3990 = vld [vmem:[%s3947 + $0x118] sm:$0xff]
      %v3991 = vld [vmem:[%s3947 + $0x120] sm:$0xff]
      %v3992 = vld [vmem:[%s3947 + $0x128] sm:$0xf]
      %v3993 = vld [vmem:[%s3947 + $0x12c] sm:$0xff]
      %v3994 = vld [vmem:[%s3947 + $0x134] sm:$0xff]
      %v3995 = vld [vmem:[%s3947 + $0x13c] sm:$0xf]
      %v3996 = vld [vmem:[%s3947 + $0x140] sm:$0xff]
      %v3997 = vld [vmem:[%s3947 + $0x148] sm:$0xff]
      %v3998 = vld [vmem:[%s3947 + $0x150] sm:$0xf]
      %v3999 = vld [vmem:[%s3947 + $0x154] sm:$0xff]
      %v4000 = vld [vmem:[%s3947 + $0x15c] sm:$0xff]
      %v4001 = vld [vmem:[%s3947 + $0x164] sm:$0xf]
      %v4002 = vld [vmem:[%s3947 + $0x168] sm:$0xff]
      %v4003 = vld [vmem:[%s3947 + $0x170] sm:$0xff]
      %v4004 = vld [vmem:[%s3947 + $0x178] sm:$0xf]
      %v4005 = vld [vmem:[%s3947 + $0x17c] sm:$0xff]
      %v4006 = vld [vmem:[%s3947 + $0x184] sm:$0xff]
      %v4007 = vld [vmem:[%s3947 + $0x18c] sm:$0xf]
      %v4008 = vld [vmem:[%s3947 + $0x190] sm:$0xff]
      %v4009 = vld [vmem:[%s3947 + $0x198] sm:$0xff]
      %v4010 = vld [vmem:[%s3947 + $0x1a0] sm:$0xf]
      %v4011 = vld [vmem:[%s3947 + $0x1a4] sm:$0xff]
      %v4012 = vld [vmem:[%s3947 + $0x1ac] sm:$0xff]
      %v4013 = vld [vmem:[%s3947 + $0x1b4] sm:$0xf]
      %v4014 = vld [vmem:[%s3947 + $0x1b8] sm:$0xff]
      %v4015 = vld [vmem:[%s3947 + $0x1c0] sm:$0xff]
      %v4016 = vld [vmem:[%s3947 + $0x1c8] sm:$0xf]
      %v4017 = vld [vmem:[%s3947 + $0x1cc] sm:$0xff]
      %v4018 = vld [vmem:[%s3947 + $0x1d4] sm:$0xff]
      %v4019 = vld [vmem:[%s3947 + $0x1dc] sm:$0xf]
      %s4020 = scalar_lea.vmem %s3, 640
      %v4021 = vld [vmem:[%s4020] sm:$0xf]
      %v4022 = vld [vmem:[%s4020 + $0x4] sm:$0xf]
      %v4023 = vld [vmem:[%s4020 + $0x8] sm:$0xf]
      %v4024 = vld [vmem:[%s4020 + $0xc] sm:$0xf]
      %v4025 = vld [vmem:[%s4020 + $0x10] sm:$0xf]
      %v4026 = vld [vmem:[%s4020 + $0x14] sm:$0xf]
      %v4027 = vld [vmem:[%s4020 + $0x18] sm:$0xf]
      %v4028 = vld [vmem:[%s4020 + $0x1c] sm:$0xf]
      %v4029 = vld [vmem:[%s4020 + $0x20] sm:$0xf]
      %v4030 = vld [vmem:[%s4020 + $0x24] sm:$0xf]
      %v4031 = vld [vmem:[%s4020 + $0x28] sm:$0xf]
      %v4032 = vld [vmem:[%s4020 + $0x2c] sm:$0xf]
      %v4033 = vld [vmem:[%s4020 + $0x30] sm:$0xf]
      %v4034 = vld [vmem:[%s4020 + $0x34] sm:$0xf]
      %v4035 = vld [vmem:[%s4020 + $0x38] sm:$0xf]
      %v4036 = vld [vmem:[%s4020 + $0x3c] sm:$0xf]
      %v4037 = vld [vmem:[%s4020 + $0x40] sm:$0xf]
      %v4038 = vld [vmem:[%s4020 + $0x44] sm:$0xf]
      %v4039 = vld [vmem:[%s4020 + $0x48] sm:$0xf]
      %v4040 = vld [vmem:[%s4020 + $0x4c] sm:$0xf]
      %v4041 = vld [vmem:[%s4020 + $0x50] sm:$0xf]
      %v4042 = vld [vmem:[%s4020 + $0x54] sm:$0xf]
      %v4043 = vld [vmem:[%s4020 + $0x58] sm:$0xf]
      %v4044 = vld [vmem:[%s4020 + $0x5c] sm:$0xf]
      %v4045 = vld [vmem:[%s4020 + $0x60] sm:$0xf]
      %v4046 = vld [vmem:[%s4020 + $0x64] sm:$0xf]
      %v4047 = vld [vmem:[%s4020 + $0x68] sm:$0xf]
      %v4048 = vld [vmem:[%s4020 + $0x6c] sm:$0xf]
      %v4049 = vld [vmem:[%s4020 + $0x70] sm:$0xf]
      %v4050 = vld [vmem:[%s4020 + $0x74] sm:$0xf]
      %v4051 = vld [vmem:[%s4020 + $0x78] sm:$0xf]
      %v4052 = vld [vmem:[%s4020 + $0x7c] sm:$0xf]
      %v4053 = vld [vmem:[%s4020 + $0x80] sm:$0xf]
      %v4054 = vld [vmem:[%s4020 + $0x84] sm:$0xf]
      %v4055 = vld [vmem:[%s4020 + $0x88] sm:$0xf]
      %v4056 = vld [vmem:[%s4020 + $0x8c] sm:$0xf]
      %v4057 = vld [vmem:[%s4020 + $0x90] sm:$0xf]
      %v4058 = vld [vmem:[%s4020 + $0x94] sm:$0xf]
      %v4059 = vld [vmem:[%s4020 + $0x98] sm:$0xf]
      %v4060 = vld [vmem:[%s4020 + $0x9c] sm:$0xf]
      %v4061 = vld [vmem:[%s4020 + $0xa0] sm:$0xf]
      %v4062 = vld [vmem:[%s4020 + $0xa4] sm:$0xf]
      %v4063 = vld [vmem:[%s4020 + $0xa8] sm:$0xf]
      %v4064 = vld [vmem:[%s4020 + $0xac] sm:$0xf]
      %v4065 = vld [vmem:[%s4020 + $0xb0] sm:$0xf]
      %v4066 = vld [vmem:[%s4020 + $0xb4] sm:$0xf]
      %v4067 = vld [vmem:[%s4020 + $0xb8] sm:$0xf]
      %v4068 = vld [vmem:[%s4020 + $0xbc] sm:$0xf]
      %v4069 = vld [vmem:[%s4020 + $0xc0] sm:$0xf]
      %v4070 = vld [vmem:[%s4020 + $0xc4] sm:$0xf]
      %v4071 = vld [vmem:[%s4020 + $0xc8] sm:$0xf]
      %v4072 = vld [vmem:[%s4020 + $0xcc] sm:$0xf]
      %v4073 = vld [vmem:[%s4020 + $0xd0] sm:$0xf]
      %v4074 = vld [vmem:[%s4020 + $0xd4] sm:$0xf]
      %v4075 = vld [vmem:[%s4020 + $0xd8] sm:$0xf]
      %v4076 = vld [vmem:[%s4020 + $0xdc] sm:$0xf]
      %v4077 = vld [vmem:[%s4020 + $0xe0] sm:$0xf]
      %v4078 = vld [vmem:[%s4020 + $0xe4] sm:$0xf]
      %v4079 = vld [vmem:[%s4020 + $0xe8] sm:$0xf]
      %v4080 = vld [vmem:[%s4020 + $0xec] sm:$0xf]
      %v4081 = vld [vmem:[%s4020 + $0xf0] sm:$0xf]
      %v4082 = vld [vmem:[%s4020 + $0xf4] sm:$0xf]
      %v4083 = vld [vmem:[%s4020 + $0xf8] sm:$0xf]
      %v4084 = vld [vmem:[%s4020 + $0xfc] sm:$0xf]
      %v4085 = vld [vmem:[%s4020 + $0x100] sm:$0xf]
      %v4086 = vld [vmem:[%s4020 + $0x104] sm:$0xf]
      %v4087 = vld [vmem:[%s4020 + $0x108] sm:$0xf]
      %v4088 = vld [vmem:[%s4020 + $0x10c] sm:$0xf]
      %v4089 = vld [vmem:[%s4020 + $0x110] sm:$0xf]
      %v4090 = vld [vmem:[%s4020 + $0x114] sm:$0xf]
      %v4091 = vld [vmem:[%s4020 + $0x118] sm:$0xf]
      %v4092 = vld [vmem:[%s4020 + $0x11c] sm:$0xf]
      %v4093 = vld [vmem:[%s4020 + $0x120] sm:$0xf]
      %v4094 = vld [vmem:[%s4020 + $0x124] sm:$0xf]
      %v4095 = vld [vmem:[%s4020 + $0x128] sm:$0xf]
      %v4096 = vld [vmem:[%s4020 + $0x12c] sm:$0xf]
      %v4097 = vld [vmem:[%s4020 + $0x130] sm:$0xf]
      %v4098 = vld [vmem:[%s4020 + $0x134] sm:$0xf]
      %v4099 = vld [vmem:[%s4020 + $0x138] sm:$0xf]
      %v4100 = vld [vmem:[%s4020 + $0x13c] sm:$0xf]
      %v4173 = vunpack.c.l.b16 %v3948
      %v4174 = vunpack.c.h.b16 %v3948
      %v4175 = vunpack.c.l.b16 %v3949
      %v4176 = vunpack.c.h.b16 %v3949
      %v4177 = vunpack.c.l.b16 %v3950
      %v4178 = vunpack.c.l.b16 %v3951
      %v4179 = vunpack.c.h.b16 %v3951
      %v4180 = vunpack.c.l.b16 %v3952
      %v4181 = vunpack.c.h.b16 %v3952
      %v4182 = vunpack.c.l.b16 %v3953
      %v4183 = vunpack.c.l.b16 %v3954
      %v4184 = vunpack.c.h.b16 %v3954
      %v4185 = vunpack.c.l.b16 %v3955
      %v4186 = vunpack.c.h.b16 %v3955
      %v4187 = vunpack.c.l.b16 %v3956
      %v4188 = vunpack.c.l.b16 %v3957
      %v4189 = vunpack.c.h.b16 %v3957
      %v4190 = vunpack.c.l.b16 %v3958
      %v4191 = vunpack.c.h.b16 %v3958
      %v4192 = vunpack.c.l.b16 %v3959
      %v4193 = vunpack.c.l.b16 %v3960
      %v4194 = vunpack.c.h.b16 %v3960
      %v4195 = vunpack.c.l.b16 %v3961
      %v4196 = vunpack.c.h.b16 %v3961
      %v4197 = vunpack.c.l.b16 %v3962
      %v4198 = vunpack.c.l.b16 %v3963
      %v4199 = vunpack.c.h.b16 %v3963
      %v4200 = vunpack.c.l.b16 %v3964
      %v4201 = vunpack.c.h.b16 %v3964
      %v4202 = vunpack.c.l.b16 %v3965
      %v4203 = vunpack.c.l.b16 %v3966
      %v4204 = vunpack.c.h.b16 %v3966
      %v4205 = vunpack.c.l.b16 %v3967
      %v4206 = vunpack.c.h.b16 %v3967
      %v4207 = vunpack.c.l.b16 %v3968
      %v4208 = vunpack.c.l.b16 %v3969
      %v4209 = vunpack.c.h.b16 %v3969
      %v4210 = vunpack.c.l.b16 %v3970
      %v4211 = vunpack.c.h.b16 %v3970
      %v4212 = vunpack.c.l.b16 %v3971
      %v4213 = vunpack.c.l.b16 %v3972
      %v4214 = vunpack.c.h.b16 %v3972
      %v4215 = vunpack.c.l.b16 %v3973
      %v4216 = vunpack.c.h.b16 %v3973
      %v4217 = vunpack.c.l.b16 %v3974
      %v4218 = vunpack.c.l.b16 %v3975
      %v4219 = vunpack.c.h.b16 %v3975
      %v4220 = vunpack.c.l.b16 %v3976
      %v4221 = vunpack.c.h.b16 %v3976
      %v4222 = vunpack.c.l.b16 %v3977
      %v4223 = vunpack.c.l.b16 %v3978
      %v4224 = vunpack.c.h.b16 %v3978
      %v4225 = vunpack.c.l.b16 %v3979
      %v4226 = vunpack.c.h.b16 %v3979
      %v4227 = vunpack.c.l.b16 %v3980
      %v4228 = vunpack.c.l.b16 %v3981
      %v4229 = vunpack.c.h.b16 %v3981
      %v4230 = vunpack.c.l.b16 %v3982
      %v4231 = vunpack.c.h.b16 %v3982
      %v4232 = vunpack.c.l.b16 %v3983
      %v4233 = vunpack.c.l.b16 %v3984
      %v4234 = vunpack.c.h.b16 %v3984
      %v4235 = vunpack.c.l.b16 %v3985
      %v4236 = vunpack.c.h.b16 %v3985
      %v4237 = vunpack.c.l.b16 %v3986
      %v4238 = vunpack.c.l.b16 %v3987
      %v4239 = vunpack.c.h.b16 %v3987
      %v4240 = vunpack.c.l.b16 %v3988
      %v4241 = vunpack.c.h.b16 %v3988
      %v4242 = vunpack.c.l.b16 %v3989
      %v4243 = vunpack.c.l.b16 %v3990
      %v4244 = vunpack.c.h.b16 %v3990
      %v4245 = vunpack.c.l.b16 %v3991
      %v4246 = vunpack.c.h.b16 %v3991
      %v4247 = vunpack.c.l.b16 %v3992
      %v4248 = vunpack.c.l.b16 %v3993
      %v4249 = vunpack.c.h.b16 %v3993
      %v4250 = vunpack.c.l.b16 %v3994
      %v4251 = vunpack.c.h.b16 %v3994
      %v4252 = vunpack.c.l.b16 %v3995
      %v4253 = vunpack.c.l.b16 %v3996
      %v4254 = vunpack.c.h.b16 %v3996
      %v4255 = vunpack.c.l.b16 %v3997
      %v4256 = vunpack.c.h.b16 %v3997
      %v4257 = vunpack.c.l.b16 %v3998
      %v4258 = vunpack.c.l.b16 %v3999
      %v4259 = vunpack.c.h.b16 %v3999
      %v4260 = vunpack.c.l.b16 %v4000
      %v4261 = vunpack.c.h.b16 %v4000
      %v4262 = vunpack.c.l.b16 %v4001
      %v4263 = vunpack.c.l.b16 %v4002
      %v4264 = vunpack.c.h.b16 %v4002
      %v4265 = vunpack.c.l.b16 %v4003
      %v4266 = vunpack.c.h.b16 %v4003
      %v4267 = vunpack.c.l.b16 %v4004
      %v4268 = vunpack.c.l.b16 %v4005
      %v4269 = vunpack.c.h.b16 %v4005
      %v4270 = vunpack.c.l.b16 %v4006
      %v4271 = vunpack.c.h.b16 %v4006
      %v4272 = vunpack.c.l.b16 %v4007
      %v4273 = vunpack.c.l.b16 %v4008
      %v4274 = vunpack.c.h.b16 %v4008
      %v4275 = vunpack.c.l.b16 %v4009
      %v4276 = vunpack.c.h.b16 %v4009
      %v4277 = vunpack.c.l.b16 %v4010
      %v4278 = vunpack.c.l.b16 %v4011
      %v4279 = vunpack.c.h.b16 %v4011
      %v4280 = vunpack.c.l.b16 %v4012
      %v4281 = vunpack.c.h.b16 %v4012
      %v4282 = vunpack.c.l.b16 %v4013
      %v4283 = vunpack.c.l.b16 %v4014
      %v4284 = vunpack.c.h.b16 %v4014
      %v4285 = vunpack.c.l.b16 %v4015
      %v4286 = vunpack.c.h.b16 %v4015
      %v4287 = vunpack.c.l.b16 %v4016
      %v4288 = vunpack.c.l.b16 %v4017
      %v4289 = vunpack.c.h.b16 %v4017
      %v4290 = vunpack.c.l.b16 %v4018
      %v4291 = vunpack.c.h.b16 %v4018
      %v4292 = vunpack.c.l.b16 %v4019
      %v4293 = vpack.c.b16 %v4178, %v4173
      %v4294 = vpack.c.b16 %v4179, %v4174
      %v4295 = vpack.c.b16 %v4180, %v4175
      %v4296 = vpack.c.b16 %v4181, %v4176
      %v4297 = vpack.c.b16 %v4182, %v4177
      %v4298 = vpack.c.b16 %v4188, %v4183
      %v4299 = vpack.c.b16 %v4189, %v4184
      %v4300 = vpack.c.b16 %v4190, %v4185
      %v4301 = vpack.c.b16 %v4191, %v4186
      %v4302 = vpack.c.b16 %v4192, %v4187
      %v4303 = vpack.c.b16 %v4198, %v4193
      %v4304 = vpack.c.b16 %v4199, %v4194
      %v4305 = vpack.c.b16 %v4200, %v4195
      %v4306 = vpack.c.b16 %v4201, %v4196
      %v4307 = vpack.c.b16 %v4202, %v4197
      %v4308 = vpack.c.b16 %v4208, %v4203
      %v4309 = vpack.c.b16 %v4209, %v4204
      %v4310 = vpack.c.b16 %v4210, %v4205
      %v4311 = vpack.c.b16 %v4211, %v4206
      %v4312 = vpack.c.b16 %v4212, %v4207
      %v4313 = vpack.c.b16 %v4218, %v4213
      %v4314 = vpack.c.b16 %v4219, %v4214
      %v4315 = vpack.c.b16 %v4220, %v4215
      %v4316 = vpack.c.b16 %v4221, %v4216
      %v4317 = vpack.c.b16 %v4222, %v4217
      %v4318 = vpack.c.b16 %v4228, %v4223
      %v4319 = vpack.c.b16 %v4229, %v4224
      %v4320 = vpack.c.b16 %v4230, %v4225
      %v4321 = vpack.c.b16 %v4231, %v4226
      %v4322 = vpack.c.b16 %v4232, %v4227
      %v4323 = vpack.c.b16 %v4238, %v4233
      %v4324 = vpack.c.b16 %v4239, %v4234
      %v4325 = vpack.c.b16 %v4240, %v4235
      %v4326 = vpack.c.b16 %v4241, %v4236
      %v4327 = vpack.c.b16 %v4242, %v4237
      %v4328 = vpack.c.b16 %v4248, %v4243
      %v4329 = vpack.c.b16 %v4249, %v4244
      %v4330 = vpack.c.b16 %v4250, %v4245
      %v4331 = vpack.c.b16 %v4251, %v4246
      %v4332 = vpack.c.b16 %v4252, %v4247
      %v4333 = vpack.c.b16 %v4258, %v4253
      %v4334 = vpack.c.b16 %v4259, %v4254
      %v4335 = vpack.c.b16 %v4260, %v4255
      %v4336 = vpack.c.b16 %v4261, %v4256
      %v4337 = vpack.c.b16 %v4262, %v4257
      %v4338 = vpack.c.b16 %v4268, %v4263
      %v4339 = vpack.c.b16 %v4269, %v4264
      %v4340 = vpack.c.b16 %v4270, %v4265
      %v4341 = vpack.c.b16 %v4271, %v4266
      %v4342 = vpack.c.b16 %v4272, %v4267
      %v4343 = vpack.c.b16 %v4278, %v4273
      %v4344 = vpack.c.b16 %v4279, %v4274
      %v4345 = vpack.c.b16 %v4280, %v4275
      %v4346 = vpack.c.b16 %v4281, %v4276
      %v4347 = vpack.c.b16 %v4282, %v4277
      %v4348 = vpack.c.b16 %v4288, %v4283
      %v4349 = vpack.c.b16 %v4289, %v4284
      %v4350 = vpack.c.b16 %v4290, %v4285
      %v4351 = vpack.c.b16 %v4291, %v4286
      %v4352 = vpack.c.b16 %v4292, %v4287
      %v4493 = vunpack.c.l.b16 %v4021
      %v4494 = vunpack.c.l.b16 %v4022
      %v4495 = vunpack.c.l.b16 %v4023
      %v4496 = vunpack.c.l.b16 %v4024
      %v4497 = vunpack.c.l.b16 %v4025
      %v4498 = vunpack.c.l.b16 %v4026
      %v4499 = vunpack.c.l.b16 %v4027
      %v4500 = vunpack.c.l.b16 %v4028
      %v4501 = vunpack.c.l.b16 %v4029
      %v4502 = vunpack.c.l.b16 %v4030
      %v4503 = vunpack.c.l.b16 %v4031
      %v4504 = vunpack.c.l.b16 %v4032
      %v4505 = vunpack.c.l.b16 %v4033
      %v4506 = vunpack.c.l.b16 %v4034
      %v4507 = vunpack.c.l.b16 %v4035
      %v4508 = vunpack.c.l.b16 %v4036
      %v4509 = vunpack.c.l.b16 %v4037
      %v4510 = vunpack.c.l.b16 %v4038
      %v4511 = vunpack.c.l.b16 %v4039
      %v4512 = vunpack.c.l.b16 %v4040
      %v4513 = vunpack.c.l.b16 %v4041
      %v4514 = vunpack.c.l.b16 %v4042
      %v4515 = vunpack.c.l.b16 %v4043
      %v4516 = vunpack.c.l.b16 %v4044
      %v4517 = vunpack.c.l.b16 %v4045
      %v4518 = vunpack.c.l.b16 %v4046
      %v4519 = vunpack.c.l.b16 %v4047
      %v4520 = vunpack.c.l.b16 %v4048
      %v4521 = vunpack.c.l.b16 %v4049
      %v4522 = vunpack.c.l.b16 %v4050
      %v4523 = vunpack.c.l.b16 %v4051
      %v4524 = vunpack.c.l.b16 %v4052
      %v4525 = vunpack.c.l.b16 %v4053
      %v4526 = vunpack.c.l.b16 %v4054
      %v4527 = vunpack.c.l.b16 %v4055
      %v4528 = vunpack.c.l.b16 %v4056
      %v4529 = vunpack.c.l.b16 %v4057
      %v4530 = vunpack.c.l.b16 %v4058
      %v4531 = vunpack.c.l.b16 %v4059
      %v4532 = vunpack.c.l.b16 %v4060
      %v4533 = vunpack.c.l.b16 %v4061
      %v4534 = vunpack.c.l.b16 %v4062
      %v4535 = vunpack.c.l.b16 %v4063
      %v4536 = vunpack.c.l.b16 %v4064
      %v4537 = vunpack.c.l.b16 %v4065
      %v4538 = vunpack.c.l.b16 %v4066
      %v4539 = vunpack.c.l.b16 %v4067
      %v4540 = vunpack.c.l.b16 %v4068
      %v4541 = vunpack.c.l.b16 %v4069
      %v4542 = vunpack.c.l.b16 %v4070
      %v4543 = vunpack.c.l.b16 %v4071
      %v4544 = vunpack.c.l.b16 %v4072
      %v4545 = vunpack.c.l.b16 %v4073
      %v4546 = vunpack.c.l.b16 %v4074
      %v4547 = vunpack.c.l.b16 %v4075
      %v4548 = vunpack.c.l.b16 %v4076
      %v4549 = vunpack.c.l.b16 %v4077
      %v4550 = vunpack.c.l.b16 %v4078
      %v4551 = vunpack.c.l.b16 %v4079
      %v4552 = vunpack.c.l.b16 %v4080
      %v4553 = vunpack.c.l.b16 %v4081
      %v4554 = vunpack.c.l.b16 %v4082
      %v4555 = vunpack.c.l.b16 %v4083
      %v4556 = vunpack.c.l.b16 %v4084
      %v4557 = vunpack.c.l.b16 %v4085
      %v4558 = vunpack.c.l.b16 %v4086
      %v4559 = vunpack.c.l.b16 %v4087
      %v4560 = vunpack.c.l.b16 %v4088
      %v4561 = vunpack.c.l.b16 %v4089
      %v4562 = vunpack.c.l.b16 %v4090
      %v4563 = vunpack.c.l.b16 %v4091
      %v4564 = vunpack.c.l.b16 %v4092
      %v4565 = vunpack.c.l.b16 %v4093
      %v4566 = vunpack.c.l.b16 %v4094
      %v4567 = vunpack.c.l.b16 %v4095
      %v4568 = vunpack.c.l.b16 %v4096
      %v4569 = vunpack.c.l.b16 %v4097
      %v4570 = vunpack.c.l.b16 %v4098
      %v4571 = vunpack.c.l.b16 %v4099
      %v4572 = vunpack.c.l.b16 %v4100
      %v4573 = vpack.c.b16 %v4494, %v4493
      %v4574 = vpack.c.b16 %v4496, %v4495
      %v4575 = vpack.c.b16 %v4498, %v4497
      %v4576 = vpack.c.b16 %v4500, %v4499
      %v4577 = vpack.c.b16 %v4502, %v4501
      %v4578 = vpack.c.b16 %v4504, %v4503
      %v4579 = vpack.c.b16 %v4506, %v4505
      %v4580 = vpack.c.b16 %v4508, %v4507
      %v4581 = vpack.c.b16 %v4510, %v4509
      %v4582 = vpack.c.b16 %v4512, %v4511
      %v4583 = vpack.c.b16 %v4514, %v4513
      %v4584 = vpack.c.b16 %v4516, %v4515
      %v4585 = vpack.c.b16 %v4518, %v4517
      %v4586 = vpack.c.b16 %v4520, %v4519
      %v4587 = vpack.c.b16 %v4522, %v4521
      %v4588 = vpack.c.b16 %v4524, %v4523
      %v4589 = vpack.c.b16 %v4526, %v4525
      %v4590 = vpack.c.b16 %v4528, %v4527
      %v4591 = vpack.c.b16 %v4530, %v4529
      %v4592 = vpack.c.b16 %v4532, %v4531
      %v4593 = vpack.c.b16 %v4534, %v4533
      %v4594 = vpack.c.b16 %v4536, %v4535
      %v4595 = vpack.c.b16 %v4538, %v4537
      %v4596 = vpack.c.b16 %v4540, %v4539
      %v4597 = vpack.c.b16 %v4542, %v4541
      %v4598 = vpack.c.b16 %v4544, %v4543
      %v4599 = vpack.c.b16 %v4546, %v4545
      %v4600 = vpack.c.b16 %v4548, %v4547
      %v4601 = vpack.c.b16 %v4550, %v4549
      %v4602 = vpack.c.b16 %v4552, %v4551
      %v4603 = vpack.c.b16 %v4554, %v4553
      %v4604 = vpack.c.b16 %v4556, %v4555
      %v4605 = vpack.c.b16 %v4558, %v4557
      %v4606 = vpack.c.b16 %v4560, %v4559
      %v4607 = vpack.c.b16 %v4562, %v4561
      %v4608 = vpack.c.b16 %v4564, %v4563
      %v4609 = vpack.c.b16 %v4566, %v4565
      %v4610 = vpack.c.b16 %v4568, %v4567
      %v4611 = vpack.c.b16 %v4570, %v4569
      %v4612 = vpack.c.b16 %v4572, %v4571
      %4653 = vmatprep.subr.bf16.mxu0 0
      %4654 = vmatpush1.bf16.msra.mxu0 %v4580
      %4655 = vmatprep.subr.bf16.mxu0 0
      %4656 = vmatpush1.bf16.msra.mxu0 %v4579
      %4657 = vmatprep.subr.bf16.mxu0 0
      %4658 = vmatpush1.bf16.msra.mxu0 %v4578
      %4659 = vmatprep.subr.bf16.mxu0 0
      %4660 = vmatpush1.bf16.msra.mxu0 %v4577
      %4661 = vmatprep.subr.bf16.mxu0 0
      %4662 = vmatpush1.bf16.msra.mxu0 %v4576
      %4663 = vmatprep.subr.bf16.mxu0 0
      %4664 = vmatpush1.bf16.msra.mxu0 %v4575
      %4665 = vmatprep.subr.bf16.mxu0 0
      %4666 = vmatpush1.bf16.msra.mxu0 %v4574
      %4667 = vmatprep.subr.bf16.mxu0 0
      %4668 = vmatpush1.bf16.msra.mxu0 %v4573
      %4669 = vmatprep.subr.bf16.mxu0 0
      %4670 = vmatpush2.bf16.msra.mxu0 %v4588
      %4671 = vmatprep.subr.bf16.mxu0 0
      %4672 = vmatpush2.bf16.msra.mxu0 %v4587
      %4673 = vmatprep.subr.bf16.mxu0 0
      %4674 = vmatpush2.bf16.msra.mxu0 %v4586
      %4675 = vmatprep.subr.bf16.mxu0 0
      %4676 = vmatpush2.bf16.msra.mxu0 %v4585
      %4677 = vmatprep.subr.bf16.mxu0 0
      %4678 = vmatpush2.bf16.msra.mxu0 %v4584
      %4679 = vmatprep.subr.bf16.mxu0 0
      %4680 = vmatpush2.bf16.msra.mxu0 %v4583
      %4681 = vmatprep.subr.bf16.mxu0 0
      %4682 = vmatpush2.bf16.msra.mxu0 %v4582
      %4683 = vmatprep.subr.bf16.mxu0 0
      %4684 = vmatpush2.bf16.msra.mxu0 %v4581
      %4685 = vmatprep.mubr.bf16.mxu0 %v4294
      %4686 = vmatmul.mubr.bf16.gmra.mxu0 %v4293
      %v4687 = vpop.f32.mrf.mxu0
      %v4688 = vadd.f32 0.0, %v4687
      %v4689 = vpop.f32.mrf.mxu0
      %v4690 = vpop.f32.mrf.mxu0
      %v4691 = vadd.f32 0.0, %v4690
      %v4692 = vpop.f32.mrf.mxu0
      %4693 = vmatprep.mubr.bf16.mxu0 %v4299
      %4694 = vmatmul.mubr.bf16.gmra.mxu0 %v4298
      %v4695 = vpop.f32.mrf.mxu0
      %v4696 = vadd.f32 0.0, %v4695
      %v4697 = vpop.f32.mrf.mxu0
      %v4698 = vpop.f32.mrf.mxu0
      %v4699 = vadd.f32 0.0, %v4698
      %v4700 = vpop.f32.mrf.mxu0
      %4701 = vmatprep.mubr.bf16.mxu0 %v4304
      %4702 = vmatmul.mubr.bf16.gmra.mxu0 %v4303
      %v4703 = vpop.f32.mrf.mxu0
      %v4704 = vadd.f32 0.0, %v4703
      %v4705 = vpop.f32.mrf.mxu0
      %v4706 = vpop.f32.mrf.mxu0
      %v4707 = vadd.f32 0.0, %v4706
      %v4708 = vpop.f32.mrf.mxu0
      %4709 = vmatprep.mubr.bf16.mxu0 %v4309
      %4710 = vmatmul.mubr.bf16.gmra.mxu0 %v4308
      %v4711 = vpop.f32.mrf.mxu0
      %v4712 = vadd.f32 0.0, %v4711
      %v4713 = vpop.f32.mrf.mxu0
      %v4714 = vpop.f32.mrf.mxu0
      %v4715 = vadd.f32 0.0, %v4714
      %v4716 = vpop.f32.mrf.mxu0
      %4717 = vmatprep.mubr.bf16.mxu0 %v4314
      %4718 = vmatmul.mubr.bf16.gmra.mxu0 %v4313
      %v4719 = vpop.f32.mrf.mxu0
      %v4720 = vadd.f32 0.0, %v4719
      %v4721 = vpop.f32.mrf.mxu0
      %v4722 = vpop.f32.mrf.mxu0
      %v4723 = vadd.f32 0.0, %v4722
      %v4724 = vpop.f32.mrf.mxu0
      %4725 = vmatprep.mubr.bf16.mxu0 %v4319
      %4726 = vmatmul.mubr.bf16.gmra.mxu0 %v4318
      %v4727 = vpop.f32.mrf.mxu0
      %v4728 = vadd.f32 0.0, %v4727
      %v4729 = vpop.f32.mrf.mxu0
      %v4730 = vpop.f32.mrf.mxu0
      %v4731 = vadd.f32 0.0, %v4730
      %v4732 = vpop.f32.mrf.mxu0
      %4733 = vmatprep.mubr.bf16.mxu0 %v4324
      %4734 = vmatmul.mubr.bf16.gmra.mxu0 %v4323
      %v4735 = vpop.f32.mrf.mxu0
      %v4736 = vadd.f32 0.0, %v4735
      %v4737 = vpop.f32.mrf.mxu0
      %v4738 = vpop.f32.mrf.mxu0
      %v4739 = vadd.f32 0.0, %v4738
      %v4740 = vpop.f32.mrf.mxu0
      %4741 = vmatprep.mubr.bf16.mxu0 %v4329
      %4742 = vmatmul.mubr.bf16.gmra.mxu0 %v4328
      %v4743 = vpop.f32.mrf.mxu0
      %v4744 = vadd.f32 0.0, %v4743
      %v4745 = vpop.f32.mrf.mxu0
      %v4746 = vpop.f32.mrf.mxu0
      %v4747 = vadd.f32 0.0, %v4746
      %v4748 = vpop.f32.mrf.mxu0
      %4749 = vmatprep.mubr.bf16.mxu0 %v4334
      %4750 = vmatmul.mubr.bf16.gmra.mxu0 %v4333
      %v4751 = vpop.f32.mrf.mxu0
      %v4752 = vadd.f32 0.0, %v4751
      %v4753 = vpop.f32.mrf.mxu0
      %v4754 = vpop.f32.mrf.mxu0
      %v4755 = vadd.f32 0.0, %v4754
      %v4756 = vpop.f32.mrf.mxu0
      %4757 = vmatprep.mubr.bf16.mxu0 %v4339
      %4758 = vmatmul.mubr.bf16.gmra.mxu0 %v4338
      %v4759 = vpop.f32.mrf.mxu0
      %v4760 = vadd.f32 0.0, %v4759
      %v4761 = vpop.f32.mrf.mxu0
      %v4762 = vpop.f32.mrf.mxu0
      %v4763 = vadd.f32 0.0, %v4762
      %v4764 = vpop.f32.mrf.mxu0
      %4765 = vmatprep.mubr.bf16.mxu0 %v4344
      %4766 = vmatmul.mubr.bf16.gmra.mxu0 %v4343
      %v4767 = vpop.f32.mrf.mxu0
      %v4768 = vadd.f32 0.0, %v4767
      %v4769 = vpop.f32.mrf.mxu0
      %v4770 = vpop.f32.mrf.mxu0
      %v4771 = vadd.f32 0.0, %v4770
      %v4772 = vpop.f32.mrf.mxu0
      %4773 = vmatprep.mubr.bf16.mxu0 %v4349
      %4774 = vmatmul.mubr.bf16.gmra.mxu0 %v4348
      %v4775 = vpop.f32.mrf.mxu0
      %v4776 = vadd.f32 0.0, %v4775
      %v4777 = vpop.f32.mrf.mxu0
      %v4778 = vpop.f32.mrf.mxu0
      %v4779 = vadd.f32 0.0, %v4778
      %v4780 = vpop.f32.mrf.mxu0
      %4781 = vdwg.mxu0
      %4782 = vmatprep.subr.bf16.mxu0 0
      %4783 = vmatpush1.bf16.msra.mxu0 %v4596
      %4784 = vmatprep.subr.bf16.mxu0 0
      %4785 = vmatpush1.bf16.msra.mxu0 %v4595
      %4786 = vmatprep.subr.bf16.mxu0 0
      %4787 = vmatpush1.bf16.msra.mxu0 %v4594
      %4788 = vmatprep.subr.bf16.mxu0 0
      %4789 = vmatpush1.bf16.msra.mxu0 %v4593
      %4790 = vmatprep.subr.bf16.mxu0 0
      %4791 = vmatpush1.bf16.msra.mxu0 %v4592
      %4792 = vmatprep.subr.bf16.mxu0 0
      %4793 = vmatpush1.bf16.msra.mxu0 %v4591
      %4794 = vmatprep.subr.bf16.mxu0 0
      %4795 = vmatpush1.bf16.msra.mxu0 %v4590
      %4796 = vmatprep.subr.bf16.mxu0 0
      %4797 = vmatpush1.bf16.msra.mxu0 %v4589
      %4798 = vmatprep.subr.bf16.mxu0 0
      %4799 = vmatpush2.bf16.msra.mxu0 %v4604
      %4800 = vmatprep.subr.bf16.mxu0 0
      %4801 = vmatpush2.bf16.msra.mxu0 %v4603
      %4802 = vmatprep.subr.bf16.mxu0 0
      %4803 = vmatpush2.bf16.msra.mxu0 %v4602
      %4804 = vmatprep.subr.bf16.mxu0 0
      %4805 = vmatpush2.bf16.msra.mxu0 %v4601
      %4806 = vmatprep.subr.bf16.mxu0 0
      %4807 = vmatpush2.bf16.msra.mxu0 %v4600
      %4808 = vmatprep.subr.bf16.mxu0 0
      %4809 = vmatpush2.bf16.msra.mxu0 %v4599
      %4810 = vmatprep.subr.bf16.mxu0 0
      %4811 = vmatpush2.bf16.msra.mxu0 %v4598
      %4812 = vmatprep.subr.bf16.mxu0 0
      %4813 = vmatpush2.bf16.msra.mxu0 %v4597
      %4814 = vmatprep.mubr.bf16.mxu0 %v4296
      %4815 = vmatmul.mubr.bf16.gmra.mxu0 %v4295
      %v4816 = vpop.f32.mrf.mxu0
      %v4817 = vadd.f32 %v4688, %v4816
      %v4818 = vpop.f32.mrf.mxu0
      %v4819 = vpop.f32.mrf.mxu0
      %v4820 = vadd.f32 %v4691, %v4819
      %v4821 = vpop.f32.mrf.mxu0
      %4822 = vmatprep.mubr.bf16.mxu0 %v4301
      %4823 = vmatmul.mubr.bf16.gmra.mxu0 %v4300
      %v4824 = vpop.f32.mrf.mxu0
      %v4825 = vadd.f32 %v4696, %v4824
      %v4826 = vpop.f32.mrf.mxu0
      %v4827 = vpop.f32.mrf.mxu0
      %v4828 = vadd.f32 %v4699, %v4827
      %v4829 = vpop.f32.mrf.mxu0
      %4830 = vmatprep.mubr.bf16.mxu0 %v4306
      %4831 = vmatmul.mubr.bf16.gmra.mxu0 %v4305
      %v4832 = vpop.f32.mrf.mxu0
      %v4833 = vadd.f32 %v4704, %v4832
      %v4834 = vpop.f32.mrf.mxu0
      %v4835 = vpop.f32.mrf.mxu0
      %v4836 = vadd.f32 %v4707, %v4835
      %v4837 = vpop.f32.mrf.mxu0
      %4838 = vmatprep.mubr.bf16.mxu0 %v4311
      %4839 = vmatmul.mubr.bf16.gmra.mxu0 %v4310
      %v4840 = vpop.f32.mrf.mxu0
      %v4841 = vadd.f32 %v4712, %v4840
      %v4842 = vpop.f32.mrf.mxu0
      %v4843 = vpop.f32.mrf.mxu0
      %v4844 = vadd.f32 %v4715, %v4843
      %v4845 = vpop.f32.mrf.mxu0
      %4846 = vmatprep.mubr.bf16.mxu0 %v4316
      %4847 = vmatmul.mubr.bf16.gmra.mxu0 %v4315
      %v4848 = vpop.f32.mrf.mxu0
      %v4849 = vadd.f32 %v4720, %v4848
      %v4850 = vpop.f32.mrf.mxu0
      %v4851 = vpop.f32.mrf.mxu0
      %v4852 = vadd.f32 %v4723, %v4851
      %v4853 = vpop.f32.mrf.mxu0
      %4854 = vmatprep.mubr.bf16.mxu0 %v4321
      %4855 = vmatmul.mubr.bf16.gmra.mxu0 %v4320
      %v4856 = vpop.f32.mrf.mxu0
      %v4857 = vadd.f32 %v4728, %v4856
      %v4858 = vpop.f32.mrf.mxu0
      %v4859 = vpop.f32.mrf.mxu0
      %v4860 = vadd.f32 %v4731, %v4859
      %v4861 = vpop.f32.mrf.mxu0
      %4862 = vmatprep.mubr.bf16.mxu0 %v4326
      %4863 = vmatmul.mubr.bf16.gmra.mxu0 %v4325
      %v4864 = vpop.f32.mrf.mxu0
      %v4865 = vadd.f32 %v4736, %v4864
      %v4866 = vpop.f32.mrf.mxu0
      %v4867 = vpop.f32.mrf.mxu0
      %v4868 = vadd.f32 %v4739, %v4867
      %v4869 = vpop.f32.mrf.mxu0
      %4870 = vmatprep.mubr.bf16.mxu0 %v4331
      %4871 = vmatmul.mubr.bf16.gmra.mxu0 %v4330
      %v4872 = vpop.f32.mrf.mxu0
      %v4873 = vadd.f32 %v4744, %v4872
      %v4874 = vpop.f32.mrf.mxu0
      %v4875 = vpop.f32.mrf.mxu0
      %v4876 = vadd.f32 %v4747, %v4875
      %v4877 = vpop.f32.mrf.mxu0
      %4878 = vmatprep.mubr.bf16.mxu0 %v4336
      %4879 = vmatmul.mubr.bf16.gmra.mxu0 %v4335
      %v4880 = vpop.f32.mrf.mxu0
      %v4881 = vadd.f32 %v4752, %v4880
      %v4882 = vpop.f32.mrf.mxu0
      %v4883 = vpop.f32.mrf.mxu0
      %v4884 = vadd.f32 %v4755, %v4883
      %v4885 = vpop.f32.mrf.mxu0
      %4886 = vmatprep.mubr.bf16.mxu0 %v4341
      %4887 = vmatmul.mubr.bf16.gmra.mxu0 %v4340
      %v4888 = vpop.f32.mrf.mxu0
      %v4889 = vadd.f32 %v4760, %v4888
      %v4890 = vpop.f32.mrf.mxu0
      %v4891 = vpop.f32.mrf.mxu0
      %v4892 = vadd.f32 %v4763, %v4891
      %v4893 = vpop.f32.mrf.mxu0
      %4894 = vmatprep.mubr.bf16.mxu0 %v4346
      %4895 = vmatmul.mubr.bf16.gmra.mxu0 %v4345
      %v4896 = vpop.f32.mrf.mxu0
      %v4897 = vadd.f32 %v4768, %v4896
      %v4898 = vpop.f32.mrf.mxu0
      %v4899 = vpop.f32.mrf.mxu0
      %v4900 = vadd.f32 %v4771, %v4899
      %v4901 = vpop.f32.mrf.mxu0
      %4902 = vmatprep.mubr.bf16.mxu0 %v4351
      %4903 = vmatmul.mubr.bf16.gmra.mxu0 %v4350
      %v4904 = vpop.f32.mrf.mxu0
      %v4905 = vadd.f32 %v4776, %v4904
      %v4906 = vpop.f32.mrf.mxu0
      %v4907 = vpop.f32.mrf.mxu0
      %v4908 = vadd.f32 %v4779, %v4907
      %v4909 = vpop.f32.mrf.mxu0
      %4910 = vdwg.mxu0
      %4911 = vmatprep.subr.bf16.mxu0 0
      %4912 = vmatpush1.bf16.msra.mxu0 %v4612
      %4913 = vmatprep.subr.bf16.mxu0 0
      %4914 = vmatpush1.bf16.msra.mxu0 %v4611
      %4915 = vmatprep.subr.bf16.mxu0 0
      %4916 = vmatpush1.bf16.msra.mxu0 %v4610
      %4917 = vmatprep.subr.bf16.mxu0 0
      %4918 = vmatpush1.bf16.msra.mxu0 %v4609
      %4919 = vmatprep.subr.bf16.mxu0 0
      %4920 = vmatpush1.bf16.msra.mxu0 %v4608
      %4921 = vmatprep.subr.bf16.mxu0 0
      %4922 = vmatpush1.bf16.msra.mxu0 %v4607
      %4923 = vmatprep.subr.bf16.mxu0 0
      %4924 = vmatpush1.bf16.msra.mxu0 %v4606
      %4925 = vmatprep.subr.bf16.mxu0 0
      %4926 = vmatpush1.bf16.msra.mxu0 %v4605
      %4927 = vmatprep.subr.bf16.mxu0 0
      %4928 = vmatpush2.bf16.msra.mxu0 0
      %4929 = vmatprep.subr.bf16.mxu0 0
      %4930 = vmatpush2.bf16.msra.mxu0 0
      %4931 = vmatprep.subr.bf16.mxu0 0
      %4932 = vmatpush2.bf16.msra.mxu0 0
      %4933 = vmatprep.subr.bf16.mxu0 0
      %4934 = vmatpush2.bf16.msra.mxu0 0
      %4935 = vmatprep.subr.bf16.mxu0 0
      %4936 = vmatpush2.bf16.msra.mxu0 0
      %4937 = vmatprep.subr.bf16.mxu0 0
      %4938 = vmatpush2.bf16.msra.mxu0 0
      %4939 = vmatprep.subr.bf16.mxu0 0
      %4940 = vmatpush2.bf16.msra.mxu0 0
      %4941 = vmatprep.subr.bf16.mxu0 0
      %4942 = vmatpush2.bf16.msra.mxu0 0
      %4943 = vmatprep.mubr.bf16.mxu0 0
      %4944 = vmatmul.mubr.bf16.gmra.mxu0 %v4297
      %v4945 = vpop.f32.mrf.mxu0
      %v4946 = vadd.f32 %v4817, %v4945
      %v4947 = vpop.f32.mrf.mxu0
      %v4948 = vpop.f32.mrf.mxu0
      %v4949 = vadd.f32 %v4820, %v4948
      %v4950 = vpop.f32.mrf.mxu0
      %4951 = vmatprep.mubr.bf16.mxu0 0
      %4952 = vmatmul.mubr.bf16.gmra.mxu0 %v4302
      %v4953 = vpop.f32.mrf.mxu0
      %v4954 = vadd.f32 %v4825, %v4953
      %v4955 = vpop.f32.mrf.mxu0
      %v4956 = vpop.f32.mrf.mxu0
      %v4957 = vadd.f32 %v4828, %v4956
      %v4958 = vpop.f32.mrf.mxu0
      %4959 = vmatprep.mubr.bf16.mxu0 0
      %4960 = vmatmul.mubr.bf16.gmra.mxu0 %v4307
      %v4961 = vpop.f32.mrf.mxu0
      %v4962 = vadd.f32 %v4833, %v4961
      %v4963 = vpop.f32.mrf.mxu0
      %v4964 = vpop.f32.mrf.mxu0
      %v4965 = vadd.f32 %v4836, %v4964
      %v4966 = vpop.f32.mrf.mxu0
      %4967 = vmatprep.mubr.bf16.mxu0 0
      %4968 = vmatmul.mubr.bf16.gmra.mxu0 %v4312
      %v4969 = vpop.f32.mrf.mxu0
      %v4970 = vadd.f32 %v4841, %v4969
      %v4971 = vpop.f32.mrf.mxu0
      %v4972 = vpop.f32.mrf.mxu0
      %v4973 = vadd.f32 %v4844, %v4972
      %v4974 = vpop.f32.mrf.mxu0
      %4975 = vmatprep.mubr.bf16.mxu0 0
      %4976 = vmatmul.mubr.bf16.gmra.mxu0 %v4317
      %v4977 = vpop.f32.mrf.mxu0
      %v4978 = vadd.f32 %v4849, %v4977
      %v4979 = vpop.f32.mrf.mxu0
      %v4980 = vpop.f32.mrf.mxu0
      %v4981 = vadd.f32 %v4852, %v4980
      %v4982 = vpop.f32.mrf.mxu0
      %4983 = vmatprep.mubr.bf16.mxu0 0
      %4984 = vmatmul.mubr.bf16.gmra.mxu0 %v4322
      %v4985 = vpop.f32.mrf.mxu0
      %v4986 = vadd.f32 %v4857, %v4985
      %v4987 = vpop.f32.mrf.mxu0
      %v4988 = vpop.f32.mrf.mxu0
      %v4989 = vadd.f32 %v4860, %v4988
      %v4990 = vpop.f32.mrf.mxu0
      %4991 = vmatprep.mubr.bf16.mxu0 0
      %4992 = vmatmul.mubr.bf16.gmra.mxu0 %v4327
      %v4993 = vpop.f32.mrf.mxu0
      %v4994 = vadd.f32 %v4865, %v4993
      %v4995 = vpop.f32.mrf.mxu0
      %v4996 = vpop.f32.mrf.mxu0
      %v4997 = vadd.f32 %v4868, %v4996
      %v4998 = vpop.f32.mrf.mxu0
      %4999 = vmatprep.mubr.bf16.mxu0 0
      %5000 = vmatmul.mubr.bf16.gmra.mxu0 %v4332
      %v5001 = vpop.f32.mrf.mxu0
      %v5002 = vadd.f32 %v4873, %v5001
      %v5003 = vpop.f32.mrf.mxu0
      %v5004 = vpop.f32.mrf.mxu0
      %v5005 = vadd.f32 %v4876, %v5004
      %v5006 = vpop.f32.mrf.mxu0
      %5007 = vmatprep.mubr.bf16.mxu0 0
      %5008 = vmatmul.mubr.bf16.gmra.mxu0 %v4337
      %v5009 = vpop.f32.mrf.mxu0
      %v5010 = vadd.f32 %v4881, %v5009
      %v5011 = vpop.f32.mrf.mxu0
      %v5012 = vpop.f32.mrf.mxu0
      %v5013 = vadd.f32 %v4884, %v5012
      %v5014 = vpop.f32.mrf.mxu0
      %5015 = vmatprep.mubr.bf16.mxu0 0
      %5016 = vmatmul.mubr.bf16.gmra.mxu0 %v4342
      %v5017 = vpop.f32.mrf.mxu0
      %v5018 = vadd.f32 %v4889, %v5017
      %v5019 = vpop.f32.mrf.mxu0
      %v5020 = vpop.f32.mrf.mxu0
      %v5021 = vadd.f32 %v4892, %v5020
      %v5022 = vpop.f32.mrf.mxu0
      %5023 = vmatprep.mubr.bf16.mxu0 0
      %5024 = vmatmul.mubr.bf16.gmra.mxu0 %v4347
      %v5025 = vpop.f32.mrf.mxu0
      %v5026 = vadd.f32 %v4897, %v5025
      %v5027 = vpop.f32.mrf.mxu0
      %v5028 = vpop.f32.mrf.mxu0
      %v5029 = vadd.f32 %v4900, %v5028
      %v5030 = vpop.f32.mrf.mxu0
      %5031 = vmatprep.mubr.bf16.mxu0 0
      %5032 = vmatmul.mubr.bf16.gmra.mxu0 %v4352
      %v5033 = vpop.f32.mrf.mxu0
      %v5034 = vadd.f32 %v4905, %v5033
      %v5035 = vpop.f32.mrf.mxu0
      %v5036 = vpop.f32.mrf.mxu0
      %v5037 = vadd.f32 %v4908, %v5036
      %v5038 = vpop.f32.mrf.mxu0
      %5039 = vdwg.mxu0
      %v5040 = vadd.f32 %v3848, %v4946
      %v5041 = vadd.f32 %v3851, %v4949
      %v5042 = vadd.f32 %v3856, %v4954
      %v5043 = vadd.f32 %v3859, %v4957
      %v5044 = vadd.f32 %v3864, %v4962
      %v5045 = vadd.f32 %v3867, %v4965
      %v5046 = vadd.f32 %v3872, %v4970
      %v5047 = vadd.f32 %v3875, %v4973
      %v5048 = vadd.f32 %v3880, %v4978
      %v5049 = vadd.f32 %v3883, %v4981
      %v5050 = vadd.f32 %v3888, %v4986
      %v5051 = vadd.f32 %v3891, %v4989
      %v5052 = vadd.f32 %v3896, %v4994
      %v5053 = vadd.f32 %v3899, %v4997
      %v5054 = vadd.f32 %v3904, %v5002
      %v5055 = vadd.f32 %v3907, %v5005
      %v5056 = vadd.f32 %v3912, %v5010
      %v5057 = vadd.f32 %v3915, %v5013
      %v5058 = vadd.f32 %v3920, %v5018
      %v5059 = vadd.f32 %v3923, %v5021
      %v5060 = vadd.f32 %v3928, %v5026
      %v5061 = vadd.f32 %v3931, %v5029
      %v5062 = vadd.f32 %v3936, %v5034
      %v5063 = vadd.f32 %v3939, %v5037
      %s5064 = sadd.s32 %s1747, 48
      %s5065 = sshra.s32 %s5064, 3
      %s5066 = sand.u32 %s5064, 7
      %s5067 = smul.u32 %s5065, 5
      %s5068 = smul.addr %s5067, 4
      %s5069 = scalar_lea.vmem [#allocation2], %s5068
      %v5070 = vld [vmem:[%s5069] sm:$0xff]
      %v5071 = vld [vmem:[%s5069 + $0x8] sm:$0xff]
      %v5072 = vld [vmem:[%s5069 + $0x10] sm:$0xf]
      %v5073 = vld [vmem:[%s5069 + $0x14] sm:$0xff]
      %v5074 = vld [vmem:[%s5069 + $0x1c] sm:$0xff]
      %v5075 = vld [vmem:[%s5069 + $0x24] sm:$0xf]
      %v5076 = vld [vmem:[%s5069 + $0x28] sm:$0xff]
      %v5077 = vld [vmem:[%s5069 + $0x30] sm:$0xff]
      %v5078 = vld [vmem:[%s5069 + $0x38] sm:$0xf]
      %v5079 = vld [vmem:[%s5069 + $0x3c] sm:$0xff]
      %v5080 = vld [vmem:[%s5069 + $0x44] sm:$0xff]
      %v5081 = vld [vmem:[%s5069 + $0x4c] sm:$0xf]
      %v5082 = vld [vmem:[%s5069 + $0x50] sm:$0xff]
      %v5083 = vld [vmem:[%s5069 + $0x58] sm:$0xff]
      %v5084 = vld [vmem:[%s5069 + $0x60] sm:$0xf]
      %v5085 = vld [vmem:[%s5069 + $0x64] sm:$0xff]
      %v5086 = vld [vmem:[%s5069 + $0x6c] sm:$0xff]
      %v5087 = vld [vmem:[%s5069 + $0x74] sm:$0xf]
      %v5088 = vld [vmem:[%s5069 + $0x78] sm:$0xff]
      %v5089 = vld [vmem:[%s5069 + $0x80] sm:$0xff]
      %v5090 = vld [vmem:[%s5069 + $0x88] sm:$0xf]
      %v5091 = vld [vmem:[%s5069 + $0x8c] sm:$0xff]
      %v5092 = vld [vmem:[%s5069 + $0x94] sm:$0xff]
      %v5093 = vld [vmem:[%s5069 + $0x9c] sm:$0xf]
      %v5094 = vld [vmem:[%s5069 + $0xa0] sm:$0xff]
      %v5095 = vld [vmem:[%s5069 + $0xa8] sm:$0xff]
      %v5096 = vld [vmem:[%s5069 + $0xb0] sm:$0xf]
      %v5097 = vld [vmem:[%s5069 + $0xb4] sm:$0xff]
      %v5098 = vld [vmem:[%s5069 + $0xbc] sm:$0xff]
      %v5099 = vld [vmem:[%s5069 + $0xc4] sm:$0xf]
      %v5100 = vld [vmem:[%s5069 + $0xc8] sm:$0xff]
      %v5101 = vld [vmem:[%s5069 + $0xd0] sm:$0xff]
      %v5102 = vld [vmem:[%s5069 + $0xd8] sm:$0xf]
      %v5103 = vld [vmem:[%s5069 + $0xdc] sm:$0xff]
      %v5104 = vld [vmem:[%s5069 + $0xe4] sm:$0xff]
      %v5105 = vld [vmem:[%s5069 + $0xec] sm:$0xf]
      %v5106 = vld [vmem:[%s5069 + $0xf0] sm:$0xff]
      %v5107 = vld [vmem:[%s5069 + $0xf8] sm:$0xff]
      %v5108 = vld [vmem:[%s5069 + $0x100] sm:$0xf]
      %v5109 = vld [vmem:[%s5069 + $0x104] sm:$0xff]
      %v5110 = vld [vmem:[%s5069 + $0x10c] sm:$0xff]
      %v5111 = vld [vmem:[%s5069 + $0x114] sm:$0xf]
      %v5112 = vld [vmem:[%s5069 + $0x118] sm:$0xff]
      %v5113 = vld [vmem:[%s5069 + $0x120] sm:$0xff]
      %v5114 = vld [vmem:[%s5069 + $0x128] sm:$0xf]
      %v5115 = vld [vmem:[%s5069 + $0x12c] sm:$0xff]
      %v5116 = vld [vmem:[%s5069 + $0x134] sm:$0xff]
      %v5117 = vld [vmem:[%s5069 + $0x13c] sm:$0xf]
      %v5118 = vld [vmem:[%s5069 + $0x140] sm:$0xff]
      %v5119 = vld [vmem:[%s5069 + $0x148] sm:$0xff]
      %v5120 = vld [vmem:[%s5069 + $0x150] sm:$0xf]
      %v5121 = vld [vmem:[%s5069 + $0x154] sm:$0xff]
      %v5122 = vld [vmem:[%s5069 + $0x15c] sm:$0xff]
      %v5123 = vld [vmem:[%s5069 + $0x164] sm:$0xf]
      %v5124 = vld [vmem:[%s5069 + $0x168] sm:$0xff]
      %v5125 = vld [vmem:[%s5069 + $0x170] sm:$0xff]
      %v5126 = vld [vmem:[%s5069 + $0x178] sm:$0xf]
      %v5127 = vld [vmem:[%s5069 + $0x17c] sm:$0xff]
      %v5128 = vld [vmem:[%s5069 + $0x184] sm:$0xff]
      %v5129 = vld [vmem:[%s5069 + $0x18c] sm:$0xf]
      %v5130 = vld [vmem:[%s5069 + $0x190] sm:$0xff]
      %v5131 = vld [vmem:[%s5069 + $0x198] sm:$0xff]
      %v5132 = vld [vmem:[%s5069 + $0x1a0] sm:$0xf]
      %v5133 = vld [vmem:[%s5069 + $0x1a4] sm:$0xff]
      %v5134 = vld [vmem:[%s5069 + $0x1ac] sm:$0xff]
      %v5135 = vld [vmem:[%s5069 + $0x1b4] sm:$0xf]
      %v5136 = vld [vmem:[%s5069 + $0x1b8] sm:$0xff]
      %v5137 = vld [vmem:[%s5069 + $0x1c0] sm:$0xff]
      %v5138 = vld [vmem:[%s5069 + $0x1c8] sm:$0xf]
      %v5139 = vld [vmem:[%s5069 + $0x1cc] sm:$0xff]
      %v5140 = vld [vmem:[%s5069 + $0x1d4] sm:$0xff]
      %v5141 = vld [vmem:[%s5069 + $0x1dc] sm:$0xf]
      %s5142 = scalar_lea.vmem %s3, 960
      %v5143 = vld [vmem:[%s5142] sm:$0xf]
      %v5144 = vld [vmem:[%s5142 + $0x4] sm:$0xf]
      %v5145 = vld [vmem:[%s5142 + $0x8] sm:$0xf]
      %v5146 = vld [vmem:[%s5142 + $0xc] sm:$0xf]
      %v5147 = vld [vmem:[%s5142 + $0x10] sm:$0xf]
      %v5148 = vld [vmem:[%s5142 + $0x14] sm:$0xf]
      %v5149 = vld [vmem:[%s5142 + $0x18] sm:$0xf]
      %v5150 = vld [vmem:[%s5142 + $0x1c] sm:$0xf]
      %v5151 = vld [vmem:[%s5142 + $0x20] sm:$0xf]
      %v5152 = vld [vmem:[%s5142 + $0x24] sm:$0xf]
      %v5153 = vld [vmem:[%s5142 + $0x28] sm:$0xf]
      %v5154 = vld [vmem:[%s5142 + $0x2c] sm:$0xf]
      %v5155 = vld [vmem:[%s5142 + $0x30] sm:$0xf]
      %v5156 = vld [vmem:[%s5142 + $0x34] sm:$0xf]
      %v5157 = vld [vmem:[%s5142 + $0x38] sm:$0xf]
      %v5158 = vld [vmem:[%s5142 + $0x3c] sm:$0xf]
      %v5159 = vld [vmem:[%s5142 + $0x40] sm:$0xf]
      %v5160 = vld [vmem:[%s5142 + $0x44] sm:$0xf]
      %v5161 = vld [vmem:[%s5142 + $0x48] sm:$0xf]
      %v5162 = vld [vmem:[%s5142 + $0x4c] sm:$0xf]
      %v5163 = vld [vmem:[%s5142 + $0x50] sm:$0xf]
      %v5164 = vld [vmem:[%s5142 + $0x54] sm:$0xf]
      %v5165 = vld [vmem:[%s5142 + $0x58] sm:$0xf]
      %v5166 = vld [vmem:[%s5142 + $0x5c] sm:$0xf]
      %v5167 = vld [vmem:[%s5142 + $0x60] sm:$0xf]
      %v5168 = vld [vmem:[%s5142 + $0x64] sm:$0xf]
      %v5169 = vld [vmem:[%s5142 + $0x68] sm:$0xf]
      %v5170 = vld [vmem:[%s5142 + $0x6c] sm:$0xf]
      %v5171 = vld [vmem:[%s5142 + $0x70] sm:$0xf]
      %v5172 = vld [vmem:[%s5142 + $0x74] sm:$0xf]
      %v5173 = vld [vmem:[%s5142 + $0x78] sm:$0xf]
      %v5174 = vld [vmem:[%s5142 + $0x7c] sm:$0xf]
      %v5175 = vld [vmem:[%s5142 + $0x80] sm:$0xf]
      %v5176 = vld [vmem:[%s5142 + $0x84] sm:$0xf]
      %v5177 = vld [vmem:[%s5142 + $0x88] sm:$0xf]
      %v5178 = vld [vmem:[%s5142 + $0x8c] sm:$0xf]
      %v5179 = vld [vmem:[%s5142 + $0x90] sm:$0xf]
      %v5180 = vld [vmem:[%s5142 + $0x94] sm:$0xf]
      %v5181 = vld [vmem:[%s5142 + $0x98] sm:$0xf]
      %v5182 = vld [vmem:[%s5142 + $0x9c] sm:$0xf]
      %v5183 = vld [vmem:[%s5142 + $0xa0] sm:$0xf]
      %v5184 = vld [vmem:[%s5142 + $0xa4] sm:$0xf]
      %v5185 = vld [vmem:[%s5142 + $0xa8] sm:$0xf]
      %v5186 = vld [vmem:[%s5142 + $0xac] sm:$0xf]
      %v5187 = vld [vmem:[%s5142 + $0xb0] sm:$0xf]
      %v5188 = vld [vmem:[%s5142 + $0xb4] sm:$0xf]
      %v5189 = vld [vmem:[%s5142 + $0xb8] sm:$0xf]
      %v5190 = vld [vmem:[%s5142 + $0xbc] sm:$0xf]
      %v5191 = vld [vmem:[%s5142 + $0xc0] sm:$0xf]
      %v5192 = vld [vmem:[%s5142 + $0xc4] sm:$0xf]
      %v5193 = vld [vmem:[%s5142 + $0xc8] sm:$0xf]
      %v5194 = vld [vmem:[%s5142 + $0xcc] sm:$0xf]
      %v5195 = vld [vmem:[%s5142 + $0xd0] sm:$0xf]
      %v5196 = vld [vmem:[%s5142 + $0xd4] sm:$0xf]
      %v5197 = vld [vmem:[%s5142 + $0xd8] sm:$0xf]
      %v5198 = vld [vmem:[%s5142 + $0xdc] sm:$0xf]
      %v5199 = vld [vmem:[%s5142 + $0xe0] sm:$0xf]
      %v5200 = vld [vmem:[%s5142 + $0xe4] sm:$0xf]
      %v5201 = vld [vmem:[%s5142 + $0xe8] sm:$0xf]
      %v5202 = vld [vmem:[%s5142 + $0xec] sm:$0xf]
      %v5203 = vld [vmem:[%s5142 + $0xf0] sm:$0xf]
      %v5204 = vld [vmem:[%s5142 + $0xf4] sm:$0xf]
      %v5205 = vld [vmem:[%s5142 + $0xf8] sm:$0xf]
      %v5206 = vld [vmem:[%s5142 + $0xfc] sm:$0xf]
      %v5207 = vld [vmem:[%s5142 + $0x100] sm:$0xf]
      %v5208 = vld [vmem:[%s5142 + $0x104] sm:$0xf]
      %v5209 = vld [vmem:[%s5142 + $0x108] sm:$0xf]
      %v5210 = vld [vmem:[%s5142 + $0x10c] sm:$0xf]
      %v5211 = vld [vmem:[%s5142 + $0x110] sm:$0xf]
      %v5212 = vld [vmem:[%s5142 + $0x114] sm:$0xf]
      %v5213 = vld [vmem:[%s5142 + $0x118] sm:$0xf]
      %v5214 = vld [vmem:[%s5142 + $0x11c] sm:$0xf]
      %v5215 = vld [vmem:[%s5142 + $0x120] sm:$0xf]
      %v5216 = vld [vmem:[%s5142 + $0x124] sm:$0xf]
      %v5217 = vld [vmem:[%s5142 + $0x128] sm:$0xf]
      %v5218 = vld [vmem:[%s5142 + $0x12c] sm:$0xf]
      %v5219 = vld [vmem:[%s5142 + $0x130] sm:$0xf]
      %v5220 = vld [vmem:[%s5142 + $0x134] sm:$0xf]
      %v5221 = vld [vmem:[%s5142 + $0x138] sm:$0xf]
      %v5222 = vld [vmem:[%s5142 + $0x13c] sm:$0xf]
      %v5295 = vunpack.c.l.b16 %v5070
      %v5296 = vunpack.c.h.b16 %v5070
      %v5297 = vunpack.c.l.b16 %v5071
      %v5298 = vunpack.c.h.b16 %v5071
      %v5299 = vunpack.c.l.b16 %v5072
      %v5300 = vunpack.c.l.b16 %v5073
      %v5301 = vunpack.c.h.b16 %v5073
      %v5302 = vunpack.c.l.b16 %v5074
      %v5303 = vunpack.c.h.b16 %v5074
      %v5304 = vunpack.c.l.b16 %v5075
      %v5305 = vunpack.c.l.b16 %v5076
      %v5306 = vunpack.c.h.b16 %v5076
      %v5307 = vunpack.c.l.b16 %v5077
      %v5308 = vunpack.c.h.b16 %v5077
      %v5309 = vunpack.c.l.b16 %v5078
      %v5310 = vunpack.c.l.b16 %v5079
      %v5311 = vunpack.c.h.b16 %v5079
      %v5312 = vunpack.c.l.b16 %v5080
      %v5313 = vunpack.c.h.b16 %v5080
      %v5314 = vunpack.c.l.b16 %v5081
      %v5315 = vunpack.c.l.b16 %v5082
      %v5316 = vunpack.c.h.b16 %v5082
      %v5317 = vunpack.c.l.b16 %v5083
      %v5318 = vunpack.c.h.b16 %v5083
      %v5319 = vunpack.c.l.b16 %v5084
      %v5320 = vunpack.c.l.b16 %v5085
      %v5321 = vunpack.c.h.b16 %v5085
      %v5322 = vunpack.c.l.b16 %v5086
      %v5323 = vunpack.c.h.b16 %v5086
      %v5324 = vunpack.c.l.b16 %v5087
      %v5325 = vunpack.c.l.b16 %v5088
      %v5326 = vunpack.c.h.b16 %v5088
      %v5327 = vunpack.c.l.b16 %v5089
      %v5328 = vunpack.c.h.b16 %v5089
      %v5329 = vunpack.c.l.b16 %v5090
      %v5330 = vunpack.c.l.b16 %v5091
      %v5331 = vunpack.c.h.b16 %v5091
      %v5332 = vunpack.c.l.b16 %v5092
      %v5333 = vunpack.c.h.b16 %v5092
      %v5334 = vunpack.c.l.b16 %v5093
      %v5335 = vunpack.c.l.b16 %v5094
      %v5336 = vunpack.c.h.b16 %v5094
      %v5337 = vunpack.c.l.b16 %v5095
      %v5338 = vunpack.c.h.b16 %v5095
      %v5339 = vunpack.c.l.b16 %v5096
      %v5340 = vunpack.c.l.b16 %v5097
      %v5341 = vunpack.c.h.b16 %v5097
      %v5342 = vunpack.c.l.b16 %v5098
      %v5343 = vunpack.c.h.b16 %v5098
      %v5344 = vunpack.c.l.b16 %v5099
      %v5345 = vunpack.c.l.b16 %v5100
      %v5346 = vunpack.c.h.b16 %v5100
      %v5347 = vunpack.c.l.b16 %v5101
      %v5348 = vunpack.c.h.b16 %v5101
      %v5349 = vunpack.c.l.b16 %v5102
      %v5350 = vunpack.c.l.b16 %v5103
      %v5351 = vunpack.c.h.b16 %v5103
      %v5352 = vunpack.c.l.b16 %v5104
      %v5353 = vunpack.c.h.b16 %v5104
      %v5354 = vunpack.c.l.b16 %v5105
      %v5355 = vunpack.c.l.b16 %v5106
      %v5356 = vunpack.c.h.b16 %v5106
      %v5357 = vunpack.c.l.b16 %v5107
      %v5358 = vunpack.c.h.b16 %v5107
      %v5359 = vunpack.c.l.b16 %v5108
      %v5360 = vunpack.c.l.b16 %v5109
      %v5361 = vunpack.c.h.b16 %v5109
      %v5362 = vunpack.c.l.b16 %v5110
      %v5363 = vunpack.c.h.b16 %v5110
      %v5364 = vunpack.c.l.b16 %v5111
      %v5365 = vunpack.c.l.b16 %v5112
      %v5366 = vunpack.c.h.b16 %v5112
      %v5367 = vunpack.c.l.b16 %v5113
      %v5368 = vunpack.c.h.b16 %v5113
      %v5369 = vunpack.c.l.b16 %v5114
      %v5370 = vunpack.c.l.b16 %v5115
      %v5371 = vunpack.c.h.b16 %v5115
      %v5372 = vunpack.c.l.b16 %v5116
      %v5373 = vunpack.c.h.b16 %v5116
      %v5374 = vunpack.c.l.b16 %v5117
      %v5375 = vunpack.c.l.b16 %v5118
      %v5376 = vunpack.c.h.b16 %v5118
      %v5377 = vunpack.c.l.b16 %v5119
      %v5378 = vunpack.c.h.b16 %v5119
      %v5379 = vunpack.c.l.b16 %v5120
      %v5380 = vunpack.c.l.b16 %v5121
      %v5381 = vunpack.c.h.b16 %v5121
      %v5382 = vunpack.c.l.b16 %v5122
      %v5383 = vunpack.c.h.b16 %v5122
      %v5384 = vunpack.c.l.b16 %v5123
      %v5385 = vunpack.c.l.b16 %v5124
      %v5386 = vunpack.c.h.b16 %v5124
      %v5387 = vunpack.c.l.b16 %v5125
      %v5388 = vunpack.c.h.b16 %v5125
      %v5389 = vunpack.c.l.b16 %v5126
      %v5390 = vunpack.c.l.b16 %v5127
      %v5391 = vunpack.c.h.b16 %v5127
      %v5392 = vunpack.c.l.b16 %v5128
      %v5393 = vunpack.c.h.b16 %v5128
      %v5394 = vunpack.c.l.b16 %v5129
      %v5395 = vunpack.c.l.b16 %v5130
      %v5396 = vunpack.c.h.b16 %v5130
      %v5397 = vunpack.c.l.b16 %v5131
      %v5398 = vunpack.c.h.b16 %v5131
      %v5399 = vunpack.c.l.b16 %v5132
      %v5400 = vunpack.c.l.b16 %v5133
      %v5401 = vunpack.c.h.b16 %v5133
      %v5402 = vunpack.c.l.b16 %v5134
      %v5403 = vunpack.c.h.b16 %v5134
      %v5404 = vunpack.c.l.b16 %v5135
      %v5405 = vunpack.c.l.b16 %v5136
      %v5406 = vunpack.c.h.b16 %v5136
      %v5407 = vunpack.c.l.b16 %v5137
      %v5408 = vunpack.c.h.b16 %v5137
      %v5409 = vunpack.c.l.b16 %v5138
      %v5410 = vunpack.c.l.b16 %v5139
      %v5411 = vunpack.c.h.b16 %v5139
      %v5412 = vunpack.c.l.b16 %v5140
      %v5413 = vunpack.c.h.b16 %v5140
      %v5414 = vunpack.c.l.b16 %v5141
      %v5415 = vpack.c.b16 %v5300, %v5295
      %v5416 = vpack.c.b16 %v5301, %v5296
      %v5417 = vpack.c.b16 %v5302, %v5297
      %v5418 = vpack.c.b16 %v5303, %v5298
      %v5419 = vpack.c.b16 %v5304, %v5299
      %v5420 = vpack.c.b16 %v5310, %v5305
      %v5421 = vpack.c.b16 %v5311, %v5306
      %v5422 = vpack.c.b16 %v5312, %v5307
      %v5423 = vpack.c.b16 %v5313, %v5308
      %v5424 = vpack.c.b16 %v5314, %v5309
      %v5425 = vpack.c.b16 %v5320, %v5315
      %v5426 = vpack.c.b16 %v5321, %v5316
      %v5427 = vpack.c.b16 %v5322, %v5317
      %v5428 = vpack.c.b16 %v5323, %v5318
      %v5429 = vpack.c.b16 %v5324, %v5319
      %v5430 = vpack.c.b16 %v5330, %v5325
      %v5431 = vpack.c.b16 %v5331, %v5326
      %v5432 = vpack.c.b16 %v5332, %v5327
      %v5433 = vpack.c.b16 %v5333, %v5328
      %v5434 = vpack.c.b16 %v5334, %v5329
      %v5435 = vpack.c.b16 %v5340, %v5335
      %v5436 = vpack.c.b16 %v5341, %v5336
      %v5437 = vpack.c.b16 %v5342, %v5337
      %v5438 = vpack.c.b16 %v5343, %v5338
      %v5439 = vpack.c.b16 %v5344, %v5339
      %v5440 = vpack.c.b16 %v5350, %v5345
      %v5441 = vpack.c.b16 %v5351, %v5346
      %v5442 = vpack.c.b16 %v5352, %v5347
      %v5443 = vpack.c.b16 %v5353, %v5348
      %v5444 = vpack.c.b16 %v5354, %v5349
      %v5445 = vpack.c.b16 %v5360, %v5355
      %v5446 = vpack.c.b16 %v5361, %v5356
      %v5447 = vpack.c.b16 %v5362, %v5357
      %v5448 = vpack.c.b16 %v5363, %v5358
      %v5449 = vpack.c.b16 %v5364, %v5359
      %v5450 = vpack.c.b16 %v5370, %v5365
      %v5451 = vpack.c.b16 %v5371, %v5366
      %v5452 = vpack.c.b16 %v5372, %v5367
      %v5453 = vpack.c.b16 %v5373, %v5368
      %v5454 = vpack.c.b16 %v5374, %v5369
      %v5455 = vpack.c.b16 %v5380, %v5375
      %v5456 = vpack.c.b16 %v5381, %v5376
      %v5457 = vpack.c.b16 %v5382, %v5377
      %v5458 = vpack.c.b16 %v5383, %v5378
      %v5459 = vpack.c.b16 %v5384, %v5379
      %v5460 = vpack.c.b16 %v5390, %v5385
      %v5461 = vpack.c.b16 %v5391, %v5386
      %v5462 = vpack.c.b16 %v5392, %v5387
      %v5463 = vpack.c.b16 %v5393, %v5388
      %v5464 = vpack.c.b16 %v5394, %v5389
      %v5465 = vpack.c.b16 %v5400, %v5395
      %v5466 = vpack.c.b16 %v5401, %v5396
      %v5467 = vpack.c.b16 %v5402, %v5397
      %v5468 = vpack.c.b16 %v5403, %v5398
      %v5469 = vpack.c.b16 %v5404, %v5399
      %v5470 = vpack.c.b16 %v5410, %v5405
      %v5471 = vpack.c.b16 %v5411, %v5406
      %v5472 = vpack.c.b16 %v5412, %v5407
      %v5473 = vpack.c.b16 %v5413, %v5408
      %v5474 = vpack.c.b16 %v5414, %v5409
      %v5615 = vunpack.c.l.b16 %v5143
      %v5616 = vunpack.c.l.b16 %v5144
      %v5617 = vunpack.c.l.b16 %v5145
      %v5618 = vunpack.c.l.b16 %v5146
      %v5619 = vunpack.c.l.b16 %v5147
      %v5620 = vunpack.c.l.b16 %v5148
      %v5621 = vunpack.c.l.b16 %v5149
      %v5622 = vunpack.c.l.b16 %v5150
      %v5623 = vunpack.c.l.b16 %v5151
      %v5624 = vunpack.c.l.b16 %v5152
      %v5625 = vunpack.c.l.b16 %v5153
      %v5626 = vunpack.c.l.b16 %v5154
      %v5627 = vunpack.c.l.b16 %v5155
      %v5628 = vunpack.c.l.b16 %v5156
      %v5629 = vunpack.c.l.b16 %v5157
      %v5630 = vunpack.c.l.b16 %v5158
      %v5631 = vunpack.c.l.b16 %v5159
      %v5632 = vunpack.c.l.b16 %v5160
      %v5633 = vunpack.c.l.b16 %v5161
      %v5634 = vunpack.c.l.b16 %v5162
      %v5635 = vunpack.c.l.b16 %v5163
      %v5636 = vunpack.c.l.b16 %v5164
      %v5637 = vunpack.c.l.b16 %v5165
      %v5638 = vunpack.c.l.b16 %v5166
      %v5639 = vunpack.c.l.b16 %v5167
      %v5640 = vunpack.c.l.b16 %v5168
      %v5641 = vunpack.c.l.b16 %v5169
      %v5642 = vunpack.c.l.b16 %v5170
      %v5643 = vunpack.c.l.b16 %v5171
      %v5644 = vunpack.c.l.b16 %v5172
      %v5645 = vunpack.c.l.b16 %v5173
      %v5646 = vunpack.c.l.b16 %v5174
      %v5647 = vunpack.c.l.b16 %v5175
      %v5648 = vunpack.c.l.b16 %v5176
      %v5649 = vunpack.c.l.b16 %v5177
      %v5650 = vunpack.c.l.b16 %v5178
      %v5651 = vunpack.c.l.b16 %v5179
      %v5652 = vunpack.c.l.b16 %v5180
      %v5653 = vunpack.c.l.b16 %v5181
      %v5654 = vunpack.c.l.b16 %v5182
      %v5655 = vunpack.c.l.b16 %v5183
      %v5656 = vunpack.c.l.b16 %v5184
      %v5657 = vunpack.c.l.b16 %v5185
      %v5658 = vunpack.c.l.b16 %v5186
      %v5659 = vunpack.c.l.b16 %v5187
      %v5660 = vunpack.c.l.b16 %v5188
      %v5661 = vunpack.c.l.b16 %v5189
      %v5662 = vunpack.c.l.b16 %v5190
      %v5663 = vunpack.c.l.b16 %v5191
      %v5664 = vunpack.c.l.b16 %v5192
      %v5665 = vunpack.c.l.b16 %v5193
      %v5666 = vunpack.c.l.b16 %v5194
      %v5667 = vunpack.c.l.b16 %v5195
      %v5668 = vunpack.c.l.b16 %v5196
      %v5669 = vunpack.c.l.b16 %v5197
      %v5670 = vunpack.c.l.b16 %v5198
      %v5671 = vunpack.c.l.b16 %v5199
      %v5672 = vunpack.c.l.b16 %v5200
      %v5673 = vunpack.c.l.b16 %v5201
      %v5674 = vunpack.c.l.b16 %v5202
      %v5675 = vunpack.c.l.b16 %v5203
      %v5676 = vunpack.c.l.b16 %v5204
      %v5677 = vunpack.c.l.b16 %v5205
      %v5678 = vunpack.c.l.b16 %v5206
      %v5679 = vunpack.c.l.b16 %v5207
      %v5680 = vunpack.c.l.b16 %v5208
      %v5681 = vunpack.c.l.b16 %v5209
      %v5682 = vunpack.c.l.b16 %v5210
      %v5683 = vunpack.c.l.b16 %v5211
      %v5684 = vunpack.c.l.b16 %v5212
      %v5685 = vunpack.c.l.b16 %v5213
      %v5686 = vunpack.c.l.b16 %v5214
      %v5687 = vunpack.c.l.b16 %v5215
      %v5688 = vunpack.c.l.b16 %v5216
      %v5689 = vunpack.c.l.b16 %v5217
      %v5690 = vunpack.c.l.b16 %v5218
      %v5691 = vunpack.c.l.b16 %v5219
      %v5692 = vunpack.c.l.b16 %v5220
      %v5693 = vunpack.c.l.b16 %v5221
      %v5694 = vunpack.c.l.b16 %v5222
      %v5695 = vpack.c.b16 %v5616, %v5615
      %v5696 = vpack.c.b16 %v5618, %v5617
      %v5697 = vpack.c.b16 %v5620, %v5619
      %v5698 = vpack.c.b16 %v5622, %v5621
      %v5699 = vpack.c.b16 %v5624, %v5623
      %v5700 = vpack.c.b16 %v5626, %v5625
      %v5701 = vpack.c.b16 %v5628, %v5627
      %v5702 = vpack.c.b16 %v5630, %v5629
      %v5703 = vpack.c.b16 %v5632, %v5631
      %v5704 = vpack.c.b16 %v5634, %v5633
      %v5705 = vpack.c.b16 %v5636, %v5635
      %v5706 = vpack.c.b16 %v5638, %v5637
      %v5707 = vpack.c.b16 %v5640, %v5639
      %v5708 = vpack.c.b16 %v5642, %v5641
      %v5709 = vpack.c.b16 %v5644, %v5643
      %v5710 = vpack.c.b16 %v5646, %v5645
      %v5711 = vpack.c.b16 %v5648, %v5647
      %v5712 = vpack.c.b16 %v5650, %v5649
      %v5713 = vpack.c.b16 %v5652, %v5651
      %v5714 = vpack.c.b16 %v5654, %v5653
      %v5715 = vpack.c.b16 %v5656, %v5655
      %v5716 = vpack.c.b16 %v5658, %v5657
      %v5717 = vpack.c.b16 %v5660, %v5659
      %v5718 = vpack.c.b16 %v5662, %v5661
      %v5719 = vpack.c.b16 %v5664, %v5663
      %v5720 = vpack.c.b16 %v5666, %v5665
      %v5721 = vpack.c.b16 %v5668, %v5667
      %v5722 = vpack.c.b16 %v5670, %v5669
      %v5723 = vpack.c.b16 %v5672, %v5671
      %v5724 = vpack.c.b16 %v5674, %v5673
      %v5725 = vpack.c.b16 %v5676, %v5675
      %v5726 = vpack.c.b16 %v5678, %v5677
      %v5727 = vpack.c.b16 %v5680, %v5679
      %v5728 = vpack.c.b16 %v5682, %v5681
      %v5729 = vpack.c.b16 %v5684, %v5683
      %v5730 = vpack.c.b16 %v5686, %v5685
      %v5731 = vpack.c.b16 %v5688, %v5687
      %v5732 = vpack.c.b16 %v5690, %v5689
      %v5733 = vpack.c.b16 %v5692, %v5691
      %v5734 = vpack.c.b16 %v5694, %v5693
      %5775 = vmatprep.subr.bf16.mxu0 0
      %5776 = vmatpush1.bf16.msra.mxu0 %v5702
      %5777 = vmatprep.subr.bf16.mxu0 0
      %5778 = vmatpush1.bf16.msra.mxu0 %v5701
      %5779 = vmatprep.subr.bf16.mxu0 0
      %5780 = vmatpush1.bf16.msra.mxu0 %v5700
      %5781 = vmatprep.subr.bf16.mxu0 0
      %5782 = vmatpush1.bf16.msra.mxu0 %v5699
      %5783 = vmatprep.subr.bf16.mxu0 0
      %5784 = vmatpush1.bf16.msra.mxu0 %v5698
      %5785 = vmatprep.subr.bf16.mxu0 0
      %5786 = vmatpush1.bf16.msra.mxu0 %v5697
      %5787 = vmatprep.subr.bf16.mxu0 0
      %5788 = vmatpush1.bf16.msra.mxu0 %v5696
      %5789 = vmatprep.subr.bf16.mxu0 0
      %5790 = vmatpush1.bf16.msra.mxu0 %v5695
      %5791 = vmatprep.subr.bf16.mxu0 0
      %5792 = vmatpush2.bf16.msra.mxu0 %v5710
      %5793 = vmatprep.subr.bf16.mxu0 0
      %5794 = vmatpush2.bf16.msra.mxu0 %v5709
      %5795 = vmatprep.subr.bf16.mxu0 0
      %5796 = vmatpush2.bf16.msra.mxu0 %v5708
      %5797 = vmatprep.subr.bf16.mxu0 0
      %5798 = vmatpush2.bf16.msra.mxu0 %v5707
      %5799 = vmatprep.subr.bf16.mxu0 0
      %5800 = vmatpush2.bf16.msra.mxu0 %v5706
      %5801 = vmatprep.subr.bf16.mxu0 0
      %5802 = vmatpush2.bf16.msra.mxu0 %v5705
      %5803 = vmatprep.subr.bf16.mxu0 0
      %5804 = vmatpush2.bf16.msra.mxu0 %v5704
      %5805 = vmatprep.subr.bf16.mxu0 0
      %5806 = vmatpush2.bf16.msra.mxu0 %v5703
      %5807 = vmatprep.mubr.bf16.mxu0 %v5416
      %5808 = vmatmul.mubr.bf16.gmra.mxu0 %v5415
      %v5809 = vpop.f32.mrf.mxu0
      %v5810 = vadd.f32 0.0, %v5809
      %v5811 = vpop.f32.mrf.mxu0
      %v5812 = vpop.f32.mrf.mxu0
      %v5813 = vadd.f32 0.0, %v5812
      %v5814 = vpop.f32.mrf.mxu0
      %5815 = vmatprep.mubr.bf16.mxu0 %v5421
      %5816 = vmatmul.mubr.bf16.gmra.mxu0 %v5420
      %v5817 = vpop.f32.mrf.mxu0
      %v5818 = vadd.f32 0.0, %v5817
      %v5819 = vpop.f32.mrf.mxu0
      %v5820 = vpop.f32.mrf.mxu0
      %v5821 = vadd.f32 0.0, %v5820
      %v5822 = vpop.f32.mrf.mxu0
      %5823 = vmatprep.mubr.bf16.mxu0 %v5426
      %5824 = vmatmul.mubr.bf16.gmra.mxu0 %v5425
      %v5825 = vpop.f32.mrf.mxu0
      %v5826 = vadd.f32 0.0, %v5825
      %v5827 = vpop.f32.mrf.mxu0
      %v5828 = vpop.f32.mrf.mxu0
      %v5829 = vadd.f32 0.0, %v5828
      %v5830 = vpop.f32.mrf.mxu0
      %5831 = vmatprep.mubr.bf16.mxu0 %v5431
      %5832 = vmatmul.mubr.bf16.gmra.mxu0 %v5430
      %v5833 = vpop.f32.mrf.mxu0
      %v5834 = vadd.f32 0.0, %v5833
      %v5835 = vpop.f32.mrf.mxu0
      %v5836 = vpop.f32.mrf.mxu0
      %v5837 = vadd.f32 0.0, %v5836
      %v5838 = vpop.f32.mrf.mxu0
      %5839 = vmatprep.mubr.bf16.mxu0 %v5436
      %5840 = vmatmul.mubr.bf16.gmra.mxu0 %v5435
      %v5841 = vpop.f32.mrf.mxu0
      %v5842 = vadd.f32 0.0, %v5841
      %v5843 = vpop.f32.mrf.mxu0
      %v5844 = vpop.f32.mrf.mxu0
      %v5845 = vadd.f32 0.0, %v5844
      %v5846 = vpop.f32.mrf.mxu0
      %5847 = vmatprep.mubr.bf16.mxu0 %v5441
      %5848 = vmatmul.mubr.bf16.gmra.mxu0 %v5440
      %v5849 = vpop.f32.mrf.mxu0
      %v5850 = vadd.f32 0.0, %v5849
      %v5851 = vpop.f32.mrf.mxu0
      %v5852 = vpop.f32.mrf.mxu0
      %v5853 = vadd.f32 0.0, %v5852
      %v5854 = vpop.f32.mrf.mxu0
      %5855 = vmatprep.mubr.bf16.mxu0 %v5446
      %5856 = vmatmul.mubr.bf16.gmra.mxu0 %v5445
      %v5857 = vpop.f32.mrf.mxu0
      %v5858 = vadd.f32 0.0, %v5857
      %v5859 = vpop.f32.mrf.mxu0
      %v5860 = vpop.f32.mrf.mxu0
      %v5861 = vadd.f32 0.0, %v5860
      %v5862 = vpop.f32.mrf.mxu0
      %5863 = vmatprep.mubr.bf16.mxu0 %v5451
      %5864 = vmatmul.mubr.bf16.gmra.mxu0 %v5450
      %v5865 = vpop.f32.mrf.mxu0
      %v5866 = vadd.f32 0.0, %v5865
      %v5867 = vpop.f32.mrf.mxu0
      %v5868 = vpop.f32.mrf.mxu0
      %v5869 = vadd.f32 0.0, %v5868
      %v5870 = vpop.f32.mrf.mxu0
      %5871 = vmatprep.mubr.bf16.mxu0 %v5456
      %5872 = vmatmul.mubr.bf16.gmra.mxu0 %v5455
      %v5873 = vpop.f32.mrf.mxu0
      %v5874 = vadd.f32 0.0, %v5873
      %v5875 = vpop.f32.mrf.mxu0
      %v5876 = vpop.f32.mrf.mxu0
      %v5877 = vadd.f32 0.0, %v5876
      %v5878 = vpop.f32.mrf.mxu0
      %5879 = vmatprep.mubr.bf16.mxu0 %v5461
      %5880 = vmatmul.mubr.bf16.gmra.mxu0 %v5460
      %v5881 = vpop.f32.mrf.mxu0
      %v5882 = vadd.f32 0.0, %v5881
      %v5883 = vpop.f32.mrf.mxu0
      %v5884 = vpop.f32.mrf.mxu0
      %v5885 = vadd.f32 0.0, %v5884
      %v5886 = vpop.f32.mrf.mxu0
      %5887 = vmatprep.mubr.bf16.mxu0 %v5466
      %5888 = vmatmul.mubr.bf16.gmra.mxu0 %v5465
      %v5889 = vpop.f32.mrf.mxu0
      %v5890 = vadd.f32 0.0, %v5889
      %v5891 = vpop.f32.mrf.mxu0
      %v5892 = vpop.f32.mrf.mxu0
      %v5893 = vadd.f32 0.0, %v5892
      %v5894 = vpop.f32.mrf.mxu0
      %5895 = vmatprep.mubr.bf16.mxu0 %v5471
      %5896 = vmatmul.mubr.bf16.gmra.mxu0 %v5470
      %v5897 = vpop.f32.mrf.mxu0
      %v5898 = vadd.f32 0.0, %v5897
      %v5899 = vpop.f32.mrf.mxu0
      %v5900 = vpop.f32.mrf.mxu0
      %v5901 = vadd.f32 0.0, %v5900
      %v5902 = vpop.f32.mrf.mxu0
      %5903 = vdwg.mxu0
      %5904 = vmatprep.subr.bf16.mxu0 0
      %5905 = vmatpush1.bf16.msra.mxu0 %v5718
      %5906 = vmatprep.subr.bf16.mxu0 0
      %5907 = vmatpush1.bf16.msra.mxu0 %v5717
      %5908 = vmatprep.subr.bf16.mxu0 0
      %5909 = vmatpush1.bf16.msra.mxu0 %v5716
      %5910 = vmatprep.subr.bf16.mxu0 0
      %5911 = vmatpush1.bf16.msra.mxu0 %v5715
      %5912 = vmatprep.subr.bf16.mxu0 0
      %5913 = vmatpush1.bf16.msra.mxu0 %v5714
      %5914 = vmatprep.subr.bf16.mxu0 0
      %5915 = vmatpush1.bf16.msra.mxu0 %v5713
      %5916 = vmatprep.subr.bf16.mxu0 0
      %5917 = vmatpush1.bf16.msra.mxu0 %v5712
      %5918 = vmatprep.subr.bf16.mxu0 0
      %5919 = vmatpush1.bf16.msra.mxu0 %v5711
      %5920 = vmatprep.subr.bf16.mxu0 0
      %5921 = vmatpush2.bf16.msra.mxu0 %v5726
      %5922 = vmatprep.subr.bf16.mxu0 0
      %5923 = vmatpush2.bf16.msra.mxu0 %v5725
      %5924 = vmatprep.subr.bf16.mxu0 0
      %5925 = vmatpush2.bf16.msra.mxu0 %v5724
      %5926 = vmatprep.subr.bf16.mxu0 0
      %5927 = vmatpush2.bf16.msra.mxu0 %v5723
      %5928 = vmatprep.subr.bf16.mxu0 0
      %5929 = vmatpush2.bf16.msra.mxu0 %v5722
      %5930 = vmatprep.subr.bf16.mxu0 0
      %5931 = vmatpush2.bf16.msra.mxu0 %v5721
      %5932 = vmatprep.subr.bf16.mxu0 0
      %5933 = vmatpush2.bf16.msra.mxu0 %v5720
      %5934 = vmatprep.subr.bf16.mxu0 0
      %5935 = vmatpush2.bf16.msra.mxu0 %v5719
      %5936 = vmatprep.mubr.bf16.mxu0 %v5418
      %5937 = vmatmul.mubr.bf16.gmra.mxu0 %v5417
      %v5938 = vpop.f32.mrf.mxu0
      %v5939 = vadd.f32 %v5810, %v5938
      %v5940 = vpop.f32.mrf.mxu0
      %v5941 = vpop.f32.mrf.mxu0
      %v5942 = vadd.f32 %v5813, %v5941
      %v5943 = vpop.f32.mrf.mxu0
      %5944 = vmatprep.mubr.bf16.mxu0 %v5423
      %5945 = vmatmul.mubr.bf16.gmra.mxu0 %v5422
      %v5946 = vpop.f32.mrf.mxu0
      %v5947 = vadd.f32 %v5818, %v5946
      %v5948 = vpop.f32.mrf.mxu0
      %v5949 = vpop.f32.mrf.mxu0
      %v5950 = vadd.f32 %v5821, %v5949
      %v5951 = vpop.f32.mrf.mxu0
      %5952 = vmatprep.mubr.bf16.mxu0 %v5428
      %5953 = vmatmul.mubr.bf16.gmra.mxu0 %v5427
      %v5954 = vpop.f32.mrf.mxu0
      %v5955 = vadd.f32 %v5826, %v5954
      %v5956 = vpop.f32.mrf.mxu0
      %v5957 = vpop.f32.mrf.mxu0
      %v5958 = vadd.f32 %v5829, %v5957
      %v5959 = vpop.f32.mrf.mxu0
      %5960 = vmatprep.mubr.bf16.mxu0 %v5433
      %5961 = vmatmul.mubr.bf16.gmra.mxu0 %v5432
      %v5962 = vpop.f32.mrf.mxu0
      %v5963 = vadd.f32 %v5834, %v5962
      %v5964 = vpop.f32.mrf.mxu0
      %v5965 = vpop.f32.mrf.mxu0
      %v5966 = vadd.f32 %v5837, %v5965
      %v5967 = vpop.f32.mrf.mxu0
      %5968 = vmatprep.mubr.bf16.mxu0 %v5438
      %5969 = vmatmul.mubr.bf16.gmra.mxu0 %v5437
      %v5970 = vpop.f32.mrf.mxu0
      %v5971 = vadd.f32 %v5842, %v5970
      %v5972 = vpop.f32.mrf.mxu0
      %v5973 = vpop.f32.mrf.mxu0
      %v5974 = vadd.f32 %v5845, %v5973
      %v5975 = vpop.f32.mrf.mxu0
      %5976 = vmatprep.mubr.bf16.mxu0 %v5443
      %5977 = vmatmul.mubr.bf16.gmra.mxu0 %v5442
      %v5978 = vpop.f32.mrf.mxu0
      %v5979 = vadd.f32 %v5850, %v5978
      %v5980 = vpop.f32.mrf.mxu0
      %v5981 = vpop.f32.mrf.mxu0
      %v5982 = vadd.f32 %v5853, %v5981
      %v5983 = vpop.f32.mrf.mxu0
      %5984 = vmatprep.mubr.bf16.mxu0 %v5448
      %5985 = vmatmul.mubr.bf16.gmra.mxu0 %v5447
      %v5986 = vpop.f32.mrf.mxu0
      %v5987 = vadd.f32 %v5858, %v5986
      %v5988 = vpop.f32.mrf.mxu0
      %v5989 = vpop.f32.mrf.mxu0
      %v5990 = vadd.f32 %v5861, %v5989
      %v5991 = vpop.f32.mrf.mxu0
      %5992 = vmatprep.mubr.bf16.mxu0 %v5453
      %5993 = vmatmul.mubr.bf16.gmra.mxu0 %v5452
      %v5994 = vpop.f32.mrf.mxu0
      %v5995 = vadd.f32 %v5866, %v5994
      %v5996 = vpop.f32.mrf.mxu0
      %v5997 = vpop.f32.mrf.mxu0
      %v5998 = vadd.f32 %v5869, %v5997
      %v5999 = vpop.f32.mrf.mxu0
      %6000 = vmatprep.mubr.bf16.mxu0 %v5458
      %6001 = vmatmul.mubr.bf16.gmra.mxu0 %v5457
      %v6002 = vpop.f32.mrf.mxu0
      %v6003 = vadd.f32 %v5874, %v6002
      %v6004 = vpop.f32.mrf.mxu0
      %v6005 = vpop.f32.mrf.mxu0
      %v6006 = vadd.f32 %v5877, %v6005
      %v6007 = vpop.f32.mrf.mxu0
      %6008 = vmatprep.mubr.bf16.mxu0 %v5463
      %6009 = vmatmul.mubr.bf16.gmra.mxu0 %v5462
      %v6010 = vpop.f32.mrf.mxu0
      %v6011 = vadd.f32 %v5882, %v6010
      %v6012 = vpop.f32.mrf.mxu0
      %v6013 = vpop.f32.mrf.mxu0
      %v6014 = vadd.f32 %v5885, %v6013
      %v6015 = vpop.f32.mrf.mxu0
      %6016 = vmatprep.mubr.bf16.mxu0 %v5468
      %6017 = vmatmul.mubr.bf16.gmra.mxu0 %v5467
      %v6018 = vpop.f32.mrf.mxu0
      %v6019 = vadd.f32 %v5890, %v6018
      %v6020 = vpop.f32.mrf.mxu0
      %v6021 = vpop.f32.mrf.mxu0
      %v6022 = vadd.f32 %v5893, %v6021
      %v6023 = vpop.f32.mrf.mxu0
      %6024 = vmatprep.mubr.bf16.mxu0 %v5473
      %6025 = vmatmul.mubr.bf16.gmra.mxu0 %v5472
      %v6026 = vpop.f32.mrf.mxu0
      %v6027 = vadd.f32 %v5898, %v6026
      %v6028 = vpop.f32.mrf.mxu0
      %v6029 = vpop.f32.mrf.mxu0
      %v6030 = vadd.f32 %v5901, %v6029
      %v6031 = vpop.f32.mrf.mxu0
      %6032 = vdwg.mxu0
      %6033 = vmatprep.subr.bf16.mxu0 0
      %6034 = vmatpush1.bf16.msra.mxu0 %v5734
      %6035 = vmatprep.subr.bf16.mxu0 0
      %6036 = vmatpush1.bf16.msra.mxu0 %v5733
      %6037 = vmatprep.subr.bf16.mxu0 0
      %6038 = vmatpush1.bf16.msra.mxu0 %v5732
      %6039 = vmatprep.subr.bf16.mxu0 0
      %6040 = vmatpush1.bf16.msra.mxu0 %v5731
      %6041 = vmatprep.subr.bf16.mxu0 0
      %6042 = vmatpush1.bf16.msra.mxu0 %v5730
      %6043 = vmatprep.subr.bf16.mxu0 0
      %6044 = vmatpush1.bf16.msra.mxu0 %v5729
      %6045 = vmatprep.subr.bf16.mxu0 0
      %6046 = vmatpush1.bf16.msra.mxu0 %v5728
      %6047 = vmatprep.subr.bf16.mxu0 0
      %6048 = vmatpush1.bf16.msra.mxu0 %v5727
      %6049 = vmatprep.subr.bf16.mxu0 0
      %6050 = vmatpush2.bf16.msra.mxu0 0
      %6051 = vmatprep.subr.bf16.mxu0 0
      %6052 = vmatpush2.bf16.msra.mxu0 0
      %6053 = vmatprep.subr.bf16.mxu0 0
      %6054 = vmatpush2.bf16.msra.mxu0 0
      %6055 = vmatprep.subr.bf16.mxu0 0
      %6056 = vmatpush2.bf16.msra.mxu0 0
      %6057 = vmatprep.subr.bf16.mxu0 0
      %6058 = vmatpush2.bf16.msra.mxu0 0
      %6059 = vmatprep.subr.bf16.mxu0 0
      %6060 = vmatpush2.bf16.msra.mxu0 0
      %6061 = vmatprep.subr.bf16.mxu0 0
      %6062 = vmatpush2.bf16.msra.mxu0 0
      %6063 = vmatprep.subr.bf16.mxu0 0
      %6064 = vmatpush2.bf16.msra.mxu0 0
      %6065 = vmatprep.mubr.bf16.mxu0 0
      %6066 = vmatmul.mubr.bf16.gmra.mxu0 %v5419
      %v6067 = vpop.f32.mrf.mxu0
      %v6068 = vadd.f32 %v5939, %v6067
      %v6069 = vpop.f32.mrf.mxu0
      %v6070 = vpop.f32.mrf.mxu0
      %v6071 = vadd.f32 %v5942, %v6070
      %v6072 = vpop.f32.mrf.mxu0
      %6073 = vmatprep.mubr.bf16.mxu0 0
      %6074 = vmatmul.mubr.bf16.gmra.mxu0 %v5424
      %v6075 = vpop.f32.mrf.mxu0
      %v6076 = vadd.f32 %v5947, %v6075
      %v6077 = vpop.f32.mrf.mxu0
      %v6078 = vpop.f32.mrf.mxu0
      %v6079 = vadd.f32 %v5950, %v6078
      %v6080 = vpop.f32.mrf.mxu0
      %6081 = vmatprep.mubr.bf16.mxu0 0
      %6082 = vmatmul.mubr.bf16.gmra.mxu0 %v5429
      %v6083 = vpop.f32.mrf.mxu0
      %v6084 = vadd.f32 %v5955, %v6083
      %v6085 = vpop.f32.mrf.mxu0
      %v6086 = vpop.f32.mrf.mxu0
      %v6087 = vadd.f32 %v5958, %v6086
      %v6088 = vpop.f32.mrf.mxu0
      %6089 = vmatprep.mubr.bf16.mxu0 0
      %6090 = vmatmul.mubr.bf16.gmra.mxu0 %v5434
      %v6091 = vpop.f32.mrf.mxu0
      %v6092 = vadd.f32 %v5963, %v6091
      %v6093 = vpop.f32.mrf.mxu0
      %v6094 = vpop.f32.mrf.mxu0
      %v6095 = vadd.f32 %v5966, %v6094
      %v6096 = vpop.f32.mrf.mxu0
      %6097 = vmatprep.mubr.bf16.mxu0 0
      %6098 = vmatmul.mubr.bf16.gmra.mxu0 %v5439
      %v6099 = vpop.f32.mrf.mxu0
      %v6100 = vadd.f32 %v5971, %v6099
      %v6101 = vpop.f32.mrf.mxu0
      %v6102 = vpop.f32.mrf.mxu0
      %v6103 = vadd.f32 %v5974, %v6102
      %v6104 = vpop.f32.mrf.mxu0
      %6105 = vmatprep.mubr.bf16.mxu0 0
      %6106 = vmatmul.mubr.bf16.gmra.mxu0 %v5444
      %v6107 = vpop.f32.mrf.mxu0
      %v6108 = vadd.f32 %v5979, %v6107
      %v6109 = vpop.f32.mrf.mxu0
      %v6110 = vpop.f32.mrf.mxu0
      %v6111 = vadd.f32 %v5982, %v6110
      %v6112 = vpop.f32.mrf.mxu0
      %6113 = vmatprep.mubr.bf16.mxu0 0
      %6114 = vmatmul.mubr.bf16.gmra.mxu0 %v5449
      %v6115 = vpop.f32.mrf.mxu0
      %v6116 = vadd.f32 %v5987, %v6115
      %v6117 = vpop.f32.mrf.mxu0
      %v6118 = vpop.f32.mrf.mxu0
      %v6119 = vadd.f32 %v5990, %v6118
      %v6120 = vpop.f32.mrf.mxu0
      %6121 = vmatprep.mubr.bf16.mxu0 0
      %6122 = vmatmul.mubr.bf16.gmra.mxu0 %v5454
      %v6123 = vpop.f32.mrf.mxu0
      %v6124 = vadd.f32 %v5995, %v6123
      %v6125 = vpop.f32.mrf.mxu0
      %v6126 = vpop.f32.mrf.mxu0
      %v6127 = vadd.f32 %v5998, %v6126
      %v6128 = vpop.f32.mrf.mxu0
      %6129 = vmatprep.mubr.bf16.mxu0 0
      %6130 = vmatmul.mubr.bf16.gmra.mxu0 %v5459
      %v6131 = vpop.f32.mrf.mxu0
      %v6132 = vadd.f32 %v6003, %v6131
      %v6133 = vpop.f32.mrf.mxu0
      %v6134 = vpop.f32.mrf.mxu0
      %v6135 = vadd.f32 %v6006, %v6134
      %v6136 = vpop.f32.mrf.mxu0
      %6137 = vmatprep.mubr.bf16.mxu0 0
      %6138 = vmatmul.mubr.bf16.gmra.mxu0 %v5464
      %v6139 = vpop.f32.mrf.mxu0
      %v6140 = vadd.f32 %v6011, %v6139
      %v6141 = vpop.f32.mrf.mxu0
      %v6142 = vpop.f32.mrf.mxu0
      %v6143 = vadd.f32 %v6014, %v6142
      %v6144 = vpop.f32.mrf.mxu0
      %6145 = vmatprep.mubr.bf16.mxu0 0
      %6146 = vmatmul.mubr.bf16.gmra.mxu0 %v5469
      %v6147 = vpop.f32.mrf.mxu0
      %v6148 = vadd.f32 %v6019, %v6147
      %v6149 = vpop.f32.mrf.mxu0
      %v6150 = vpop.f32.mrf.mxu0
      %v6151 = vadd.f32 %v6022, %v6150
      %v6152 = vpop.f32.mrf.mxu0
      %6153 = vmatprep.mubr.bf16.mxu0 0
      %6154 = vmatmul.mubr.bf16.gmra.mxu0 %v5474
      %v6155 = vpop.f32.mrf.mxu0
      %v6156 = vadd.f32 %v6027, %v6155
      %v6157 = vpop.f32.mrf.mxu0
      %v6158 = vpop.f32.mrf.mxu0
      %v6159 = vadd.f32 %v6030, %v6158
      %v6160 = vpop.f32.mrf.mxu0
      %6161 = vdwg.mxu0
      %v6162 = vadd.f32 %v5040, %v6068
      %v6163 = vadd.f32 %v5041, %v6071
      %v6164 = vadd.f32 %v5042, %v6076
      %v6165 = vadd.f32 %v5043, %v6079
      %v6166 = vadd.f32 %v5044, %v6084
      %v6167 = vadd.f32 %v5045, %v6087
      %v6168 = vadd.f32 %v5046, %v6092
      %v6169 = vadd.f32 %v5047, %v6095
      %v6170 = vadd.f32 %v5048, %v6100
      %v6171 = vadd.f32 %v5049, %v6103
      %v6172 = vadd.f32 %v5050, %v6108
      %v6173 = vadd.f32 %v5051, %v6111
      %v6174 = vadd.f32 %v5052, %v6116
      %v6175 = vadd.f32 %v5053, %v6119
      %v6176 = vadd.f32 %v5054, %v6124
      %v6177 = vadd.f32 %v5055, %v6127
      %v6178 = vadd.f32 %v5056, %v6132
      %v6179 = vadd.f32 %v5057, %v6135
      %v6180 = vadd.f32 %v5058, %v6140
      %v6181 = vadd.f32 %v5059, %v6143
      %v6182 = vadd.f32 %v5060, %v6148
      %v6183 = vadd.f32 %v5061, %v6151
      %v6184 = vadd.f32 %v5062, %v6156
      %v6185 = vadd.f32 %v5063, %v6159
      %s6186 = sadd.s32 %s1747, 64
      %s6187 = sshra.s32 %s6186, 3
      %s6188 = sand.u32 %s6186, 7
      %s6189 = smul.u32 %s6187, 5
      %s6190 = smul.addr %s6189, 4
      %s6191 = scalar_lea.vmem [#allocation2], %s6190
      %v6192 = vld [vmem:[%s6191] sm:$0xff]
      %v6193 = vld [vmem:[%s6191 + $0x8] sm:$0xff]
      %v6194 = vld [vmem:[%s6191 + $0x10] sm:$0xf]
      %v6195 = vld [vmem:[%s6191 + $0x14] sm:$0xff]
      %v6196 = vld [vmem:[%s6191 + $0x1c] sm:$0xff]
      %v6197 = vld [vmem:[%s6191 + $0x24] sm:$0xf]
      %v6198 = vld [vmem:[%s6191 + $0x28] sm:$0xff]
      %v6199 = vld [vmem:[%s6191 + $0x30] sm:$0xff]
      %v6200 = vld [vmem:[%s6191 + $0x38] sm:$0xf]
      %v6201 = vld [vmem:[%s6191 + $0x3c] sm:$0xff]
      %v6202 = vld [vmem:[%s6191 + $0x44] sm:$0xff]
      %v6203 = vld [vmem:[%s6191 + $0x4c] sm:$0xf]
      %v6204 = vld [vmem:[%s6191 + $0x50] sm:$0xff]
      %v6205 = vld [vmem:[%s6191 + $0x58] sm:$0xff]
      %v6206 = vld [vmem:[%s6191 + $0x60] sm:$0xf]
      %v6207 = vld [vmem:[%s6191 + $0x64] sm:$0xff]
      %v6208 = vld [vmem:[%s6191 + $0x6c] sm:$0xff]
      %v6209 = vld [vmem:[%s6191 + $0x74] sm:$0xf]
      %v6210 = vld [vmem:[%s6191 + $0x78] sm:$0xff]
      %v6211 = vld [vmem:[%s6191 + $0x80] sm:$0xff]
      %v6212 = vld [vmem:[%s6191 + $0x88] sm:$0xf]
      %v6213 = vld [vmem:[%s6191 + $0x8c] sm:$0xff]
      %v6214 = vld [vmem:[%s6191 + $0x94] sm:$0xff]
      %v6215 = vld [vmem:[%s6191 + $0x9c] sm:$0xf]
      %v6216 = vld [vmem:[%s6191 + $0xa0] sm:$0xff]
      %v6217 = vld [vmem:[%s6191 + $0xa8] sm:$0xff]
      %v6218 = vld [vmem:[%s6191 + $0xb0] sm:$0xf]
      %v6219 = vld [vmem:[%s6191 + $0xb4] sm:$0xff]
      %v6220 = vld [vmem:[%s6191 + $0xbc] sm:$0xff]
      %v6221 = vld [vmem:[%s6191 + $0xc4] sm:$0xf]
      %v6222 = vld [vmem:[%s6191 + $0xc8] sm:$0xff]
      %v6223 = vld [vmem:[%s6191 + $0xd0] sm:$0xff]
      %v6224 = vld [vmem:[%s6191 + $0xd8] sm:$0xf]
      %v6225 = vld [vmem:[%s6191 + $0xdc] sm:$0xff]
      %v6226 = vld [vmem:[%s6191 + $0xe4] sm:$0xff]
      %v6227 = vld [vmem:[%s6191 + $0xec] sm:$0xf]
      %v6228 = vld [vmem:[%s6191 + $0xf0] sm:$0xff]
      %v6229 = vld [vmem:[%s6191 + $0xf8] sm:$0xff]
      %v6230 = vld [vmem:[%s6191 + $0x100] sm:$0xf]
      %v6231 = vld [vmem:[%s6191 + $0x104] sm:$0xff]
      %v6232 = vld [vmem:[%s6191 + $0x10c] sm:$0xff]
      %v6233 = vld [vmem:[%s6191 + $0x114] sm:$0xf]
      %v6234 = vld [vmem:[%s6191 + $0x118] sm:$0xff]
      %v6235 = vld [vmem:[%s6191 + $0x120] sm:$0xff]
      %v6236 = vld [vmem:[%s6191 + $0x128] sm:$0xf]
      %v6237 = vld [vmem:[%s6191 + $0x12c] sm:$0xff]
      %v6238 = vld [vmem:[%s6191 + $0x134] sm:$0xff]
      %v6239 = vld [vmem:[%s6191 + $0x13c] sm:$0xf]
      %v6240 = vld [vmem:[%s6191 + $0x140] sm:$0xff]
      %v6241 = vld [vmem:[%s6191 + $0x148] sm:$0xff]
      %v6242 = vld [vmem:[%s6191 + $0x150] sm:$0xf]
      %v6243 = vld [vmem:[%s6191 + $0x154] sm:$0xff]
      %v6244 = vld [vmem:[%s6191 + $0x15c] sm:$0xff]
      %v6245 = vld [vmem:[%s6191 + $0x164] sm:$0xf]
      %v6246 = vld [vmem:[%s6191 + $0x168] sm:$0xff]
      %v6247 = vld [vmem:[%s6191 + $0x170] sm:$0xff]
      %v6248 = vld [vmem:[%s6191 + $0x178] sm:$0xf]
      %v6249 = vld [vmem:[%s6191 + $0x17c] sm:$0xff]
      %v6250 = vld [vmem:[%s6191 + $0x184] sm:$0xff]
      %v6251 = vld [vmem:[%s6191 + $0x18c] sm:$0xf]
      %v6252 = vld [vmem:[%s6191 + $0x190] sm:$0xff]
      %v6253 = vld [vmem:[%s6191 + $0x198] sm:$0xff]
      %v6254 = vld [vmem:[%s6191 + $0x1a0] sm:$0xf]
      %v6255 = vld [vmem:[%s6191 + $0x1a4] sm:$0xff]
      %v6256 = vld [vmem:[%s6191 + $0x1ac] sm:$0xff]
      %v6257 = vld [vmem:[%s6191 + $0x1b4] sm:$0xf]
      %v6258 = vld [vmem:[%s6191 + $0x1b8] sm:$0xff]
      %v6259 = vld [vmem:[%s6191 + $0x1c0] sm:$0xff]
      %v6260 = vld [vmem:[%s6191 + $0x1c8] sm:$0xf]
      %v6261 = vld [vmem:[%s6191 + $0x1cc] sm:$0xff]
      %v6262 = vld [vmem:[%s6191 + $0x1d4] sm:$0xff]
      %v6263 = vld [vmem:[%s6191 + $0x1dc] sm:$0xf]
      %s6264 = scalar_lea.vmem %s3, 1280
      %v6265 = vld [vmem:[%s6264] sm:$0xf]
      %v6266 = vld [vmem:[%s6264 + $0x4] sm:$0xf]
      %v6267 = vld [vmem:[%s6264 + $0x8] sm:$0xf]
      %v6268 = vld [vmem:[%s6264 + $0xc] sm:$0xf]
      %v6269 = vld [vmem:[%s6264 + $0x10] sm:$0xf]
      %v6270 = vld [vmem:[%s6264 + $0x14] sm:$0xf]
      %v6271 = vld [vmem:[%s6264 + $0x18] sm:$0xf]
      %v6272 = vld [vmem:[%s6264 + $0x1c] sm:$0xf]
      %v6273 = vld [vmem:[%s6264 + $0x20] sm:$0xf]
      %v6274 = vld [vmem:[%s6264 + $0x24] sm:$0xf]
      %v6275 = vld [vmem:[%s6264 + $0x28] sm:$0xf]
      %v6276 = vld [vmem:[%s6264 + $0x2c] sm:$0xf]
      %v6277 = vld [vmem:[%s6264 + $0x30] sm:$0xf]
      %v6278 = vld [vmem:[%s6264 + $0x34] sm:$0xf]
      %v6279 = vld [vmem:[%s6264 + $0x38] sm:$0xf]
      %v6280 = vld [vmem:[%s6264 + $0x3c] sm:$0xf]
      %v6281 = vld [vmem:[%s6264 + $0x40] sm:$0xf]
      %v6282 = vld [vmem:[%s6264 + $0x44] sm:$0xf]
      %v6283 = vld [vmem:[%s6264 + $0x48] sm:$0xf]
      %v6284 = vld [vmem:[%s6264 + $0x4c] sm:$0xf]
      %v6285 = vld [vmem:[%s6264 + $0x50] sm:$0xf]
      %v6286 = vld [vmem:[%s6264 + $0x54] sm:$0xf]
      %v6287 = vld [vmem:[%s6264 + $0x58] sm:$0xf]
      %v6288 = vld [vmem:[%s6264 + $0x5c] sm:$0xf]
      %v6289 = vld [vmem:[%s6264 + $0x60] sm:$0xf]
      %v6290 = vld [vmem:[%s6264 + $0x64] sm:$0xf]
      %v6291 = vld [vmem:[%s6264 + $0x68] sm:$0xf]
      %v6292 = vld [vmem:[%s6264 + $0x6c] sm:$0xf]
      %v6293 = vld [vmem:[%s6264 + $0x70] sm:$0xf]
      %v6294 = vld [vmem:[%s6264 + $0x74] sm:$0xf]
      %v6295 = vld [vmem:[%s6264 + $0x78] sm:$0xf]
      %v6296 = vld [vmem:[%s6264 + $0x7c] sm:$0xf]
      %v6297 = vld [vmem:[%s6264 + $0x80] sm:$0xf]
      %v6298 = vld [vmem:[%s6264 + $0x84] sm:$0xf]
      %v6299 = vld [vmem:[%s6264 + $0x88] sm:$0xf]
      %v6300 = vld [vmem:[%s6264 + $0x8c] sm:$0xf]
      %v6301 = vld [vmem:[%s6264 + $0x90] sm:$0xf]
      %v6302 = vld [vmem:[%s6264 + $0x94] sm:$0xf]
      %v6303 = vld [vmem:[%s6264 + $0x98] sm:$0xf]
      %v6304 = vld [vmem:[%s6264 + $0x9c] sm:$0xf]
      %v6305 = vld [vmem:[%s6264 + $0xa0] sm:$0xf]
      %v6306 = vld [vmem:[%s6264 + $0xa4] sm:$0xf]
      %v6307 = vld [vmem:[%s6264 + $0xa8] sm:$0xf]
      %v6308 = vld [vmem:[%s6264 + $0xac] sm:$0xf]
      %v6309 = vld [vmem:[%s6264 + $0xb0] sm:$0xf]
      %v6310 = vld [vmem:[%s6264 + $0xb4] sm:$0xf]
      %v6311 = vld [vmem:[%s6264 + $0xb8] sm:$0xf]
      %v6312 = vld [vmem:[%s6264 + $0xbc] sm:$0xf]
      %v6313 = vld [vmem:[%s6264 + $0xc0] sm:$0xf]
      %v6314 = vld [vmem:[%s6264 + $0xc4] sm:$0xf]
      %v6315 = vld [vmem:[%s6264 + $0xc8] sm:$0xf]
      %v6316 = vld [vmem:[%s6264 + $0xcc] sm:$0xf]
      %v6317 = vld [vmem:[%s6264 + $0xd0] sm:$0xf]
      %v6318 = vld [vmem:[%s6264 + $0xd4] sm:$0xf]
      %v6319 = vld [vmem:[%s6264 + $0xd8] sm:$0xf]
      %v6320 = vld [vmem:[%s6264 + $0xdc] sm:$0xf]
      %v6321 = vld [vmem:[%s6264 + $0xe0] sm:$0xf]
      %v6322 = vld [vmem:[%s6264 + $0xe4] sm:$0xf]
      %v6323 = vld [vmem:[%s6264 + $0xe8] sm:$0xf]
      %v6324 = vld [vmem:[%s6264 + $0xec] sm:$0xf]
      %v6325 = vld [vmem:[%s6264 + $0xf0] sm:$0xf]
      %v6326 = vld [vmem:[%s6264 + $0xf4] sm:$0xf]
      %v6327 = vld [vmem:[%s6264 + $0xf8] sm:$0xf]
      %v6328 = vld [vmem:[%s6264 + $0xfc] sm:$0xf]
      %v6329 = vld [vmem:[%s6264 + $0x100] sm:$0xf]
      %v6330 = vld [vmem:[%s6264 + $0x104] sm:$0xf]
      %v6331 = vld [vmem:[%s6264 + $0x108] sm:$0xf]
      %v6332 = vld [vmem:[%s6264 + $0x10c] sm:$0xf]
      %v6333 = vld [vmem:[%s6264 + $0x110] sm:$0xf]
      %v6334 = vld [vmem:[%s6264 + $0x114] sm:$0xf]
      %v6335 = vld [vmem:[%s6264 + $0x118] sm:$0xf]
      %v6336 = vld [vmem:[%s6264 + $0x11c] sm:$0xf]
      %v6337 = vld [vmem:[%s6264 + $0x120] sm:$0xf]
      %v6338 = vld [vmem:[%s6264 + $0x124] sm:$0xf]
      %v6339 = vld [vmem:[%s6264 + $0x128] sm:$0xf]
      %v6340 = vld [vmem:[%s6264 + $0x12c] sm:$0xf]
      %v6341 = vld [vmem:[%s6264 + $0x130] sm:$0xf]
      %v6342 = vld [vmem:[%s6264 + $0x134] sm:$0xf]
      %v6343 = vld [vmem:[%s6264 + $0x138] sm:$0xf]
      %v6344 = vld [vmem:[%s6264 + $0x13c] sm:$0xf]
      %v6417 = vunpack.c.l.b16 %v6192
      %v6418 = vunpack.c.h.b16 %v6192
      %v6419 = vunpack.c.l.b16 %v6193
      %v6420 = vunpack.c.h.b16 %v6193
      %v6421 = vunpack.c.l.b16 %v6194
      %v6422 = vunpack.c.l.b16 %v6195
      %v6423 = vunpack.c.h.b16 %v6195
      %v6424 = vunpack.c.l.b16 %v6196
      %v6425 = vunpack.c.h.b16 %v6196
      %v6426 = vunpack.c.l.b16 %v6197
      %v6427 = vunpack.c.l.b16 %v6198
      %v6428 = vunpack.c.h.b16 %v6198
      %v6429 = vunpack.c.l.b16 %v6199
      %v6430 = vunpack.c.h.b16 %v6199
      %v6431 = vunpack.c.l.b16 %v6200
      %v6432 = vunpack.c.l.b16 %v6201
      %v6433 = vunpack.c.h.b16 %v6201
      %v6434 = vunpack.c.l.b16 %v6202
      %v6435 = vunpack.c.h.b16 %v6202
      %v6436 = vunpack.c.l.b16 %v6203
      %v6437 = vunpack.c.l.b16 %v6204
      %v6438 = vunpack.c.h.b16 %v6204
      %v6439 = vunpack.c.l.b16 %v6205
      %v6440 = vunpack.c.h.b16 %v6205
      %v6441 = vunpack.c.l.b16 %v6206
      %v6442 = vunpack.c.l.b16 %v6207
      %v6443 = vunpack.c.h.b16 %v6207
      %v6444 = vunpack.c.l.b16 %v6208
      %v6445 = vunpack.c.h.b16 %v6208
      %v6446 = vunpack.c.l.b16 %v6209
      %v6447 = vunpack.c.l.b16 %v6210
      %v6448 = vunpack.c.h.b16 %v6210
      %v6449 = vunpack.c.l.b16 %v6211
      %v6450 = vunpack.c.h.b16 %v6211
      %v6451 = vunpack.c.l.b16 %v6212
      %v6452 = vunpack.c.l.b16 %v6213
      %v6453 = vunpack.c.h.b16 %v6213
      %v6454 = vunpack.c.l.b16 %v6214
      %v6455 = vunpack.c.h.b16 %v6214
      %v6456 = vunpack.c.l.b16 %v6215
      %v6457 = vunpack.c.l.b16 %v6216
      %v6458 = vunpack.c.h.b16 %v6216
      %v6459 = vunpack.c.l.b16 %v6217
      %v6460 = vunpack.c.h.b16 %v6217
      %v6461 = vunpack.c.l.b16 %v6218
      %v6462 = vunpack.c.l.b16 %v6219
      %v6463 = vunpack.c.h.b16 %v6219
      %v6464 = vunpack.c.l.b16 %v6220
      %v6465 = vunpack.c.h.b16 %v6220
      %v6466 = vunpack.c.l.b16 %v6221
      %v6467 = vunpack.c.l.b16 %v6222
      %v6468 = vunpack.c.h.b16 %v6222
      %v6469 = vunpack.c.l.b16 %v6223
      %v6470 = vunpack.c.h.b16 %v6223
      %v6471 = vunpack.c.l.b16 %v6224
      %v6472 = vunpack.c.l.b16 %v6225
      %v6473 = vunpack.c.h.b16 %v6225
      %v6474 = vunpack.c.l.b16 %v6226
      %v6475 = vunpack.c.h.b16 %v6226
      %v6476 = vunpack.c.l.b16 %v6227
      %v6477 = vunpack.c.l.b16 %v6228
      %v6478 = vunpack.c.h.b16 %v6228
      %v6479 = vunpack.c.l.b16 %v6229
      %v6480 = vunpack.c.h.b16 %v6229
      %v6481 = vunpack.c.l.b16 %v6230
      %v6482 = vunpack.c.l.b16 %v6231
      %v6483 = vunpack.c.h.b16 %v6231
      %v6484 = vunpack.c.l.b16 %v6232
      %v6485 = vunpack.c.h.b16 %v6232
      %v6486 = vunpack.c.l.b16 %v6233
      %v6487 = vunpack.c.l.b16 %v6234
      %v6488 = vunpack.c.h.b16 %v6234
      %v6489 = vunpack.c.l.b16 %v6235
      %v6490 = vunpack.c.h.b16 %v6235
      %v6491 = vunpack.c.l.b16 %v6236
      %v6492 = vunpack.c.l.b16 %v6237
      %v6493 = vunpack.c.h.b16 %v6237
      %v6494 = vunpack.c.l.b16 %v6238
      %v6495 = vunpack.c.h.b16 %v6238
      %v6496 = vunpack.c.l.b16 %v6239
      %v6497 = vunpack.c.l.b16 %v6240
      %v6498 = vunpack.c.h.b16 %v6240
      %v6499 = vunpack.c.l.b16 %v6241
      %v6500 = vunpack.c.h.b16 %v6241
      %v6501 = vunpack.c.l.b16 %v6242
      %v6502 = vunpack.c.l.b16 %v6243
      %v6503 = vunpack.c.h.b16 %v6243
      %v6504 = vunpack.c.l.b16 %v6244
      %v6505 = vunpack.c.h.b16 %v6244
      %v6506 = vunpack.c.l.b16 %v6245
      %v6507 = vunpack.c.l.b16 %v6246
      %v6508 = vunpack.c.h.b16 %v6246
      %v6509 = vunpack.c.l.b16 %v6247
      %v6510 = vunpack.c.h.b16 %v6247
      %v6511 = vunpack.c.l.b16 %v6248
      %v6512 = vunpack.c.l.b16 %v6249
      %v6513 = vunpack.c.h.b16 %v6249
      %v6514 = vunpack.c.l.b16 %v6250
      %v6515 = vunpack.c.h.b16 %v6250
      %v6516 = vunpack.c.l.b16 %v6251
      %v6517 = vunpack.c.l.b16 %v6252
      %v6518 = vunpack.c.h.b16 %v6252
      %v6519 = vunpack.c.l.b16 %v6253
      %v6520 = vunpack.c.h.b16 %v6253
      %v6521 = vunpack.c.l.b16 %v6254
      %v6522 = vunpack.c.l.b16 %v6255
      %v6523 = vunpack.c.h.b16 %v6255
      %v6524 = vunpack.c.l.b16 %v6256
      %v6525 = vunpack.c.h.b16 %v6256
      %v6526 = vunpack.c.l.b16 %v6257
      %v6527 = vunpack.c.l.b16 %v6258
      %v6528 = vunpack.c.h.b16 %v6258
      %v6529 = vunpack.c.l.b16 %v6259
      %v6530 = vunpack.c.h.b16 %v6259
      %v6531 = vunpack.c.l.b16 %v6260
      %v6532 = vunpack.c.l.b16 %v6261
      %v6533 = vunpack.c.h.b16 %v6261
      %v6534 = vunpack.c.l.b16 %v6262
      %v6535 = vunpack.c.h.b16 %v6262
      %v6536 = vunpack.c.l.b16 %v6263
      %v6537 = vpack.c.b16 %v6422, %v6417
      %v6538 = vpack.c.b16 %v6423, %v6418
      %v6539 = vpack.c.b16 %v6424, %v6419
      %v6540 = vpack.c.b16 %v6425, %v6420
      %v6541 = vpack.c.b16 %v6426, %v6421
      %v6542 = vpack.c.b16 %v6432, %v6427
      %v6543 = vpack.c.b16 %v6433, %v6428
      %v6544 = vpack.c.b16 %v6434, %v6429
      %v6545 = vpack.c.b16 %v6435, %v6430
      %v6546 = vpack.c.b16 %v6436, %v6431
      %v6547 = vpack.c.b16 %v6442, %v6437
      %v6548 = vpack.c.b16 %v6443, %v6438
      %v6549 = vpack.c.b16 %v6444, %v6439
      %v6550 = vpack.c.b16 %v6445, %v6440
      %v6551 = vpack.c.b16 %v6446, %v6441
      %v6552 = vpack.c.b16 %v6452, %v6447
      %v6553 = vpack.c.b16 %v6453, %v6448
      %v6554 = vpack.c.b16 %v6454, %v6449
      %v6555 = vpack.c.b16 %v6455, %v6450
      %v6556 = vpack.c.b16 %v6456, %v6451
      %v6557 = vpack.c.b16 %v6462, %v6457
      %v6558 = vpack.c.b16 %v6463, %v6458
      %v6559 = vpack.c.b16 %v6464, %v6459
      %v6560 = vpack.c.b16 %v6465, %v6460
      %v6561 = vpack.c.b16 %v6466, %v6461
      %v6562 = vpack.c.b16 %v6472, %v6467
      %v6563 = vpack.c.b16 %v6473, %v6468
      %v6564 = vpack.c.b16 %v6474, %v6469
      %v6565 = vpack.c.b16 %v6475, %v6470
      %v6566 = vpack.c.b16 %v6476, %v6471
      %v6567 = vpack.c.b16 %v6482, %v6477
      %v6568 = vpack.c.b16 %v6483, %v6478
      %v6569 = vpack.c.b16 %v6484, %v6479
      %v6570 = vpack.c.b16 %v6485, %v6480
      %v6571 = vpack.c.b16 %v6486, %v6481
      %v6572 = vpack.c.b16 %v6492, %v6487
      %v6573 = vpack.c.b16 %v6493, %v6488
      %v6574 = vpack.c.b16 %v6494, %v6489
      %v6575 = vpack.c.b16 %v6495, %v6490
      %v6576 = vpack.c.b16 %v6496, %v6491
      %v6577 = vpack.c.b16 %v6502, %v6497
      %v6578 = vpack.c.b16 %v6503, %v6498
      %v6579 = vpack.c.b16 %v6504, %v6499
      %v6580 = vpack.c.b16 %v6505, %v6500
      %v6581 = vpack.c.b16 %v6506, %v6501
      %v6582 = vpack.c.b16 %v6512, %v6507
      %v6583 = vpack.c.b16 %v6513, %v6508
      %v6584 = vpack.c.b16 %v6514, %v6509
      %v6585 = vpack.c.b16 %v6515, %v6510
      %v6586 = vpack.c.b16 %v6516, %v6511
      %v6587 = vpack.c.b16 %v6522, %v6517
      %v6588 = vpack.c.b16 %v6523, %v6518
      %v6589 = vpack.c.b16 %v6524, %v6519
      %v6590 = vpack.c.b16 %v6525, %v6520
      %v6591 = vpack.c.b16 %v6526, %v6521
      %v6592 = vpack.c.b16 %v6532, %v6527
      %v6593 = vpack.c.b16 %v6533, %v6528
      %v6594 = vpack.c.b16 %v6534, %v6529
      %v6595 = vpack.c.b16 %v6535, %v6530
      %v6596 = vpack.c.b16 %v6536, %v6531
      %v6737 = vunpack.c.l.b16 %v6265
      %v6738 = vunpack.c.l.b16 %v6266
      %v6739 = vunpack.c.l.b16 %v6267
      %v6740 = vunpack.c.l.b16 %v6268
      %v6741 = vunpack.c.l.b16 %v6269
      %v6742 = vunpack.c.l.b16 %v6270
      %v6743 = vunpack.c.l.b16 %v6271
      %v6744 = vunpack.c.l.b16 %v6272
      %v6745 = vunpack.c.l.b16 %v6273
      %v6746 = vunpack.c.l.b16 %v6274
      %v6747 = vunpack.c.l.b16 %v6275
      %v6748 = vunpack.c.l.b16 %v6276
      %v6749 = vunpack.c.l.b16 %v6277
      %v6750 = vunpack.c.l.b16 %v6278
      %v6751 = vunpack.c.l.b16 %v6279
      %v6752 = vunpack.c.l.b16 %v6280
      %v6753 = vunpack.c.l.b16 %v6281
      %v6754 = vunpack.c.l.b16 %v6282
      %v6755 = vunpack.c.l.b16 %v6283
      %v6756 = vunpack.c.l.b16 %v6284
      %v6757 = vunpack.c.l.b16 %v6285
      %v6758 = vunpack.c.l.b16 %v6286
      %v6759 = vunpack.c.l.b16 %v6287
      %v6760 = vunpack.c.l.b16 %v6288
      %v6761 = vunpack.c.l.b16 %v6289
      %v6762 = vunpack.c.l.b16 %v6290
      %v6763 = vunpack.c.l.b16 %v6291
      %v6764 = vunpack.c.l.b16 %v6292
      %v6765 = vunpack.c.l.b16 %v6293
      %v6766 = vunpack.c.l.b16 %v6294
      %v6767 = vunpack.c.l.b16 %v6295
      %v6768 = vunpack.c.l.b16 %v6296
      %v6769 = vunpack.c.l.b16 %v6297
      %v6770 = vunpack.c.l.b16 %v6298
      %v6771 = vunpack.c.l.b16 %v6299
      %v6772 = vunpack.c.l.b16 %v6300
      %v6773 = vunpack.c.l.b16 %v6301
      %v6774 = vunpack.c.l.b16 %v6302
      %v6775 = vunpack.c.l.b16 %v6303
      %v6776 = vunpack.c.l.b16 %v6304
      %v6777 = vunpack.c.l.b16 %v6305
      %v6778 = vunpack.c.l.b16 %v6306
      %v6779 = vunpack.c.l.b16 %v6307
      %v6780 = vunpack.c.l.b16 %v6308
      %v6781 = vunpack.c.l.b16 %v6309
      %v6782 = vunpack.c.l.b16 %v6310
      %v6783 = vunpack.c.l.b16 %v6311
      %v6784 = vunpack.c.l.b16 %v6312
      %v6785 = vunpack.c.l.b16 %v6313
      %v6786 = vunpack.c.l.b16 %v6314
      %v6787 = vunpack.c.l.b16 %v6315
      %v6788 = vunpack.c.l.b16 %v6316
      %v6789 = vunpack.c.l.b16 %v6317
      %v6790 = vunpack.c.l.b16 %v6318
      %v6791 = vunpack.c.l.b16 %v6319
      %v6792 = vunpack.c.l.b16 %v6320
      %v6793 = vunpack.c.l.b16 %v6321
      %v6794 = vunpack.c.l.b16 %v6322
      %v6795 = vunpack.c.l.b16 %v6323
      %v6796 = vunpack.c.l.b16 %v6324
      %v6797 = vunpack.c.l.b16 %v6325
      %v6798 = vunpack.c.l.b16 %v6326
      %v6799 = vunpack.c.l.b16 %v6327
      %v6800 = vunpack.c.l.b16 %v6328
      %v6801 = vunpack.c.l.b16 %v6329
      %v6802 = vunpack.c.l.b16 %v6330
      %v6803 = vunpack.c.l.b16 %v6331
      %v6804 = vunpack.c.l.b16 %v6332
      %v6805 = vunpack.c.l.b16 %v6333
      %v6806 = vunpack.c.l.b16 %v6334
      %v6807 = vunpack.c.l.b16 %v6335
      %v6808 = vunpack.c.l.b16 %v6336
      %v6809 = vunpack.c.l.b16 %v6337
      %v6810 = vunpack.c.l.b16 %v6338
      %v6811 = vunpack.c.l.b16 %v6339
      %v6812 = vunpack.c.l.b16 %v6340
      %v6813 = vunpack.c.l.b16 %v6341
      %v6814 = vunpack.c.l.b16 %v6342
      %v6815 = vunpack.c.l.b16 %v6343
      %v6816 = vunpack.c.l.b16 %v6344
      %v6817 = vpack.c.b16 %v6738, %v6737
      %v6818 = vpack.c.b16 %v6740, %v6739
      %v6819 = vpack.c.b16 %v6742, %v6741
      %v6820 = vpack.c.b16 %v6744, %v6743
      %v6821 = vpack.c.b16 %v6746, %v6745
      %v6822 = vpack.c.b16 %v6748, %v6747
      %v6823 = vpack.c.b16 %v6750, %v6749
      %v6824 = vpack.c.b16 %v6752, %v6751
      %v6825 = vpack.c.b16 %v6754, %v6753
      %v6826 = vpack.c.b16 %v6756, %v6755
      %v6827 = vpack.c.b16 %v6758, %v6757
      %v6828 = vpack.c.b16 %v6760, %v6759
      %v6829 = vpack.c.b16 %v6762, %v6761
      %v6830 = vpack.c.b16 %v6764, %v6763
      %v6831 = vpack.c.b16 %v6766, %v6765
      %v6832 = vpack.c.b16 %v6768, %v6767
      %v6833 = vpack.c.b16 %v6770, %v6769
      %v6834 = vpack.c.b16 %v6772, %v6771
      %v6835 = vpack.c.b16 %v6774, %v6773
      %v6836 = vpack.c.b16 %v6776, %v6775
      %v6837 = vpack.c.b16 %v6778, %v6777
      %v6838 = vpack.c.b16 %v6780, %v6779
      %v6839 = vpack.c.b16 %v6782, %v6781
      %v6840 = vpack.c.b16 %v6784, %v6783
      %v6841 = vpack.c.b16 %v6786, %v6785
      %v6842 = vpack.c.b16 %v6788, %v6787
      %v6843 = vpack.c.b16 %v6790, %v6789
      %v6844 = vpack.c.b16 %v6792, %v6791
      %v6845 = vpack.c.b16 %v6794, %v6793
      %v6846 = vpack.c.b16 %v6796, %v6795
      %v6847 = vpack.c.b16 %v6798, %v6797
      %v6848 = vpack.c.b16 %v6800, %v6799
      %v6849 = vpack.c.b16 %v6802, %v6801
      %v6850 = vpack.c.b16 %v6804, %v6803
      %v6851 = vpack.c.b16 %v6806, %v6805
      %v6852 = vpack.c.b16 %v6808, %v6807
      %v6853 = vpack.c.b16 %v6810, %v6809
      %v6854 = vpack.c.b16 %v6812, %v6811
      %v6855 = vpack.c.b16 %v6814, %v6813
      %v6856 = vpack.c.b16 %v6816, %v6815
      %6897 = vmatprep.subr.bf16.mxu0 0
      %6898 = vmatpush1.bf16.msra.mxu0 %v6824
      %6899 = vmatprep.subr.bf16.mxu0 0
      %6900 = vmatpush1.bf16.msra.mxu0 %v6823
      %6901 = vmatprep.subr.bf16.mxu0 0
      %6902 = vmatpush1.bf16.msra.mxu0 %v6822
      %6903 = vmatprep.subr.bf16.mxu0 0
      %6904 = vmatpush1.bf16.msra.mxu0 %v6821
      %6905 = vmatprep.subr.bf16.mxu0 0
      %6906 = vmatpush1.bf16.msra.mxu0 %v6820
      %6907 = vmatprep.subr.bf16.mxu0 0
      %6908 = vmatpush1.bf16.msra.mxu0 %v6819
      %6909 = vmatprep.subr.bf16.mxu0 0
      %6910 = vmatpush1.bf16.msra.mxu0 %v6818
      %6911 = vmatprep.subr.bf16.mxu0 0
      %6912 = vmatpush1.bf16.msra.mxu0 %v6817
      %6913 = vmatprep.subr.bf16.mxu0 0
      %6914 = vmatpush2.bf16.msra.mxu0 %v6832
      %6915 = vmatprep.subr.bf16.mxu0 0
      %6916 = vmatpush2.bf16.msra.mxu0 %v6831
      %6917 = vmatprep.subr.bf16.mxu0 0
      %6918 = vmatpush2.bf16.msra.mxu0 %v6830
      %6919 = vmatprep.subr.bf16.mxu0 0
      %6920 = vmatpush2.bf16.msra.mxu0 %v6829
      %6921 = vmatprep.subr.bf16.mxu0 0
      %6922 = vmatpush2.bf16.msra.mxu0 %v6828
      %6923 = vmatprep.subr.bf16.mxu0 0
      %6924 = vmatpush2.bf16.msra.mxu0 %v6827
      %6925 = vmatprep.subr.bf16.mxu0 0
      %6926 = vmatpush2.bf16.msra.mxu0 %v6826
      %6927 = vmatprep.subr.bf16.mxu0 0
      %6928 = vmatpush2.bf16.msra.mxu0 %v6825
      %6929 = vmatprep.mubr.bf16.mxu0 %v6538
      %6930 = vmatmul.mubr.bf16.gmra.mxu0 %v6537
      %v6931 = vpop.f32.mrf.mxu0
      %v6932 = vadd.f32 0.0, %v6931
      %v6933 = vpop.f32.mrf.mxu0
      %v6934 = vpop.f32.mrf.mxu0
      %v6935 = vadd.f32 0.0, %v6934
      %v6936 = vpop.f32.mrf.mxu0
      %6937 = vmatprep.mubr.bf16.mxu0 %v6543
      %6938 = vmatmul.mubr.bf16.gmra.mxu0 %v6542
      %v6939 = vpop.f32.mrf.mxu0
      %v6940 = vadd.f32 0.0, %v6939
      %v6941 = vpop.f32.mrf.mxu0
      %v6942 = vpop.f32.mrf.mxu0
      %v6943 = vadd.f32 0.0, %v6942
      %v6944 = vpop.f32.mrf.mxu0
      %6945 = vmatprep.mubr.bf16.mxu0 %v6548
      %6946 = vmatmul.mubr.bf16.gmra.mxu0 %v6547
      %v6947 = vpop.f32.mrf.mxu0
      %v6948 = vadd.f32 0.0, %v6947
      %v6949 = vpop.f32.mrf.mxu0
      %v6950 = vpop.f32.mrf.mxu0
      %v6951 = vadd.f32 0.0, %v6950
      %v6952 = vpop.f32.mrf.mxu0
      %6953 = vmatprep.mubr.bf16.mxu0 %v6553
      %6954 = vmatmul.mubr.bf16.gmra.mxu0 %v6552
      %v6955 = vpop.f32.mrf.mxu0
      %v6956 = vadd.f32 0.0, %v6955
      %v6957 = vpop.f32.mrf.mxu0
      %v6958 = vpop.f32.mrf.mxu0
      %v6959 = vadd.f32 0.0, %v6958
      %v6960 = vpop.f32.mrf.mxu0
      %6961 = vmatprep.mubr.bf16.mxu0 %v6558
      %6962 = vmatmul.mubr.bf16.gmra.mxu0 %v6557
      %v6963 = vpop.f32.mrf.mxu0
      %v6964 = vadd.f32 0.0, %v6963
      %v6965 = vpop.f32.mrf.mxu0
      %v6966 = vpop.f32.mrf.mxu0
      %v6967 = vadd.f32 0.0, %v6966
      %v6968 = vpop.f32.mrf.mxu0
      %6969 = vmatprep.mubr.bf16.mxu0 %v6563
      %6970 = vmatmul.mubr.bf16.gmra.mxu0 %v6562
      %v6971 = vpop.f32.mrf.mxu0
      %v6972 = vadd.f32 0.0, %v6971
      %v6973 = vpop.f32.mrf.mxu0
      %v6974 = vpop.f32.mrf.mxu0
      %v6975 = vadd.f32 0.0, %v6974
      %v6976 = vpop.f32.mrf.mxu0
      %6977 = vmatprep.mubr.bf16.mxu0 %v6568
      %6978 = vmatmul.mubr.bf16.gmra.mxu0 %v6567
      %v6979 = vpop.f32.mrf.mxu0
      %v6980 = vadd.f32 0.0, %v6979
      %v6981 = vpop.f32.mrf.mxu0
      %v6982 = vpop.f32.mrf.mxu0
      %v6983 = vadd.f32 0.0, %v6982
      %v6984 = vpop.f32.mrf.mxu0
      %6985 = vmatprep.mubr.bf16.mxu0 %v6573
      %6986 = vmatmul.mubr.bf16.gmra.mxu0 %v6572
      %v6987 = vpop.f32.mrf.mxu0
      %v6988 = vadd.f32 0.0, %v6987
      %v6989 = vpop.f32.mrf.mxu0
      %v6990 = vpop.f32.mrf.mxu0
      %v6991 = vadd.f32 0.0, %v6990
      %v6992 = vpop.f32.mrf.mxu0
      %6993 = vmatprep.mubr.bf16.mxu0 %v6578
      %6994 = vmatmul.mubr.bf16.gmra.mxu0 %v6577
      %v6995 = vpop.f32.mrf.mxu0
      %v6996 = vadd.f32 0.0, %v6995
      %v6997 = vpop.f32.mrf.mxu0
      %v6998 = vpop.f32.mrf.mxu0
      %v6999 = vadd.f32 0.0, %v6998
      %v7000 = vpop.f32.mrf.mxu0
      %7001 = vmatprep.mubr.bf16.mxu0 %v6583
      %7002 = vmatmul.mubr.bf16.gmra.mxu0 %v6582
      %v7003 = vpop.f32.mrf.mxu0
      %v7004 = vadd.f32 0.0, %v7003
      %v7005 = vpop.f32.mrf.mxu0
      %v7006 = vpop.f32.mrf.mxu0
      %v7007 = vadd.f32 0.0, %v7006
      %v7008 = vpop.f32.mrf.mxu0
      %7009 = vmatprep.mubr.bf16.mxu0 %v6588
      %7010 = vmatmul.mubr.bf16.gmra.mxu0 %v6587
      %v7011 = vpop.f32.mrf.mxu0
      %v7012 = vadd.f32 0.0, %v7011
      %v7013 = vpop.f32.mrf.mxu0
      %v7014 = vpop.f32.mrf.mxu0
      %v7015 = vadd.f32 0.0, %v7014
      %v7016 = vpop.f32.mrf.mxu0
      %7017 = vmatprep.mubr.bf16.mxu0 %v6593
      %7018 = vmatmul.mubr.bf16.gmra.mxu0 %v6592
      %v7019 = vpop.f32.mrf.mxu0
      %v7020 = vadd.f32 0.0, %v7019
      %v7021 = vpop.f32.mrf.mxu0
      %v7022 = vpop.f32.mrf.mxu0
      %v7023 = vadd.f32 0.0, %v7022
      %v7024 = vpop.f32.mrf.mxu0
      %7025 = vdwg.mxu0
      %7026 = vmatprep.subr.bf16.mxu0 0
      %7027 = vmatpush1.bf16.msra.mxu0 %v6840
      %7028 = vmatprep.subr.bf16.mxu0 0
      %7029 = vmatpush1.bf16.msra.mxu0 %v6839
      %7030 = vmatprep.subr.bf16.mxu0 0
      %7031 = vmatpush1.bf16.msra.mxu0 %v6838
      %7032 = vmatprep.subr.bf16.mxu0 0
      %7033 = vmatpush1.bf16.msra.mxu0 %v6837
      %7034 = vmatprep.subr.bf16.mxu0 0
      %7035 = vmatpush1.bf16.msra.mxu0 %v6836
      %7036 = vmatprep.subr.bf16.mxu0 0
      %7037 = vmatpush1.bf16.msra.mxu0 %v6835
      %7038 = vmatprep.subr.bf16.mxu0 0
      %7039 = vmatpush1.bf16.msra.mxu0 %v6834
      %7040 = vmatprep.subr.bf16.mxu0 0
      %7041 = vmatpush1.bf16.msra.mxu0 %v6833
      %7042 = vmatprep.subr.bf16.mxu0 0
      %7043 = vmatpush2.bf16.msra.mxu0 %v6848
      %7044 = vmatprep.subr.bf16.mxu0 0
      %7045 = vmatpush2.bf16.msra.mxu0 %v6847
      %7046 = vmatprep.subr.bf16.mxu0 0
      %7047 = vmatpush2.bf16.msra.mxu0 %v6846
      %7048 = vmatprep.subr.bf16.mxu0 0
      %7049 = vmatpush2.bf16.msra.mxu0 %v6845
      %7050 = vmatprep.subr.bf16.mxu0 0
      %7051 = vmatpush2.bf16.msra.mxu0 %v6844
      %7052 = vmatprep.subr.bf16.mxu0 0
      %7053 = vmatpush2.bf16.msra.mxu0 %v6843
      %7054 = vmatprep.subr.bf16.mxu0 0
      %7055 = vmatpush2.bf16.msra.mxu0 %v6842
      %7056 = vmatprep.subr.bf16.mxu0 0
      %7057 = vmatpush2.bf16.msra.mxu0 %v6841
      %7058 = vmatprep.mubr.bf16.mxu0 %v6540
      %7059 = vmatmul.mubr.bf16.gmra.mxu0 %v6539
      %v7060 = vpop.f32.mrf.mxu0
      %v7061 = vadd.f32 %v6932, %v7060
      %v7062 = vpop.f32.mrf.mxu0
      %v7063 = vpop.f32.mrf.mxu0
      %v7064 = vadd.f32 %v6935, %v7063
      %v7065 = vpop.f32.mrf.mxu0
      %7066 = vmatprep.mubr.bf16.mxu0 %v6545
      %7067 = vmatmul.mubr.bf16.gmra.mxu0 %v6544
      %v7068 = vpop.f32.mrf.mxu0
      %v7069 = vadd.f32 %v6940, %v7068
      %v7070 = vpop.f32.mrf.mxu0
      %v7071 = vpop.f32.mrf.mxu0
      %v7072 = vadd.f32 %v6943, %v7071
      %v7073 = vpop.f32.mrf.mxu0
      %7074 = vmatprep.mubr.bf16.mxu0 %v6550
      %7075 = vmatmul.mubr.bf16.gmra.mxu0 %v6549
      %v7076 = vpop.f32.mrf.mxu0
      %v7077 = vadd.f32 %v6948, %v7076
      %v7078 = vpop.f32.mrf.mxu0
      %v7079 = vpop.f32.mrf.mxu0
      %v7080 = vadd.f32 %v6951, %v7079
      %v7081 = vpop.f32.mrf.mxu0
      %7082 = vmatprep.mubr.bf16.mxu0 %v6555
      %7083 = vmatmul.mubr.bf16.gmra.mxu0 %v6554
      %v7084 = vpop.f32.mrf.mxu0
      %v7085 = vadd.f32 %v6956, %v7084
      %v7086 = vpop.f32.mrf.mxu0
      %v7087 = vpop.f32.mrf.mxu0
      %v7088 = vadd.f32 %v6959, %v7087
      %v7089 = vpop.f32.mrf.mxu0
      %7090 = vmatprep.mubr.bf16.mxu0 %v6560
      %7091 = vmatmul.mubr.bf16.gmra.mxu0 %v6559
      %v7092 = vpop.f32.mrf.mxu0
      %v7093 = vadd.f32 %v6964, %v7092
      %v7094 = vpop.f32.mrf.mxu0
      %v7095 = vpop.f32.mrf.mxu0
      %v7096 = vadd.f32 %v6967, %v7095
      %v7097 = vpop.f32.mrf.mxu0
      %7098 = vmatprep.mubr.bf16.mxu0 %v6565
      %7099 = vmatmul.mubr.bf16.gmra.mxu0 %v6564
      %v7100 = vpop.f32.mrf.mxu0
      %v7101 = vadd.f32 %v6972, %v7100
      %v7102 = vpop.f32.mrf.mxu0
      %v7103 = vpop.f32.mrf.mxu0
      %v7104 = vadd.f32 %v6975, %v7103
      %v7105 = vpop.f32.mrf.mxu0
      %7106 = vmatprep.mubr.bf16.mxu0 %v6570
      %7107 = vmatmul.mubr.bf16.gmra.mxu0 %v6569
      %v7108 = vpop.f32.mrf.mxu0
      %v7109 = vadd.f32 %v6980, %v7108
      %v7110 = vpop.f32.mrf.mxu0
      %v7111 = vpop.f32.mrf.mxu0
      %v7112 = vadd.f32 %v6983, %v7111
      %v7113 = vpop.f32.mrf.mxu0
      %7114 = vmatprep.mubr.bf16.mxu0 %v6575
      %7115 = vmatmul.mubr.bf16.gmra.mxu0 %v6574
      %v7116 = vpop.f32.mrf.mxu0
      %v7117 = vadd.f32 %v6988, %v7116
      %v7118 = vpop.f32.mrf.mxu0
      %v7119 = vpop.f32.mrf.mxu0
      %v7120 = vadd.f32 %v6991, %v7119
      %v7121 = vpop.f32.mrf.mxu0
      %7122 = vmatprep.mubr.bf16.mxu0 %v6580
      %7123 = vmatmul.mubr.bf16.gmra.mxu0 %v6579
      %v7124 = vpop.f32.mrf.mxu0
      %v7125 = vadd.f32 %v6996, %v7124
      %v7126 = vpop.f32.mrf.mxu0
      %v7127 = vpop.f32.mrf.mxu0
      %v7128 = vadd.f32 %v6999, %v7127
      %v7129 = vpop.f32.mrf.mxu0
      %7130 = vmatprep.mubr.bf16.mxu0 %v6585
      %7131 = vmatmul.mubr.bf16.gmra.mxu0 %v6584
      %v7132 = vpop.f32.mrf.mxu0
      %v7133 = vadd.f32 %v7004, %v7132
      %v7134 = vpop.f32.mrf.mxu0
      %v7135 = vpop.f32.mrf.mxu0
      %v7136 = vadd.f32 %v7007, %v7135
      %v7137 = vpop.f32.mrf.mxu0
      %7138 = vmatprep.mubr.bf16.mxu0 %v6590
      %7139 = vmatmul.mubr.bf16.gmra.mxu0 %v6589
      %v7140 = vpop.f32.mrf.mxu0
      %v7141 = vadd.f32 %v7012, %v7140
      %v7142 = vpop.f32.mrf.mxu0
      %v7143 = vpop.f32.mrf.mxu0
      %v7144 = vadd.f32 %v7015, %v7143
      %v7145 = vpop.f32.mrf.mxu0
      %7146 = vmatprep.mubr.bf16.mxu0 %v6595
      %7147 = vmatmul.mubr.bf16.gmra.mxu0 %v6594
      %v7148 = vpop.f32.mrf.mxu0
      %v7149 = vadd.f32 %v7020, %v7148
      %v7150 = vpop.f32.mrf.mxu0
      %v7151 = vpop.f32.mrf.mxu0
      %v7152 = vadd.f32 %v7023, %v7151
      %v7153 = vpop.f32.mrf.mxu0
      %7154 = vdwg.mxu0
      %7155 = vmatprep.subr.bf16.mxu0 0
      %7156 = vmatpush1.bf16.msra.mxu0 %v6856
      %7157 = vmatprep.subr.bf16.mxu0 0
      %7158 = vmatpush1.bf16.msra.mxu0 %v6855
      %7159 = vmatprep.subr.bf16.mxu0 0
      %7160 = vmatpush1.bf16.msra.mxu0 %v6854
      %7161 = vmatprep.subr.bf16.mxu0 0
      %7162 = vmatpush1.bf16.msra.mxu0 %v6853
      %7163 = vmatprep.subr.bf16.mxu0 0
      %7164 = vmatpush1.bf16.msra.mxu0 %v6852
      %7165 = vmatprep.subr.bf16.mxu0 0
      %7166 = vmatpush1.bf16.msra.mxu0 %v6851
      %7167 = vmatprep.subr.bf16.mxu0 0
      %7168 = vmatpush1.bf16.msra.mxu0 %v6850
      %7169 = vmatprep.subr.bf16.mxu0 0
      %7170 = vmatpush1.bf16.msra.mxu0 %v6849
      %7171 = vmatprep.subr.bf16.mxu0 0
      %7172 = vmatpush2.bf16.msra.mxu0 0
      %7173 = vmatprep.subr.bf16.mxu0 0
      %7174 = vmatpush2.bf16.msra.mxu0 0
      %7175 = vmatprep.subr.bf16.mxu0 0
      %7176 = vmatpush2.bf16.msra.mxu0 0
      %7177 = vmatprep.subr.bf16.mxu0 0
      %7178 = vmatpush2.bf16.msra.mxu0 0
      %7179 = vmatprep.subr.bf16.mxu0 0
      %7180 = vmatpush2.bf16.msra.mxu0 0
      %7181 = vmatprep.subr.bf16.mxu0 0
      %7182 = vmatpush2.bf16.msra.mxu0 0
      %7183 = vmatprep.subr.bf16.mxu0 0
      %7184 = vmatpush2.bf16.msra.mxu0 0
      %7185 = vmatprep.subr.bf16.mxu0 0
      %7186 = vmatpush2.bf16.msra.mxu0 0
      %7187 = vmatprep.mubr.bf16.mxu0 0
      %7188 = vmatmul.mubr.bf16.gmra.mxu0 %v6541
      %v7189 = vpop.f32.mrf.mxu0
      %v7190 = vadd.f32 %v7061, %v7189
      %v7191 = vpop.f32.mrf.mxu0
      %v7192 = vpop.f32.mrf.mxu0
      %v7193 = vadd.f32 %v7064, %v7192
      %v7194 = vpop.f32.mrf.mxu0
      %7195 = vmatprep.mubr.bf16.mxu0 0
      %7196 = vmatmul.mubr.bf16.gmra.mxu0 %v6546
      %v7197 = vpop.f32.mrf.mxu0
      %v7198 = vadd.f32 %v7069, %v7197
      %v7199 = vpop.f32.mrf.mxu0
      %v7200 = vpop.f32.mrf.mxu0
      %v7201 = vadd.f32 %v7072, %v7200
      %v7202 = vpop.f32.mrf.mxu0
      %7203 = vmatprep.mubr.bf16.mxu0 0
      %7204 = vmatmul.mubr.bf16.gmra.mxu0 %v6551
      %v7205 = vpop.f32.mrf.mxu0
      %v7206 = vadd.f32 %v7077, %v7205
      %v7207 = vpop.f32.mrf.mxu0
      %v7208 = vpop.f32.mrf.mxu0
      %v7209 = vadd.f32 %v7080, %v7208
      %v7210 = vpop.f32.mrf.mxu0
      %7211 = vmatprep.mubr.bf16.mxu0 0
      %7212 = vmatmul.mubr.bf16.gmra.mxu0 %v6556
      %v7213 = vpop.f32.mrf.mxu0
      %v7214 = vadd.f32 %v7085, %v7213
      %v7215 = vpop.f32.mrf.mxu0
      %v7216 = vpop.f32.mrf.mxu0
      %v7217 = vadd.f32 %v7088, %v7216
      %v7218 = vpop.f32.mrf.mxu0
      %7219 = vmatprep.mubr.bf16.mxu0 0
      %7220 = vmatmul.mubr.bf16.gmra.mxu0 %v6561
      %v7221 = vpop.f32.mrf.mxu0
      %v7222 = vadd.f32 %v7093, %v7221
      %v7223 = vpop.f32.mrf.mxu0
      %v7224 = vpop.f32.mrf.mxu0
      %v7225 = vadd.f32 %v7096, %v7224
      %v7226 = vpop.f32.mrf.mxu0
      %7227 = vmatprep.mubr.bf16.mxu0 0
      %7228 = vmatmul.mubr.bf16.gmra.mxu0 %v6566
      %v7229 = vpop.f32.mrf.mxu0
      %v7230 = vadd.f32 %v7101, %v7229
      %v7231 = vpop.f32.mrf.mxu0
      %v7232 = vpop.f32.mrf.mxu0
      %v7233 = vadd.f32 %v7104, %v7232
      %v7234 = vpop.f32.mrf.mxu0
      %7235 = vmatprep.mubr.bf16.mxu0 0
      %7236 = vmatmul.mubr.bf16.gmra.mxu0 %v6571
      %v7237 = vpop.f32.mrf.mxu0
      %v7238 = vadd.f32 %v7109, %v7237
      %v7239 = vpop.f32.mrf.mxu0
      %v7240 = vpop.f32.mrf.mxu0
      %v7241 = vadd.f32 %v7112, %v7240
      %v7242 = vpop.f32.mrf.mxu0
      %7243 = vmatprep.mubr.bf16.mxu0 0
      %7244 = vmatmul.mubr.bf16.gmra.mxu0 %v6576
      %v7245 = vpop.f32.mrf.mxu0
      %v7246 = vadd.f32 %v7117, %v7245
      %v7247 = vpop.f32.mrf.mxu0
      %v7248 = vpop.f32.mrf.mxu0
      %v7249 = vadd.f32 %v7120, %v7248
      %v7250 = vpop.f32.mrf.mxu0
      %7251 = vmatprep.mubr.bf16.mxu0 0
      %7252 = vmatmul.mubr.bf16.gmra.mxu0 %v6581
      %v7253 = vpop.f32.mrf.mxu0
      %v7254 = vadd.f32 %v7125, %v7253
      %v7255 = vpop.f32.mrf.mxu0
      %v7256 = vpop.f32.mrf.mxu0
      %v7257 = vadd.f32 %v7128, %v7256
      %v7258 = vpop.f32.mrf.mxu0
      %7259 = vmatprep.mubr.bf16.mxu0 0
      %7260 = vmatmul.mubr.bf16.gmra.mxu0 %v6586
      %v7261 = vpop.f32.mrf.mxu0
      %v7262 = vadd.f32 %v7133, %v7261
      %v7263 = vpop.f32.mrf.mxu0
      %v7264 = vpop.f32.mrf.mxu0
      %v7265 = vadd.f32 %v7136, %v7264
      %v7266 = vpop.f32.mrf.mxu0
      %7267 = vmatprep.mubr.bf16.mxu0 0
      %7268 = vmatmul.mubr.bf16.gmra.mxu0 %v6591
      %v7269 = vpop.f32.mrf.mxu0
      %v7270 = vadd.f32 %v7141, %v7269
      %v7271 = vpop.f32.mrf.mxu0
      %v7272 = vpop.f32.mrf.mxu0
      %v7273 = vadd.f32 %v7144, %v7272
      %v7274 = vpop.f32.mrf.mxu0
      %7275 = vmatprep.mubr.bf16.mxu0 0
      %7276 = vmatmul.mubr.bf16.gmra.mxu0 %v6596
      %v7277 = vpop.f32.mrf.mxu0
      %v7278 = vadd.f32 %v7149, %v7277
      %v7279 = vpop.f32.mrf.mxu0
      %v7280 = vpop.f32.mrf.mxu0
      %v7281 = vadd.f32 %v7152, %v7280
      %v7282 = vpop.f32.mrf.mxu0
      %7283 = vdwg.mxu0
      %v7284 = vadd.f32 %v6162, %v7190
      %v7285 = vadd.f32 %v6163, %v7193
      %v7286 = vadd.f32 %v6164, %v7198
      %v7287 = vadd.f32 %v6165, %v7201
      %v7288 = vadd.f32 %v6166, %v7206
      %v7289 = vadd.f32 %v6167, %v7209
      %v7290 = vadd.f32 %v6168, %v7214
      %v7291 = vadd.f32 %v6169, %v7217
      %v7292 = vadd.f32 %v6170, %v7222
      %v7293 = vadd.f32 %v6171, %v7225
      %v7294 = vadd.f32 %v6172, %v7230
      %v7295 = vadd.f32 %v6173, %v7233
      %v7296 = vadd.f32 %v6174, %v7238
      %v7297 = vadd.f32 %v6175, %v7241
      %v7298 = vadd.f32 %v6176, %v7246
      %v7299 = vadd.f32 %v6177, %v7249
      %v7300 = vadd.f32 %v6178, %v7254
      %v7301 = vadd.f32 %v6179, %v7257
      %v7302 = vadd.f32 %v6180, %v7262
      %v7303 = vadd.f32 %v6181, %v7265
      %v7304 = vadd.f32 %v6182, %v7270
      %v7305 = vadd.f32 %v6183, %v7273
      %v7306 = vadd.f32 %v6184, %v7278
      %v7307 = vadd.f32 %v6185, %v7281
      %v7308 = vld [vmem:[%s4] sm:$0x1]
      %v7310 = vlaneseq
      %v7311 = vshrl.u32 %v7310, 7
      %v7312 = vsub.s32 0, %v7311
      %v7313 = vrot.slane %v7308, %v7312
      %v7315 = vadd.f32 %v7284, %v7313
      %v7316 = vadd.f32 %v7285, %v7313
      %v7317 = vadd.f32 %v7286, %v7313
      %v7318 = vadd.f32 %v7287, %v7313
      %v7319 = vadd.f32 %v7288, %v7313
      %v7320 = vadd.f32 %v7289, %v7313
      %v7321 = vadd.f32 %v7290, %v7313
      %v7322 = vadd.f32 %v7291, %v7313
      %v7323 = vadd.f32 %v7292, %v7313
      %v7324 = vadd.f32 %v7293, %v7313
      %v7325 = vadd.f32 %v7294, %v7313
      %v7326 = vadd.f32 %v7295, %v7313
      %v7327 = vadd.f32 %v7296, %v7313
      %v7328 = vadd.f32 %v7297, %v7313
      %v7329 = vadd.f32 %v7298, %v7313
      %v7330 = vadd.f32 %v7299, %v7313
      %v7331 = vadd.f32 %v7300, %v7313
      %v7332 = vadd.f32 %v7301, %v7313
      %v7333 = vadd.f32 %v7302, %v7313
      %v7334 = vadd.f32 %v7303, %v7313
      %v7335 = vadd.f32 %v7304, %v7313
      %v7336 = vadd.f32 %v7305, %v7313
      %v7337 = vadd.f32 %v7306, %v7313
      %v7338 = vadd.f32 %v7307, %v7313
      %v7339 = vmax.f32 %v7315, 0.0
      %v7340 = vmax.f32 %v7316, 0.0
      %v7341 = vmax.f32 %v7317, 0.0
      %v7342 = vmax.f32 %v7318, 0.0
      %v7343 = vmax.f32 %v7319, 0.0
      %v7344 = vmax.f32 %v7320, 0.0
      %v7345 = vmax.f32 %v7321, 0.0
      %v7346 = vmax.f32 %v7322, 0.0
      %v7347 = vmax.f32 %v7323, 0.0
      %v7348 = vmax.f32 %v7324, 0.0
      %v7349 = vmax.f32 %v7325, 0.0
      %v7350 = vmax.f32 %v7326, 0.0
      %v7351 = vmax.f32 %v7327, 0.0
      %v7352 = vmax.f32 %v7328, 0.0
      %v7353 = vmax.f32 %v7329, 0.0
      %v7354 = vmax.f32 %v7330, 0.0
      %v7355 = vmax.f32 %v7331, 0.0
      %v7356 = vmax.f32 %v7332, 0.0
      %v7357 = vmax.f32 %v7333, 0.0
      %v7358 = vmax.f32 %v7334, 0.0
      %v7359 = vmax.f32 %v7335, 0.0
      %v7360 = vmax.f32 %v7336, 0.0
      %v7361 = vmax.f32 %v7337, 0.0
      %v7362 = vmax.f32 %v7338, 0.0
      %v7363 = vpack.c.bf16 %v7340, %v7339
      %v7364 = vpack.c.bf16 %v7342, %v7341
      %v7365 = vpack.c.bf16 %v7344, %v7343
      %v7366 = vpack.c.bf16 %v7346, %v7345
      %v7367 = vpack.c.bf16 %v7348, %v7347
      %v7368 = vpack.c.bf16 %v7350, %v7349
      %v7369 = vpack.c.bf16 %v7352, %v7351
      %v7370 = vpack.c.bf16 %v7354, %v7353
      %v7371 = vpack.c.bf16 %v7356, %v7355
      %v7372 = vpack.c.bf16 %v7358, %v7357
      %v7373 = vpack.c.bf16 %v7360, %v7359
      %v7374 = vpack.c.bf16 %v7362, %v7361
      %v7387 = vunpack.c.l.b16 %v7363
      %v7388 = vunpack.c.h.b16 %v7363
      %v7389 = vunpack.c.l.b16 %v7364
      %v7390 = vunpack.c.h.b16 %v7364
      %v7391 = vunpack.c.l.b16 %v7365
      %v7392 = vunpack.c.h.b16 %v7365
      %v7393 = vunpack.c.l.b16 %v7366
      %v7394 = vunpack.c.h.b16 %v7366
      %v7395 = vunpack.c.l.b16 %v7367
      %v7396 = vunpack.c.h.b16 %v7367
      %v7397 = vunpack.c.l.b16 %v7368
      %v7398 = vunpack.c.h.b16 %v7368
      %v7399 = vunpack.c.l.b16 %v7369
      %v7400 = vunpack.c.h.b16 %v7369
      %v7401 = vunpack.c.l.b16 %v7370
      %v7402 = vunpack.c.h.b16 %v7370
      %v7403 = vunpack.c.l.b16 %v7371
      %v7404 = vunpack.c.h.b16 %v7371
      %v7405 = vunpack.c.l.b16 %v7372
      %v7406 = vunpack.c.h.b16 %v7372
      %v7407 = vunpack.c.l.b16 %v7373
      %v7408 = vunpack.c.h.b16 %v7373
      %v7409 = vunpack.c.l.b16 %v7374
      %v7410 = vunpack.c.h.b16 %v7374
      %v7411 = vpack.c.b16 %v7387, %v7387
      %v7412 = vpack.c.b16 %v7388, %v7388
      %v7413 = vpack.c.b16 %v7389, %v7389
      %v7414 = vpack.c.b16 %v7390, %v7390
      %v7415 = vpack.c.b16 %v7391, %v7391
      %v7416 = vpack.c.b16 %v7392, %v7392
      %v7417 = vpack.c.b16 %v7393, %v7393
      %v7418 = vpack.c.b16 %v7394, %v7394
      %v7419 = vpack.c.b16 %v7395, %v7395
      %v7420 = vpack.c.b16 %v7396, %v7396
      %v7421 = vpack.c.b16 %v7397, %v7397
      %v7422 = vpack.c.b16 %v7398, %v7398
      %v7423 = vpack.c.b16 %v7399, %v7399
      %v7424 = vpack.c.b16 %v7400, %v7400
      %v7425 = vpack.c.b16 %v7401, %v7401
      %v7426 = vpack.c.b16 %v7402, %v7402
      %v7427 = vpack.c.b16 %v7403, %v7403
      %v7428 = vpack.c.b16 %v7404, %v7404
      %v7429 = vpack.c.b16 %v7405, %v7405
      %v7430 = vpack.c.b16 %v7406, %v7406
      %v7431 = vpack.c.b16 %v7407, %v7407
      %v7432 = vpack.c.b16 %v7408, %v7408
      %v7433 = vpack.c.b16 %v7409, %v7409
      %v7434 = vpack.c.b16 %v7410, %v7410
      %vm7459 = vcmask 519168
      %7460 = vst.msk [vmem:[%s246] sm:$0xf] %vm7459, %v7411
      %7461 = vst.msk [vmem:[%s246 + $0x4] sm:$0xf] %vm7459, %v7412
      %7462 = vst.msk [vmem:[%s246 + $0x8] sm:$0xf] %vm7459, %v7413
      %7463 = vst.msk [vmem:[%s246 + $0xc] sm:$0xf] %vm7459, %v7414
      %7464 = vst.msk [vmem:[%s246 + $0x10] sm:$0xf] %vm7459, %v7415
      %7465 = vst.msk [vmem:[%s246 + $0x14] sm:$0xf] %vm7459, %v7416
      %7466 = vst.msk [vmem:[%s246 + $0x18] sm:$0xf] %vm7459, %v7417
      %7467 = vst.msk [vmem:[%s246 + $0x1c] sm:$0xf] %vm7459, %v7418
      %7468 = vst.msk [vmem:[%s246 + $0x20] sm:$0xf] %vm7459, %v7419
      %7469 = vst.msk [vmem:[%s246 + $0x24] sm:$0xf] %vm7459, %v7420
      %7470 = vst.msk [vmem:[%s246 + $0x28] sm:$0xf] %vm7459, %v7421
      %7471 = vst.msk [vmem:[%s246 + $0x2c] sm:$0xf] %vm7459, %v7422
      %7472 = vst.msk [vmem:[%s246 + $0x30] sm:$0xf] %vm7459, %v7423
      %7473 = vst.msk [vmem:[%s246 + $0x34] sm:$0xf] %vm7459, %v7424
      %7474 = vst.msk [vmem:[%s246 + $0x38] sm:$0xf] %vm7459, %v7425
      %7475 = vst.msk [vmem:[%s246 + $0x3c] sm:$0xf] %vm7459, %v7426
      %7476 = vst.msk [vmem:[%s246 + $0x40] sm:$0xf] %vm7459, %v7427
      %7477 = vst.msk [vmem:[%s246 + $0x44] sm:$0xf] %vm7459, %v7428
      %7478 = vst.msk [vmem:[%s246 + $0x48] sm:$0xf] %vm7459, %v7429
      %7479 = vst.msk [vmem:[%s246 + $0x4c] sm:$0xf] %vm7459, %v7430
      %7480 = vst.msk [vmem:[%s246 + $0x50] sm:$0xf] %vm7459, %v7431
      %7481 = vst.msk [vmem:[%s246 + $0x54] sm:$0xf] %vm7459, %v7432
      %7482 = vst.msk [vmem:[%s246 + $0x58] sm:$0xf] %vm7459, %v7433
      %7483 = vst.msk [vmem:[%s246 + $0x5c] sm:$0xf] %vm7459, %v7434
      %s7484 = smul.u32 24, %s21
      %p7485 = scmp.lt.s32.totalorder %s20, 1
      %s7486 = scalar_select %p7485, %s20, 1
      %p7487 = scmp.lt.s32.totalorder %s7484, 23
      %s7488 = scalar_select %p7487, %s7484, 23
      %s7489 = smul.addr %s7486, 24
      %s7490 = sadd.s32 %s7488, %s7489
      %s7491 = smul.addr %s7490, 4
      %s7492 = scalar_lea.vmem %s5, %s7491
      // Predicated region
      $region45: #{resnet_feature_extraction_layer.1} parent=39 // pred_check
        %p7493 = pneg %p158
      $region46: #{resnet_feature_extraction_layer.1} parent=39 // pred_check_branch
        %7495 = sbr.rel (%p7493) target = $region48
      $region47: #{resnet_feature_extraction_layer.1} parent=39 // pred_region
        %s7496 = smul.u32 24, %s21
      $region48: #{resnet_feature_extraction_layer.1} parent=39 // pred_fallthru
        _
    $region40: #{resnet_feature_extraction_layer.1} parent=5 // pred_fallthru
      _
    %p7497 = scmp.le.s32.totalorder 2, %s11
    // Predicated region
    $region49: #{resnet_feature_extraction_layer.1} parent=5 // pred_check
      %p7498 = pneg %p7497
    $region50: #{resnet_feature_extraction_layer.1} parent=5 // pred_check_branch
      %7500 = sbr.rel (%p7498) target = $region52
    $region51: #{resnet_feature_extraction_layer.1} parent=5 // pred_region
      %s7501 = ssub.s32 %s11, 2
      // Predicated region
      $region53: #{resnet_feature_extraction_layer.1} parent=51 // pred_check
        %p7502 = pneg %p164
      $region54: #{resnet_feature_extraction_layer.1} parent=51 // pred_check_branch
        %7504 = sbr.rel (%p7502) target = $region56
      $region55: #{resnet_feature_extraction_layer.1} parent=51 // pred_region
        %s7505 = smul.u32 24, %s23
        %p7506 = scmp.lt.s32.totalorder %s22, 1
        %s7507 = scalar_select %p7506, %s22, 1
        %p7508 = scmp.lt.s32.totalorder %s7505, 23
        %s7509 = scalar_select %p7508, %s7505, 23
        %s7510 = smul.addr %s7507, 24
        %s7511 = sadd.s32 %s7509, %s7510
        %s7512 = smul.addr %s7511, 4
        %s7513 = scalar_lea.vmem %s5, %s7512
      $region56: #{resnet_feature_extraction_layer.1} parent=51 // pred_fallthru
        _
    $region52: #{resnet_feature_extraction_layer.1} parent=5 // pred_fallthru
      _
  $region6: #{resnet_feature_extraction_layer.1} parent=0 // loop_footer
    %s15 = sadd.s32 1, %s11
  $region7: #{resnet_feature_extraction_layer.1} parent=0 // loop_footer_branch
    %10 = sbr.rel target = $region3
  $region8: #{resnet_feature_extraction_layer.1} parent=0 // loop_exit
    _

</llo_original>
